<compile_context>
chip_gen: v7x
topology: tpu7x:2x2x1
jax: 0.10.0
libtpu: 0.0.40
codegen_flags: <defaults>
</compile_context>

<pallas_src>
import functools
import math

import jax
import jax.numpy as jnp
from jax.experimental import pallas as pl

# ----------------------------- config (small, consistent with the module) ----
DIM = 64          # resampler width
DEPTH = 2         # number of (attn, ff, adaLN) layers
DIM_HEAD = 16
HEADS = 4         # inner_dim = 64
NUM_QUERIES = 8
EMBED_DIM = 32    # embedding_dim of image features
OUTPUT_DIM = 64
FF_MULT = 4       # ff inner = 256
T_IN_DIM = 32     # timestep_in_dim (sinusoidal proj width, must be even)
B = 2
N1 = 16           # number of image-feature tokens

INNER = HEADS * DIM_HEAD
FF_INNER = DIM * FF_MULT
EPS_LN = 1e-5     # torch.nn.LayerNorm default eps

# packing below relies on these (true for the module defaults: dim=inner=output_dim)
assert INNER == DIM and OUTPUT_DIM == DIM

# ----------------------------- packed-operand index constants -----------------
# vec rows (each (1, DIM)):
V_PIN_B, V_TE_B1, V_TE_B2, V_POUT_B, V_NO_G, V_NO_B = range(6)
V_LAYER0 = 6
V_PER_LAYER = 10
VL_N1G, VL_N1B, VL_N2G, VL_N2B, VL_FFG, VL_FFB = range(6)
VL_ADA_SHIFT_MSA, VL_ADA_SCALE_MSA, VL_ADA_SHIFT_MLP, VL_ADA_SCALE_MLP = 6, 7, 8, 9
V_TOTAL = V_LAYER0 + V_PER_LAYER * DEPTH

# w_dd slabs (each (DIM, DIM)): [te_w2, pout_w, (wq_l * dh**-0.5, wo_l) per layer]
W_TE2, W_POUT, W_Q0, W_O0 = 0, 1, 2, 3


# ----------------------------- in-kernel helpers ------------------------------
def _layernorm(v, gamma, beta):
    m = jnp.mean(v, axis=-1, keepdims=True)
    c = v - m
    var = jnp.mean(c * c, axis=-1, keepdims=True)
    return c * jax.lax.rsqrt(var + EPS_LN) * gamma + beta


def _erf(x):
    # Abramowitz & Stegun 7.1.26 rational approximation (max abs err ~1.5e-7);
    # nn.GELU() default is the exact erf form.
    # TODO(synk): switch to jax.lax.erf if Mosaic gains a native lowering.
    s = jnp.where(x >= 0.0, 1.0, -1.0)
    a = jnp.abs(x)
    t = 1.0 / (1.0 + 0.3275911 * a)
    poly = ((((1.061405429 * t - 1.453152027) * t + 1.421413741) * t
             - 0.284496736) * t + 0.254829592) * t
    return s * (1.0 - poly * jnp.exp(-a * a))


def _gelu_exact(x):
    return 0.5 * x * (1.0 + _erf(x * (1.0 / math.sqrt(2.0))))


def _silu(x):
    return x * jax.nn.sigmoid(x)


def _per_batch_rows(a, n, nb):
    # (nb, D) -> (nb*n, D): replicate each batch row over its n sequence rows.
    # Used exactly twice per pass (temb -> x rows, silu(temb) -> latent rows).
    return jnp.concatenate(
        [jnp.broadcast_to(a[i:i + 1, :], (n, a.shape[-1])) for i in range(nb)],
        axis=0)


# ----------------------------- fused kernel -----------------------------------
def fused_kernel(tproj_ref, x_ref, lat0_ref, vec_ref,
                 pin_w_ref, te_w1_ref, w_dd_ref, w_kv_ref,
                 ada_w_ref, ff_w1_ref, ff_w2_ref,
                 out_ref,
                 *, nb, n1, nq, heads, dim_head, depth):
    f32 = jnp.float32
    dim = lat0_ref.shape[-1]
    inner = heads * dim_head
    nk = n1 + nq

    def vrow(i):                       # one packed (1, dim) bias / LN row
        return vec_ref[i:i + 1, :]

    def mm(a, w):                      # 2-D MXU matmul, f32 accumulation
        return jnp.dot(a, w, preferred_element_type=f32)

    # ---- time embedding: linear_1 -> SiLU -> linear_2 ------------------------
    t_hidden = mm(tproj_ref[...].astype(f32), te_w1_ref[...]) + vrow(V_TE_B1)
    temb = mm(_silu(t_hidden), w_dd_ref[W_TE2]) + vrow(V_TE_B2)          # (nb, dim)

    # ---- proj_in + per-batch timestep-embedding add ---------------------------
    xp = mm(x_ref[...].astype(f32), pin_w_ref[...]) + vrow(V_PIN_B)      # (nb*n1, dim)
    xp = xp + _per_batch_rows(temb, n1, nb)

    # ---- initial latents, replicated over batch (broadcast, no concat) --------
    lat = jnp.broadcast_to(lat0_ref[...].astype(f32)[None],
                           (nb, nq, dim)).reshape(nb * nq, dim)

    # adaLN input broadcast once to latent-row granularity so every later
    # shift/scale comes out of the matmul already row-aligned (no broadcasts
    # inside the layer loop).
    st_rows = _per_batch_rows(_silu(temb), nq, nb)                        # (nb*nq, dim)

    for l in range(depth):
        vb = V_LAYER0 + l * V_PER_LAYER

        # ---- adaLN: single (dim, 4*dim) matmul, lane-chunked -------------------
        mod = mm(st_rows, ada_w_ref[l])                                   # (nb*nq, 4*dim)
        shift_msa = mod[:, 0 * dim:1 * dim] + vrow(vb + VL_ADA_SHIFT_MSA)
        scale_msa = mod[:, 1 * dim:2 * dim] + vrow(vb + VL_ADA_SCALE_MSA)
        shift_mlp = mod[:, 2 * dim:3 * dim] + vrow(vb + VL_ADA_SHIFT_MLP)
        scale_mlp = mod[:, 3 * dim:4 * dim] + vrow(vb + VL_ADA_SCALE_MLP)

        # ---- PerceiverAttention -------------------------------------------------
        xn = _layernorm(xp, vrow(vb + VL_N1G), vrow(vb + VL_N1B))         # (nb*n1, dim)
        latn = _layernorm(lat, vrow(vb + VL_N2G), vrow(vb + VL_N2B))      # (nb*nq, dim)
        latn = latn * (1.0 + scale_msa) + shift_msa

        # wide projections: q (N=inner) from modulated latents; fused [k|v]
        # (N=2*inner) from cat([x_n, lat_n]); q columns pre-scaled by dh**-0.5.
        q2 = mm(latn, w_dd_ref[W_Q0 + 2 * l])                             # (nb*nq, inner)
        kv_in = jnp.concatenate([xn.reshape(nb, n1, dim),
                                 latn.reshape(nb, nq, dim)], axis=1)      # (nb, nk, dim)
        kv = mm(kv_in.reshape(nb * nk, dim), w_kv_ref[l])                 # (nb*nk, 2*inner)

        q3 = q2.reshape(nb, nq, inner)
        kv3 = kv.reshape(nb, nk, 2 * inner)

        # batched-over-batch attention; tiny static loop over heads (lane slices)
        o_parts = []
        for h in range(heads):
            qh = q3[:, :, h * dim_head:(h + 1) * dim_head]                # (nb, nq, dh)
            kh = kv3[:, :, h * dim_head:(h + 1) * dim_head]               # (nb, nk, dh)
            vh = kv3[:, :, inner + h * dim_head:inner + (h + 1) * dim_head]
            s = jnp.einsum('bqd,bkd->bqk', qh, kh,
                           preferred_element_type=f32)                    # (nb, nq, nk)
            s = s - jnp.max(s, axis=-1, keepdims=True)
            p = jnp.exp(s)
            p = p / jnp.sum(p, axis=-1, keepdims=True)                    # exact softmax
            o_parts.append(jnp.einsum('bqk,bkd->bqd', p, vh,
                                      preferred_element_type=f32))        # (nb, nq, dh)
        o2 = jnp.concatenate(o_parts, axis=-1).reshape(nb * nq, inner)
        lat = lat + mm(o2, w_dd_ref[W_O0 + 2 * l])                        # one wo matmul

        # ---- FeedForward: LN -> adaLN(mlp) -> Linear -> GELU -> Linear + res ----
        hf = _layernorm(lat, vrow(vb + VL_FFG), vrow(vb + VL_FFB))
        hf = hf * (1.0 + scale_mlp) + shift_mlp
        hf = _gelu_exact(mm(hf, ff_w1_ref[l]))                            # (nb*nq, ffi)
        lat = lat + mm(hf, ff_w2_ref[l])

    # ---- proj_out + norm_out ----------------------------------------------------
    y = mm(lat, w_dd_ref[W_POUT]) + vrow(V_POUT_B)                        # (nb*nq, out)
    y = _layernorm(y, vrow(V_NO_G), vrow(V_NO_B))
    out_ref[...] = y.astype(out_ref.dtype)


# ----------------------------- glue (plain JAX) --------------------------------
def sinusoidal_time_proj(t, dim, flip_sin_to_cos=True, freq_shift=0.0,
                         max_period=10000.0):
    # diffusers.get_timestep_embedding semantics
    half = dim // 2
    exponent = -math.log(max_period) * jnp.arange(half, dtype=jnp.float32)
    exponent = exponent / (half - freq_shift)
    freqs = jnp.exp(exponent)
    args = t[:, None].astype(jnp.float32) * freqs[None, :]
    emb = jnp.concatenate([jnp.sin(args), jnp.cos(args)], axis=-1)
    if flip_sin_to_cos:
        emb = jnp.concatenate([emb[:, half:], emb[:, :half]], axis=-1)
    return emb


def init_params(key):
    """Logical (torch-layout-like) parameters.  A real checkpoint maps as:
    wq = to_q.weight.T, wkv = to_kv.weight.T, wo = to_out.weight.T,
    ada_w = adaLN[1].weight.T (columns = [shift_msa|scale_msa|shift_mlp|scale_mlp])."""
    keys = iter(jax.random.split(key, 32))

    def rnd(shape, scale):
        return jax.random.normal(next(keys), shape, jnp.float32) * scale

    return {
        "latents": rnd((NUM_QUERIES, DIM), 1.0 / math.sqrt(DIM)),
        "pin_w": rnd((EMBED_DIM, DIM), 0.05), "pin_b": rnd((DIM,), 0.02),
        # TimestepEmbedding(linear_1, SiLU, linear_2)
        "te_w1": rnd((T_IN_DIM, DIM), 0.05), "te_b1": rnd((DIM,), 0.02),
        "te_w2": rnd((DIM, DIM), 0.05), "te_b2": rnd((DIM,), 0.02),
        # per-layer LayerNorm params
        "n1_g": jnp.ones((DEPTH, DIM), jnp.float32),
        "n1_b": jnp.zeros((DEPTH, DIM), jnp.float32),
        "n2_g": jnp.ones((DEPTH, DIM), jnp.float32),
        "n2_b": jnp.zeros((DEPTH, DIM), jnp.float32),
        # attention projections (per layer)
        "wq": rnd((DEPTH, DIM, INNER), 0.05),
        "wkv": rnd((DEPTH, DIM, 2 * INNER), 0.05),
        "wo": rnd((DEPTH, INNER, DIM), 0.05),
        # FeedForward
        "ff_g": jnp.ones((DEPTH, DIM), jnp.float32),
        "ff_b": jnp.zeros((DEPTH, DIM), jnp.float32),
        "ff_w1": rnd((DEPTH, DIM, FF_INNER), 0.05),
        "ff_w2": rnd((DEPTH, FF_INNER, DIM), 0.05),
        # adaLN Linear(dim, 4*dim)
        "ada_w": rnd((DEPTH, DIM, 4 * DIM), 0.05),
        "ada_b": rnd((DEPTH, 4 * DIM), 0.02),
        # proj_out + norm_out
        "pout_w": rnd((DIM, OUTPUT_DIM), 0.05), "pout_b": rnd((OUTPUT_DIM,), 0.02),
        "no_g": jnp.ones((OUTPUT_DIM,), jnp.float32),
        "no_b": jnp.zeros((OUTPUT_DIM,), jnp.float32),
    }


def pack_params(p):
    """Re-lay-out logical params into a few lane-dense stacked operands so the
    fused kernel needs 11 input DMAs instead of ~27 tiny ones."""
    dim = DIM

    # all 1-row vectors (biases, LN gammas/betas, adaLN biases) -> one (V_TOTAL, dim)
    rows = [p["pin_b"], p["te_b1"], p["te_b2"], p["pout_b"], p["no_g"], p["no_b"]]
    for l in range(DEPTH):
        ada_b = p["ada_b"][l].reshape(4, dim)     # [shift_msa, scale_msa, shift_mlp, scale_mlp]
        rows += [p["n1_g"][l], p["n1_b"][l], p["n2_g"][l], p["n2_b"][l],
                 p["ff_g"][l], p["ff_b"][l],
                 ada_b[0], ada_b[1], ada_b[2], ada_b[3]]
    vec = jnp.stack([jnp.reshape(r, (dim,)) for r in rows], axis=0)
    assert vec.shape[0] == V_TOTAL

    # (dim, dim) square slabs: [te_w2, pout_w, (wq_l * dh**-0.5, wo_l) per layer]
    q_scale = DIM_HEAD ** -0.5      # == torch's dh**-0.25 applied to both q and k
    dd = [p["te_w2"], p["pout_w"]]
    for l in range(DEPTH):
        dd += [p["wq"][l] * q_scale, p["wo"][l]]
    w_dd = jnp.stack(dd, axis=0)

    return {
        "latents": p["latents"],
        "pin_w": p["pin_w"], "te_w1": p["te_w1"],
        "vec": vec, "w_dd": w_dd, "w_kv": p["wkv"],
        "ada_w": p["ada_w"], "ff_w1": p["ff_w1"], "ff_w2": p["ff_w2"],
    }


@jax.jit
def time_resampler_forward(packed, x, timestep):
    nb, n1, _ = x.shape

    # sinusoidal timestep projection (tiny, elementwise) stays in plain JAX
    t = jnp.broadcast_to(jnp.asarray(timestep, jnp.float32), (nb,))
    t_proj = sinusoidal_time_proj(t, T_IN_DIM, flip_sin_to_cos=True, freq_shift=0.0)

    x_flat = x.reshape(nb * n1, EMBED_DIM)

    kernel = functools.partial(
        fused_kernel, nb=nb, n1=n1, nq=NUM_QUERIES,
        heads=HEADS, dim_head=DIM_HEAD, depth=DEPTH)

    out = pl.pallas_call(
        kernel,
        out_shape=jax.ShapeDtypeStruct((nb * NUM_QUERIES, OUTPUT_DIM), x.dtype),
    )(t_proj, x_flat, packed["latents"], packed["vec"],
      packed["pin_w"], packed["te_w1"], packed["w_dd"], packed["w_kv"],
      packed["ada_w"], packed["ff_w1"], packed["ff_w2"])

    return out.reshape(nb, NUM_QUERIES, OUTPUT_DIM)


if __name__ == "__main__":
    key = jax.random.PRNGKey(0)
    pkey, xkey = jax.random.split(key)
    params = init_params(pkey)
    packed = pack_params(params)
    x = jax.random.normal(xkey, (B, N1, EMBED_DIM), jnp.float32)
    timestep = jnp.array(7, jnp.int32)

    out = time_resampler_forward(packed, x, timestep)
    jax.block_until_ready(out)
    assert out.shape == (B, NUM_QUERIES, OUTPUT_DIM), out.shape
    assert bool(jnp.all(jnp.isfinite(out)))
    print("KERNEL_OK")
</pallas_src>

<mosaic_0001>
module attributes {stable_mosaic.version = 11 : i64} {
  func.func @fused_kernel(%arg0: memref<2x32xf32, #tpu.memory_space<vmem>>, %arg1: memref<32x32xf32, #tpu.memory_space<vmem>>, %arg2: memref<8x64xf32, #tpu.memory_space<vmem>>, %arg3: memref<26x64xf32, #tpu.memory_space<vmem>>, %arg4: memref<32x64xf32, #tpu.memory_space<vmem>>, %arg5: memref<32x64xf32, #tpu.memory_space<vmem>>, %arg6: memref<6x64x64xf32, #tpu.memory_space<vmem>>, %arg7: memref<2x64x128xf32, #tpu.memory_space<vmem>>, %arg8: memref<2x64x256xf32, #tpu.memory_space<vmem>>, %arg9: memref<2x64x256xf32, #tpu.memory_space<vmem>>, %arg10: memref<2x256x64xf32, #tpu.memory_space<vmem>>, %arg11: memref<16x64xf32, #tpu.memory_space<vmem>>) attributes {dimension_semantics = [], scalar_prefetch = 0 : i64, scratch_operands = 0 : i64, tpu.core_type = #tpu.core_type<tc>} {
    %c0 = arith.constant 0 : index
    %c0_0 = arith.constant 0 : index
    %0 = vector.load %arg0[%c0, %c0_0] : memref<2x32xf32, #tpu.memory_space<vmem>>, vector<2x32xf32>
    %c0_1 = arith.constant 0 : index
    %c0_2 = arith.constant 0 : index
    %1 = vector.load %arg5[%c0_1, %c0_2] : memref<32x64xf32, #tpu.memory_space<vmem>>, vector<32x64xf32>
    %cst = arith.constant dense<0.000000e+00> : vector<2x64xf32>
    %2 = tpu.matmul %0, %1, %cst {dimension_numbers = #tpu.dot_dimension_numbers<[1], [0], [0], [1], [0, 0, 1, 1], [], []>} : vector<2x32xf32>, vector<32x64xf32>, vector<2x64xf32> -> vector<2x64xf32>
    %c1 = arith.constant 1 : index
    %c0_3 = arith.constant 0 : index
    %3 = vector.load %arg3[%c1, %c0_3] : memref<26x64xf32, #tpu.memory_space<vmem>>, vector<1x64xf32>
    %4 = vector.broadcast %3 : vector<1x64xf32> to vector<2x64xf32>
    %5 = arith.addf %2, %4 : vector<2x64xf32>
    %6 = arith.negf %5 : vector<2x64xf32>
    %7 = math.exp %6 : vector<2x64xf32>
    %cst_4 = arith.constant 1.000000e+00 : f32
    %8 = vector.broadcast %cst_4 : f32 to vector<2x64xf32>
    %9 = arith.addf %8, %7 : vector<2x64xf32>
    %10 = arith.divf %8, %9 : vector<2x64xf32>
    %11 = arith.mulf %5, %10 : vector<2x64xf32>
    %c0_5 = arith.constant 0 : index
    %c0_6 = arith.constant 0 : index
    %c0_7 = arith.constant 0 : index
    %12 = vector.load %arg6[%c0_5, %c0_6, %c0_7] : memref<6x64x64xf32, #tpu.memory_space<vmem>>, vector<1x64x64xf32>
    %13 = vector.shape_cast %12 : vector<1x64x64xf32> to vector<64x64xf32>
    %cst_8 = arith.constant dense<0.000000e+00> : vector<2x64xf32>
    %14 = tpu.matmul %11, %13, %cst_8 {dimension_numbers = #tpu.dot_dimension_numbers<[1], [0], [0], [1], [0, 0, 1, 1], [], []>} : vector<2x64xf32>, vector<64x64xf32>, vector<2x64xf32> -> vector<2x64xf32>
    %c2 = arith.constant 2 : index
    %c0_9 = arith.constant 0 : index
    %15 = vector.load %arg3[%c2, %c0_9] : memref<26x64xf32, #tpu.memory_space<vmem>>, vector<1x64xf32>
    %16 = vector.broadcast %15 : vector<1x64xf32> to vector<2x64xf32>
    %17 = arith.addf %14, %16 : vector<2x64xf32>
    %c0_10 = arith.constant 0 : index
    %c0_11 = arith.constant 0 : index
    %18 = vector.load %arg1[%c0_10, %c0_11] : memref<32x32xf32, #tpu.memory_space<vmem>>, vector<32x32xf32>
    %c0_12 = arith.constant 0 : index
    %c0_13 = arith.constant 0 : index
    %19 = vector.load %arg4[%c0_12, %c0_13] : memref<32x64xf32, #tpu.memory_space<vmem>>, vector<32x64xf32>
    %cst_14 = arith.constant dense<0.000000e+00> : vector<32x64xf32>
    %20 = tpu.matmul %18, %19, %cst_14 {dimension_numbers = #tpu.dot_dimension_numbers<[1], [0], [0], [1], [0, 0, 1, 1], [], []>} : vector<32x32xf32>, vector<32x64xf32>, vector<32x64xf32> -> vector<32x64xf32>
    %c0_15 = arith.constant 0 : index
    %c0_16 = arith.constant 0 : index
    %21 = vector.load %arg3[%c0_15, %c0_16] : memref<26x64xf32, #tpu.memory_space<vmem>>, vector<1x64xf32>
    %22 = vector.broadcast %21 : vector<1x64xf32> to vector<32x64xf32>
    %23 = arith.addf %20, %22 : vector<32x64xf32>
    %24 = vector.extract_strided_slice %17 {offsets = [0, 0], sizes = [1, 64], strides = [1, 1]} : vector<2x64xf32> to vector<1x64xf32>
    %25 = vector.shape_cast %24 : vector<1x64xf32> to vector<1x64xf32>
    %26 = vector.broadcast %25 : vector<1x64xf32> to vector<16x64xf32>
    %27 = vector.extract_strided_slice %17 {offsets = [1, 0], sizes = [1, 64], strides = [1, 1]} : vector<2x64xf32> to vector<1x64xf32>
    %28 = vector.shape_cast %27 : vector<1x64xf32> to vector<1x64xf32>
    %29 = vector.broadcast %28 : vector<1x64xf32> to vector<16x64xf32>
    %30 = tpu.concatenate %26, %29 in 0 : vector<16x64xf32>, vector<16x64xf32> -> vector<32x64xf32>
    %31 = arith.addf %23, %30 : vector<32x64xf32>
    %c0_17 = arith.constant 0 : index
    %c0_18 = arith.constant 0 : index
    %32 = vector.load %arg2[%c0_17, %c0_18] : memref<8x64xf32, #tpu.memory_space<vmem>>, vector<8x64xf32>
    %33 = vector.shape_cast %32 : vector<8x64xf32> to vector<1x8x64xf32>
    %34 = vector.shape_cast %33 : vector<1x8x64xf32> to vector<1x8x64xf32>
    %35 = vector.broadcast %34 : vector<1x8x64xf32> to vector<2x8x64xf32>
    %36 = vector.shape_cast %35 : vector<2x8x64xf32> to vector<16x64xf32>
    %37 = arith.negf %17 : vector<2x64xf32>
    %38 = math.exp %37 : vector<2x64xf32>
    %cst_19 = arith.constant 1.000000e+00 : f32
    %39 = vector.broadcast %cst_19 : f32 to vector<2x64xf32>
    %40 = arith.addf %39, %38 : vector<2x64xf32>
    %41 = arith.divf %39, %40 : vector<2x64xf32>
    %42 = arith.mulf %17, %41 : vector<2x64xf32>
    %43 = vector.extract_strided_slice %42 {offsets = [0, 0], sizes = [1, 64], strides = [1, 1]} : vector<2x64xf32> to vector<1x64xf32>
    %44 = vector.shape_cast %43 : vector<1x64xf32> to vector<1x64xf32>
    %45 = vector.broadcast %44 : vector<1x64xf32> to vector<8x64xf32>
    %46 = vector.extract_strided_slice %42 {offsets = [1, 0], sizes = [1, 64], strides = [1, 1]} : vector<2x64xf32> to vector<1x64xf32>
    %47 = vector.shape_cast %46 : vector<1x64xf32> to vector<1x64xf32>
    %48 = vector.broadcast %47 : vector<1x64xf32> to vector<8x64xf32>
    %49 = tpu.concatenate %45, %48 in 0 : vector<8x64xf32>, vector<8x64xf32> -> vector<16x64xf32>
    %c0_20 = arith.constant 0 : index
    %c0_21 = arith.constant 0 : index
    %c0_22 = arith.constant 0 : index
    %50 = vector.load %arg8[%c0_20, %c0_21, %c0_22] : memref<2x64x256xf32, #tpu.memory_space<vmem>>, vector<1x64x256xf32>
    %51 = vector.shape_cast %50 : vector<1x64x256xf32> to vector<64x256xf32>
    %cst_23 = arith.constant dense<0.000000e+00> : vector<16x256xf32>
    %52 = tpu.matmul %49, %51, %cst_23 {dimension_numbers = #tpu.dot_dimension_numbers<[1], [0], [0], [1], [0, 0, 1, 1], [], []>} : vector<16x64xf32>, vector<64x256xf32>, vector<16x256xf32> -> vector<16x256xf32>
    %53 = vector.extract_strided_slice %52 {offsets = [0, 0], sizes = [16, 64], strides = [1, 1]} : vector<16x256xf32> to vector<16x64xf32>
    %c12 = arith.constant 12 : index
    %c0_24 = arith.constant 0 : index
    %54 = vector.load %arg3[%c12, %c0_24] : memref<26x64xf32, #tpu.memory_space<vmem>>, vector<1x64xf32>
    %55 = vector.broadcast %54 : vector<1x64xf32> to vector<16x64xf32>
    %56 = arith.addf %53, %55 : vector<16x64xf32>
    %57 = vector.extract_strided_slice %52 {offsets = [0, 64], sizes = [16, 64], strides = [1, 1]} : vector<16x256xf32> to vector<16x64xf32>
    %c13 = arith.constant 13 : index
    %c0_25 = arith.constant 0 : index
    %58 = vector.load %arg3[%c13, %c0_25] : memref<26x64xf32, #tpu.memory_space<vmem>>, vector<1x64xf32>
    %59 = vector.broadcast %58 : vector<1x64xf32> to vector<16x64xf32>
    %60 = arith.addf %57, %59 : vector<16x64xf32>
    %61 = vector.extract_strided_slice %52 {offsets = [0, 128], sizes = [16, 64], strides = [1, 1]} : vector<16x256xf32> to vector<16x64xf32>
    %c14 = arith.constant 14 : index
    %c0_26 = arith.constant 0 : index
    %62 = vector.load %arg3[%c14, %c0_26] : memref<26x64xf32, #tpu.memory_space<vmem>>, vector<1x64xf32>
    %63 = vector.broadcast %62 : vector<1x64xf32> to vector<16x64xf32>
    %64 = arith.addf %61, %63 : vector<16x64xf32>
    %65 = vector.extract_strided_slice %52 {offsets = [0, 192], sizes = [16, 64], strides = [1, 1]} : vector<16x256xf32> to vector<16x64xf32>
    %c15 = arith.constant 15 : index
    %c0_27 = arith.constant 0 : index
    %66 = vector.load %arg3[%c15, %c0_27] : memref<26x64xf32, #tpu.memory_space<vmem>>, vector<1x64xf32>
    %67 = vector.broadcast %66 : vector<1x64xf32> to vector<16x64xf32>
    %68 = arith.addf %65, %67 : vector<16x64xf32>
    %c6 = arith.constant 6 : index
    %c0_28 = arith.constant 0 : index
    %69 = vector.load %arg3[%c6, %c0_28] : memref<26x64xf32, #tpu.memory_space<vmem>>, vector<1x64xf32>
    %c7 = arith.constant 7 : index
    %c0_29 = arith.constant 0 : index
    %70 = vector.load %arg3[%c7, %c0_29] : memref<26x64xf32, #tpu.memory_space<vmem>>, vector<1x64xf32>
    %cst_30 = arith.constant dense<0.000000e+00> : vector<32xf32>
    %71 = vector.multi_reduction <add>, %31, %cst_30 [1] : vector<32x64xf32> to vector<32xf32>
    %72 = vector.shape_cast %71 : vector<32xf32> to vector<32x1xf32>
    %cst_31 = arith.constant 6.400000e+01 : f32
    %73 = vector.broadcast %cst_31 : f32 to vector<32x1xf32>
    %74 = arith.divf %72, %73 : vector<32x1xf32>
    %75 = vector.broadcast %74 : vector<32x1xf32> to vector<32x64xf32>
    %76 = arith.subf %31, %75 : vector<32x64xf32>
    %77 = arith.mulf %76, %76 : vector<32x64xf32>
    %cst_32 = arith.constant dense<0.000000e+00> : vector<32xf32>
    %78 = vector.multi_reduction <add>, %77, %cst_32 [1] : vector<32x64xf32> to vector<32xf32>
    %79 = vector.shape_cast %78 : vector<32xf32> to vector<32x1xf32>
    %cst_33 = arith.constant 6.400000e+01 : f32
    %80 = vector.broadcast %cst_33 : f32 to vector<32x1xf32>
    %81 = arith.divf %79, %80 : vector<32x1xf32>
    %cst_34 = arith.constant 9.99999974E-6 : f32
    %82 = vector.broadcast %cst_34 : f32 to vector<32x1xf32>
    %83 = arith.addf %81, %82 : vector<32x1xf32>
    %84 = math.rsqrt %83 : vector<32x1xf32>
    %85 = vector.broadcast %84 : vector<32x1xf32> to vector<32x64xf32>
    %86 = arith.mulf %76, %85 : vector<32x64xf32>
    %87 = vector.broadcast %69 : vector<1x64xf32> to vector<32x64xf32>
    %88 = arith.mulf %86, %87 : vector<32x64xf32>
    %89 = vector.broadcast %70 : vector<1x64xf32> to vector<32x64xf32>
    %90 = arith.addf %88, %89 : vector<32x64xf32>
    %c8 = arith.constant 8 : index
    %c0_35 = arith.constant 0 : index
    %91 = vector.load %arg3[%c8, %c0_35] : memref<26x64xf32, #tpu.memory_space<vmem>>, vector<1x64xf32>
    %c9 = arith.constant 9 : index
    %c0_36 = arith.constant 0 : index
    %92 = vector.load %arg3[%c9, %c0_36] : memref<26x64xf32, #tpu.memory_space<vmem>>, vector<1x64xf32>
    %cst_37 = arith.constant dense<0.000000e+00> : vector<16xf32>
    %93 = vector.multi_reduction <add>, %36, %cst_37 [1] : vector<16x64xf32> to vector<16xf32>
    %94 = vector.shape_cast %93 : vector<16xf32> to vector<16x1xf32>
    %cst_38 = arith.constant 6.400000e+01 : f32
    %95 = vector.broadcast %cst_38 : f32 to vector<16x1xf32>
    %96 = arith.divf %94, %95 : vector<16x1xf32>
    %97 = vector.broadcast %96 : vector<16x1xf32> to vector<16x64xf32>
    %98 = arith.subf %36, %97 : vector<16x64xf32>
    %99 = arith.mulf %98, %98 : vector<16x64xf32>
    %cst_39 = arith.constant dense<0.000000e+00> : vector<16xf32>
    %100 = vector.multi_reduction <add>, %99, %cst_39 [1] : vector<16x64xf32> to vector<16xf32>
    %101 = vector.shape_cast %100 : vector<16xf32> to vector<16x1xf32>
    %cst_40 = arith.constant 6.400000e+01 : f32
    %102 = vector.broadcast %cst_40 : f32 to vector<16x1xf32>
    %103 = arith.divf %101, %102 : vector<16x1xf32>
    %cst_41 = arith.constant 9.99999974E-6 : f32
    %104 = vector.broadcast %cst_41 : f32 to vector<16x1xf32>
    %105 = arith.addf %103, %104 : vector<16x1xf32>
    %106 = math.rsqrt %105 : vector<16x1xf32>
    %107 = vector.broadcast %106 : vector<16x1xf32> to vector<16x64xf32>
    %108 = arith.mulf %98, %107 : vector<16x64xf32>
    %109 = vector.broadcast %91 : vector<1x64xf32> to vector<16x64xf32>
    %110 = arith.mulf %108, %109 : vector<16x64xf32>
    %111 = vector.broadcast %92 : vector<1x64xf32> to vector<16x64xf32>
    %112 = arith.addf %110, %111 : vector<16x64xf32>
    %cst_42 = arith.constant 1.000000e+00 : f32
    %113 = vector.broadcast %cst_42 : f32 to vector<16x64xf32>
    %114 = arith.addf %113, %60 : vector<16x64xf32>
    %115 = arith.mulf %112, %114 : vector<16x64xf32>
    %116 = arith.addf %115, %56 : vector<16x64xf32>
    %c2_43 = arith.constant 2 : index
    %c0_44 = arith.constant 0 : index
    %c0_45 = arith.constant 0 : index
    %117 = vector.load %arg6[%c2_43, %c0_44, %c0_45] : memref<6x64x64xf32, #tpu.memory_space<vmem>>, vector<1x64x64xf32>
    %118 = vector.shape_cast %117 : vector<1x64x64xf32> to vector<64x64xf32>
    %cst_46 = arith.constant dense<0.000000e+00> : vector<16x64xf32>
    %119 = tpu.matmul %116, %118, %cst_46 {dimension_numbers = #tpu.dot_dimension_numbers<[1], [0], [0], [1], [0, 0, 1, 1], [], []>} : vector<16x64xf32>, vector<64x64xf32>, vector<16x64xf32> -> vector<16x64xf32>
    %120 = vector.shape_cast %90 : vector<32x64xf32> to vector<2x16x64xf32>
    %121 = vector.shape_cast %116 : vector<16x64xf32> to vector<2x8x64xf32>
    %122 = tpu.concatenate %120, %121 in 1 : vector<2x16x64xf32>, vector<2x8x64xf32> -> vector<2x24x64xf32>
    %123 = vector.shape_cast %122 : vector<2x24x64xf32> to vector<48x64xf32>
    %c0_47 = arith.constant 0 : index
    %c0_48 = arith.constant 0 : index
    %c0_49 = arith.constant 0 : index
    %124 = vector.load %arg7[%c0_47, %c0_48, %c0_49] : memref<2x64x128xf32, #tpu.memory_space<vmem>>, vector<1x64x128xf32>
    %125 = vector.shape_cast %124 : vector<1x64x128xf32> to vector<64x128xf32>
    %cst_50 = arith.constant dense<0.000000e+00> : vector<48x128xf32>
    %126 = tpu.matmul %123, %125, %cst_50 {dimension_numbers = #tpu.dot_dimension_numbers<[1], [0], [0], [1], [0, 0, 1, 1], [], []>} : vector<48x64xf32>, vector<64x128xf32>, vector<48x128xf32> -> vector<48x128xf32>
    %127 = vector.shape_cast %119 : vector<16x64xf32> to vector<2x8x64xf32>
    %128 = vector.shape_cast %126 : vector<48x128xf32> to vector<2x24x128xf32>
    %129 = vector.extract_strided_slice %127 {offsets = [0, 0, 0], sizes = [2, 8, 16], strides = [1, 1, 1]} : vector<2x8x64xf32> to vector<2x8x16xf32>
    %130 = vector.extract_strided_slice %128 {offsets = [0, 0, 0], sizes = [2, 24, 16], strides = [1, 1, 1]} : vector<2x24x128xf32> to vector<2x24x16xf32>
    %131 = vector.extract_strided_slice %128 {offsets = [0, 0, 64], sizes = [2, 24, 16], strides = [1, 1, 1]} : vector<2x24x128xf32> to vector<2x24x16xf32>
    "tpu.trace_start"() <{level = 10 : i32, message = "bqd,bkd->bqk"}> : () -> ()
    %cst_51 = arith.constant dense<0.000000e+00> : vector<2x8x24xf32>
    %132 = tpu.matmul %129, %130, %cst_51 {dimension_numbers = #tpu.dot_dimension_numbers<[2], [2], [1], [1], [0, 0, 0, 1, 1, 1], [0], [0]>} : vector<2x8x16xf32>, vector<2x24x16xf32>, vector<2x8x24xf32> -> vector<2x8x24xf32>
    "tpu.trace_stop"() : () -> ()
    %cst_52 = arith.constant dense<0xFF800000> : vector<2x8xf32>
    %133 = vector.multi_reduction <maximumf>, %132, %cst_52 [2] : vector<2x8x24xf32> to vector<2x8xf32>
    %134 = vector.shape_cast %133 : vector<2x8xf32> to vector<2x8x1xf32>
    %135 = vector.broadcast %134 : vector<2x8x1xf32> to vector<2x8x24xf32>
    %136 = arith.subf %132, %135 : vector<2x8x24xf32>
    %137 = math.exp %136 : vector<2x8x24xf32>
    %cst_53 = arith.constant dense<0.000000e+00> : vector<2x8xf32>
    %138 = vector.multi_reduction <add>, %137, %cst_53 [2] : vector<2x8x24xf32> to vector<2x8xf32>
    %139 = vector.shape_cast %138 : vector<2x8xf32> to vector<2x8x1xf32>
    %140 = vector.broadcast %139 : vector<2x8x1xf32> to vector<2x8x24xf32>
    %141 = arith.divf %137, %140 : vector<2x8x24xf32>
    "tpu.trace_start"() <{level = 10 : i32, message = "bqk,bkd->bqd"}> : () -> ()
    %cst_54 = arith.constant dense<0.000000e+00> : vector<2x8x16xf32>
    %142 = tpu.matmul %141, %131, %cst_54 {dimension_numbers = #tpu.dot_dimension_numbers<[2], [1], [1], [2], [0, 0, 0, 1, 1, 2], [0], [0]>} : vector<2x8x24xf32>, vector<2x24x16xf32>, vector<2x8x16xf32> -> vector<2x8x16xf32>
    "tpu.trace_stop"() : () -> ()
    %143 = vector.extract_strided_slice %127 {offsets = [0, 0, 16], sizes = [2, 8, 16], strides = [1, 1, 1]} : vector<2x8x64xf32> to vector<2x8x16xf32>
    %144 = vector.extract_strided_slice %128 {offsets = [0, 0, 16], sizes = [2, 24, 16], strides = [1, 1, 1]} : vector<2x24x128xf32> to vector<2x24x16xf32>
    %145 = vector.extract_strided_slice %128 {offsets = [0, 0, 80], sizes = [2, 24, 16], strides = [1, 1, 1]} : vector<2x24x128xf32> to vector<2x24x16xf32>
    "tpu.trace_start"() <{level = 10 : i32, message = "bqd,bkd->bqk"}> : () -> ()
    %cst_55 = arith.constant dense<0.000000e+00> : vector<2x8x24xf32>
    %146 = tpu.matmul %143, %144, %cst_55 {dimension_numbers = #tpu.dot_dimension_numbers<[2], [2], [1], [1], [0, 0, 0, 1, 1, 1], [0], [0]>} : vector<2x8x16xf32>, vector<2x24x16xf32>, vector<2x8x24xf32> -> vector<2x8x24xf32>
    "tpu.trace_stop"() : () -> ()
    %cst_56 = arith.constant dense<0xFF800000> : vector<2x8xf32>
    %147 = vector.multi_reduction <maximumf>, %146, %cst_56 [2] : vector<2x8x24xf32> to vector<2x8xf32>
    %148 = vector.shape_cast %147 : vector<2x8xf32> to vector<2x8x1xf32>
    %149 = vector.broadcast %148 : vector<2x8x1xf32> to vector<2x8x24xf32>
    %150 = arith.subf %146, %149 : vector<2x8x24xf32>
    %151 = math.exp %150 : vector<2x8x24xf32>
    %cst_57 = arith.constant dense<0.000000e+00> : vector<2x8xf32>
    %152 = vector.multi_reduction <add>, %151, %cst_57 [2] : vector<2x8x24xf32> to vector<2x8xf32>
    %153 = vector.shape_cast %152 : vector<2x8xf32> to vector<2x8x1xf32>
    %154 = vector.broadcast %153 : vector<2x8x1xf32> to vector<2x8x24xf32>
    %155 = arith.divf %151, %154 : vector<2x8x24xf32>
    "tpu.trace_start"() <{level = 10 : i32, message = "bqk,bkd->bqd"}> : () -> ()
    %cst_58 = arith.constant dense<0.000000e+00> : vector<2x8x16xf32>
    %156 = tpu.matmul %155, %145, %cst_58 {dimension_numbers = #tpu.dot_dimension_numbers<[2], [1], [1], [2], [0, 0, 0, 1, 1, 2], [0], [0]>} : vector<2x8x24xf32>, vector<2x24x16xf32>, vector<2x8x16xf32> -> vector<2x8x16xf32>
    "tpu.trace_stop"() : () -> ()
    %157 = vector.extract_strided_slice %127 {offsets = [0, 0, 32], sizes = [2, 8, 16], strides = [1, 1, 1]} : vector<2x8x64xf32> to vector<2x8x16xf32>
    %158 = vector.extract_strided_slice %128 {offsets = [0, 0, 32], sizes = [2, 24, 16], strides = [1, 1, 1]} : vector<2x24x128xf32> to vector<2x24x16xf32>
    %159 = vector.extract_strided_slice %128 {offsets = [0, 0, 96], sizes = [2, 24, 16], strides = [1, 1, 1]} : vector<2x24x128xf32> to vector<2x24x16xf32>
    "tpu.trace_start"() <{level = 10 : i32, message = "bqd,bkd->bqk"}> : () -> ()
    %cst_59 = arith.constant dense<0.000000e+00> : vector<2x8x24xf32>
    %160 = tpu.matmul %157, %158, %cst_59 {dimension_numbers = #tpu.dot_dimension_numbers<[2], [2], [1], [1], [0, 0, 0, 1, 1, 1], [0], [0]>} : vector<2x8x16xf32>, vector<2x24x16xf32>, vector<2x8x24xf32> -> vector<2x8x24xf32>
    "tpu.trace_stop"() : () -> ()
    %cst_60 = arith.constant dense<0xFF800000> : vector<2x8xf32>
    %161 = vector.multi_reduction <maximumf>, %160, %cst_60 [2] : vector<2x8x24xf32> to vector<2x8xf32>
    %162 = vector.shape_cast %161 : vector<2x8xf32> to vector<2x8x1xf32>
    %163 = vector.broadcast %162 : vector<2x8x1xf32> to vector<2x8x24xf32>
    %164 = arith.subf %160, %163 : vector<2x8x24xf32>
    %165 = math.exp %164 : vector<2x8x24xf32>
    %cst_61 = arith.constant dense<0.000000e+00> : vector<2x8xf32>
    %166 = vector.multi_reduction <add>, %165, %cst_61 [2] : vector<2x8x24xf32> to vector<2x8xf32>
    %167 = vector.shape_cast %166 : vector<2x8xf32> to vector<2x8x1xf32>
    %168 = vector.broadcast %167 : vector<2x8x1xf32> to vector<2x8x24xf32>
    %169 = arith.divf %165, %168 : vector<2x8x24xf32>
    "tpu.trace_start"() <{level = 10 : i32, message = "bqk,bkd->bqd"}> : () -> ()
    %cst_62 = arith.constant dense<0.000000e+00> : vector<2x8x16xf32>
    %170 = tpu.matmul %169, %159, %cst_62 {dimension_numbers = #tpu.dot_dimension_numbers<[2], [1], [1], [2], [0, 0, 0, 1, 1, 2], [0], [0]>} : vector<2x8x24xf32>, vector<2x24x16xf32>, vector<2x8x16xf32> -> vector<2x8x16xf32>
    "tpu.trace_stop"() : () -> ()
    %171 = vector.extract_strided_slice %127 {offsets = [0, 0, 48], sizes = [2, 8, 16], strides = [1, 1, 1]} : vector<2x8x64xf32> to vector<2x8x16xf32>
    %172 = vector.extract_strided_slice %128 {offsets = [0, 0, 48], sizes = [2, 24, 16], strides = [1, 1, 1]} : vector<2x24x128xf32> to vector<2x24x16xf32>
    %173 = vector.extract_strided_slice %128 {offsets = [0, 0, 112], sizes = [2, 24, 16], strides = [1, 1, 1]} : vector<2x24x128xf32> to vector<2x24x16xf32>
    "tpu.trace_start"() <{level = 10 : i32, message = "bqd,bkd->bqk"}> : () -> ()
    %cst_63 = arith.constant dense<0.000000e+00> : vector<2x8x24xf32>
    %174 = tpu.matmul %171, %172, %cst_63 {dimension_numbers = #tpu.dot_dimension_numbers<[2], [2], [1], [1], [0, 0, 0, 1, 1, 1], [0], [0]>} : vector<2x8x16xf32>, vector<2x24x16xf32>, vector<2x8x24xf32> -> vector<2x8x24xf32>
    "tpu.trace_stop"() : () -> ()
    %cst_64 = arith.constant dense<0xFF800000> : vector<2x8xf32>
    %175 = vector.multi_reduction <maximumf>, %174, %cst_64 [2] : vector<2x8x24xf32> to vector<2x8xf32>
    %176 = vector.shape_cast %175 : vector<2x8xf32> to vector<2x8x1xf32>
    %177 = vector.broadcast %176 : vector<2x8x1xf32> to vector<2x8x24xf32>
    %178 = arith.subf %174, %177 : vector<2x8x24xf32>
    %179 = math.exp %178 : vector<2x8x24xf32>
    %cst_65 = arith.constant dense<0.000000e+00> : vector<2x8xf32>
    %180 = vector.multi_reduction <add>, %179, %cst_65 [2] : vector<2x8x24xf32> to vector<2x8xf32>
    %181 = vector.shape_cast %180 : vector<2x8xf32> to vector<2x8x1xf32>
    %182 = vector.broadcast %181 : vector<2x8x1xf32> to vector<2x8x24xf32>
    %183 = arith.divf %179, %182 : vector<2x8x24xf32>
    "tpu.trace_start"() <{level = 10 : i32, message = "bqk,bkd->bqd"}> : () -> ()
    %cst_66 = arith.constant dense<0.000000e+00> : vector<2x8x16xf32>
    %184 = tpu.matmul %183, %173, %cst_66 {dimension_numbers = #tpu.dot_dimension_numbers<[2], [1], [1], [2], [0, 0, 0, 1, 1, 2], [0], [0]>} : vector<2x8x24xf32>, vector<2x24x16xf32>, vector<2x8x16xf32> -> vector<2x8x16xf32>
    "tpu.trace_stop"() : () -> ()
    %185 = tpu.concatenate %142, %156, %170, %184 in 2 : vector<2x8x16xf32>, vector<2x8x16xf32>, vector<2x8x16xf32>, vector<2x8x16xf32> -> vector<2x8x64xf32>
    %186 = vector.shape_cast %185 : vector<2x8x64xf32> to vector<16x64xf32>
    %c3 = arith.constant 3 : index
    %c0_67 = arith.constant 0 : index
    %c0_68 = arith.constant 0 : index
    %187 = vector.load %arg6[%c3, %c0_67, %c0_68] : memref<6x64x64xf32, #tpu.memory_space<vmem>>, vector<1x64x64xf32>
    %188 = vector.shape_cast %187 : vector<1x64x64xf32> to vector<64x64xf32>
    %cst_69 = arith.constant dense<0.000000e+00> : vector<16x64xf32>
    %189 = tpu.matmul %186, %188, %cst_69 {dimension_numbers = #tpu.dot_dimension_numbers<[1], [0], [0], [1], [0, 0, 1, 1], [], []>} : vector<16x64xf32>, vector<64x64xf32>, vector<16x64xf32> -> vector<16x64xf32>
    %190 = arith.addf %36, %189 : vector<16x64xf32>
    %c10 = arith.constant 10 : index
    %c0_70 = arith.constant 0 : index
    %191 = vector.load %arg3[%c10, %c0_70] : memref<26x64xf32, #tpu.memory_space<vmem>>, vector<1x64xf32>
    %c11 = arith.constant 11 : index
    %c0_71 = arith.constant 0 : index
    %192 = vector.load %arg3[%c11, %c0_71] : memref<26x64xf32, #tpu.memory_space<vmem>>, vector<1x64xf32>
    %cst_72 = arith.constant dense<0.000000e+00> : vector<16xf32>
    %193 = vector.multi_reduction <add>, %190, %cst_72 [1] : vector<16x64xf32> to vector<16xf32>
    %194 = vector.shape_cast %193 : vector<16xf32> to vector<16x1xf32>
    %cst_73 = arith.constant 6.400000e+01 : f32
    %195 = vector.broadcast %cst_73 : f32 to vector<16x1xf32>
    %196 = arith.divf %194, %195 : vector<16x1xf32>
    %197 = vector.broadcast %196 : vector<16x1xf32> to vector<16x64xf32>
    %198 = arith.subf %190, %197 : vector<16x64xf32>
    %199 = arith.mulf %198, %198 : vector<16x64xf32>
    %cst_74 = arith.constant dense<0.000000e+00> : vector<16xf32>
    %200 = vector.multi_reduction <add>, %199, %cst_74 [1] : vector<16x64xf32> to vector<16xf32>
    %201 = vector.shape_cast %200 : vector<16xf32> to vector<16x1xf32>
    %cst_75 = arith.constant 6.400000e+01 : f32
    %202 = vector.broadcast %cst_75 : f32 to vector<16x1xf32>
    %203 = arith.divf %201, %202 : vector<16x1xf32>
    %cst_76 = arith.constant 9.99999974E-6 : f32
    %204 = vector.broadcast %cst_76 : f32 to vector<16x1xf32>
    %205 = arith.addf %203, %204 : vector<16x1xf32>
    %206 = math.rsqrt %205 : vector<16x1xf32>
    %207 = vector.broadcast %206 : vector<16x1xf32> to vector<16x64xf32>
    %208 = arith.mulf %198, %207 : vector<16x64xf32>
    %209 = vector.broadcast %191 : vector<1x64xf32> to vector<16x64xf32>
    %210 = arith.mulf %208, %209 : vector<16x64xf32>
    %211 = vector.broadcast %192 : vector<1x64xf32> to vector<16x64xf32>
    %212 = arith.addf %210, %211 : vector<16x64xf32>
    %cst_77 = arith.constant 1.000000e+00 : f32
    %213 = vector.broadcast %cst_77 : f32 to vector<16x64xf32>
    %214 = arith.addf %213, %68 : vector<16x64xf32>
    %215 = arith.mulf %212, %214 : vector<16x64xf32>
    %216 = arith.addf %215, %64 : vector<16x64xf32>
    %c0_78 = arith.constant 0 : index
    %c0_79 = arith.constant 0 : index
    %c0_80 = arith.constant 0 : index
    %217 = vector.load %arg9[%c0_78, %c0_79, %c0_80] : memref<2x64x256xf32, #tpu.memory_space<vmem>>, vector<1x64x256xf32>
    %218 = vector.shape_cast %217 : vector<1x64x256xf32> to vector<64x256xf32>
    %cst_81 = arith.constant dense<0.000000e+00> : vector<16x256xf32>
    %219 = tpu.matmul %216, %218, %cst_81 {dimension_numbers = #tpu.dot_dimension_numbers<[1], [0], [0], [1], [0, 0, 1, 1], [], []>} : vector<16x64xf32>, vector<64x256xf32>, vector<16x256xf32> -> vector<16x256xf32>
    %cst_82 = arith.constant 5.000000e-01 : f32
    %220 = vector.broadcast %cst_82 : f32 to vector<16x256xf32>
    %221 = arith.mulf %220, %219 : vector<16x256xf32>
    %cst_83 = arith.constant 0.707106769 : f32
    %222 = vector.broadcast %cst_83 : f32 to vector<16x256xf32>
    %223 = arith.mulf %219, %222 : vector<16x256xf32>
    %cst_84 = arith.constant 0.000000e+00 : f32
    %224 = vector.broadcast %cst_84 : f32 to vector<16x256xf32>
    %225 = arith.cmpf oge, %223, %224 : vector<16x256xf32>
    %cst_85 = arith.constant 1.000000e+00 : f32
    %cst_86 = arith.constant -1.000000e+00 : f32
    %226 = vector.broadcast %cst_85 : f32 to vector<16x256xf32>
    %227 = vector.broadcast %cst_86 : f32 to vector<16x256xf32>
    %228 = arith.select %225, %226, %227 : vector<16x256xi1>, vector<16x256xf32>
    %229 = math.absf %223 : vector<16x256xf32>
    %cst_87 = arith.constant 0.327591091 : f32
    %230 = vector.broadcast %cst_87 : f32 to vector<16x256xf32>
    %231 = arith.mulf %230, %229 : vector<16x256xf32>
    %cst_88 = arith.constant 1.000000e+00 : f32
    %232 = vector.broadcast %cst_88 : f32 to vector<16x256xf32>
    %233 = arith.addf %232, %231 : vector<16x256xf32>
    %cst_89 = arith.constant 1.000000e+00 : f32
    %234 = vector.broadcast %cst_89 : f32 to vector<16x256xf32>
    %235 = arith.divf %234, %233 : vector<16x256xf32>
    %cst_90 = arith.constant 1.06140542 : f32
    %236 = vector.broadcast %cst_90 : f32 to vector<16x256xf32>
    %237 = arith.mulf %236, %235 : vector<16x256xf32>
    %cst_91 = arith.constant 1.45315206 : f32
    %238 = vector.broadcast %cst_91 : f32 to vector<16x256xf32>
    %239 = arith.subf %237, %238 : vector<16x256xf32>
    %240 = arith.mulf %239, %235 : vector<16x256xf32>
    %cst_92 = arith.constant 1.42141378 : f32
    %241 = vector.broadcast %cst_92 : f32 to vector<16x256xf32>
    %242 = arith.addf %240, %241 : vector<16x256xf32>
    %243 = arith.mulf %242, %235 : vector<16x256xf32>
    %cst_93 = arith.constant 0.284496725 : f32
    %244 = vector.broadcast %cst_93 : f32 to vector<16x256xf32>
    %245 = arith.subf %243, %244 : vector<16x256xf32>
    %246 = arith.mulf %245, %235 : vector<16x256xf32>
    %cst_94 = arith.constant 0.254829586 : f32
    %247 = vector.broadcast %cst_94 : f32 to vector<16x256xf32>
    %248 = arith.addf %246, %247 : vector<16x256xf32>
    %249 = arith.mulf %248, %235 : vector<16x256xf32>
    %cst_95 = arith.constant 0.000000e+00 : f32
    %250 = vector.broadcast %cst_95 : f32 to vector<16x256xf32>
    %251 = arith.subf %250, %229 : vector<16x256xf32>
    %252 = arith.mulf %251, %229 : vector<16x256xf32>
    %253 = math.exp %252 : vector<16x256xf32>
    %254 = arith.mulf %249, %253 : vector<16x256xf32>
    %cst_96 = arith.constant 1.000000e+00 : f32
    %255 = vector.broadcast %cst_96 : f32 to vector<16x256xf32>
    %256 = arith.subf %255, %254 : vector<16x256xf32>
    %257 = arith.mulf %228, %256 : vector<16x256xf32>
    %cst_97 = arith.constant 1.000000e+00 : f32
    %258 = vector.broadcast %cst_97 : f32 to vector<16x256xf32>
    %259 = arith.addf %258, %257 : vector<16x256xf32>
    %260 = arith.mulf %221, %259 : vector<16x256xf32>
    %c0_98 = arith.constant 0 : index
    %c0_99 = arith.constant 0 : index
    %c0_100 = arith.constant 0 : index
    %261 = vector.load %arg10[%c0_98, %c0_99, %c0_100] : memref<2x256x64xf32, #tpu.memory_space<vmem>>, vector<1x256x64xf32>
    %262 = vector.shape_cast %261 : vector<1x256x64xf32> to vector<256x64xf32>
    %cst_101 = arith.constant dense<0.000000e+00> : vector<16x64xf32>
    %263 = tpu.matmul %260, %262, %cst_101 {dimension_numbers = #tpu.dot_dimension_numbers<[1], [0], [0], [1], [0, 0, 1, 1], [], []>} : vector<16x256xf32>, vector<256x64xf32>, vector<16x64xf32> -> vector<16x64xf32>
    %264 = arith.addf %190, %263 : vector<16x64xf32>
    %c1_102 = arith.constant 1 : index
    %c0_103 = arith.constant 0 : index
    %c0_104 = arith.constant 0 : index
    %265 = vector.load %arg8[%c1_102, %c0_103, %c0_104] : memref<2x64x256xf32, #tpu.memory_space<vmem>>, vector<1x64x256xf32>
    %266 = vector.shape_cast %265 : vector<1x64x256xf32> to vector<64x256xf32>
    %cst_105 = arith.constant dense<0.000000e+00> : vector<16x256xf32>
    %267 = tpu.matmul %49, %266, %cst_105 {dimension_numbers = #tpu.dot_dimension_numbers<[1], [0], [0], [1], [0, 0, 1, 1], [], []>} : vector<16x64xf32>, vector<64x256xf32>, vector<16x256xf32> -> vector<16x256xf32>
    %268 = vector.extract_strided_slice %267 {offsets = [0, 0], sizes = [16, 64], strides = [1, 1]} : vector<16x256xf32> to vector<16x64xf32>
    %c22 = arith.constant 22 : index
    %c0_106 = arith.constant 0 : index
    %269 = vector.load %arg3[%c22, %c0_106] : memref<26x64xf32, #tpu.memory_space<vmem>>, vector<1x64xf32>
    %270 = vector.broadcast %269 : vector<1x64xf32> to vector<16x64xf32>
    %271 = arith.addf %268, %270 : vector<16x64xf32>
    %272 = vector.extract_strided_slice %267 {offsets = [0, 64], sizes = [16, 64], strides = [1, 1]} : vector<16x256xf32> to vector<16x64xf32>
    %c23 = arith.constant 23 : index
    %c0_107 = arith.constant 0 : index
    %273 = vector.load %arg3[%c23, %c0_107] : memref<26x64xf32, #tpu.memory_space<vmem>>, vector<1x64xf32>
    %274 = vector.broadcast %273 : vector<1x64xf32> to vector<16x64xf32>
    %275 = arith.addf %272, %274 : vector<16x64xf32>
    %276 = vector.extract_strided_slice %267 {offsets = [0, 128], sizes = [16, 64], strides = [1, 1]} : vector<16x256xf32> to vector<16x64xf32>
    %c24 = arith.constant 24 : index
    %c0_108 = arith.constant 0 : index
    %277 = vector.load %arg3[%c24, %c0_108] : memref<26x64xf32, #tpu.memory_space<vmem>>, vector<1x64xf32>
    %278 = vector.broadcast %277 : vector<1x64xf32> to vector<16x64xf32>
    %279 = arith.addf %276, %278 : vector<16x64xf32>
    %280 = vector.extract_strided_slice %267 {offsets = [0, 192], sizes = [16, 64], strides = [1, 1]} : vector<16x256xf32> to vector<16x64xf32>
    %c25 = arith.constant 25 : index
    %c0_109 = arith.constant 0 : index
    %281 = vector.load %arg3[%c25, %c0_109] : memref<26x64xf32, #tpu.memory_space<vmem>>, vector<1x64xf32>
    %282 = vector.broadcast %281 : vector<1x64xf32> to vector<16x64xf32>
    %283 = arith.addf %280, %282 : vector<16x64xf32>
    %c16 = arith.constant 16 : index
    %c0_110 = arith.constant 0 : index
    %284 = vector.load %arg3[%c16, %c0_110] : memref<26x64xf32, #tpu.memory_space<vmem>>, vector<1x64xf32>
    %c17 = arith.constant 17 : index
    %c0_111 = arith.constant 0 : index
    %285 = vector.load %arg3[%c17, %c0_111] : memref<26x64xf32, #tpu.memory_space<vmem>>, vector<1x64xf32>
    %cst_112 = arith.constant dense<0.000000e+00> : vector<32xf32>
    %286 = vector.multi_reduction <add>, %31, %cst_112 [1] : vector<32x64xf32> to vector<32xf32>
    %287 = vector.shape_cast %286 : vector<32xf32> to vector<32x1xf32>
    %cst_113 = arith.constant 6.400000e+01 : f32
    %288 = vector.broadcast %cst_113 : f32 to vector<32x1xf32>
    %289 = arith.divf %287, %288 : vector<32x1xf32>
    %290 = vector.broadcast %289 : vector<32x1xf32> to vector<32x64xf32>
    %291 = arith.subf %31, %290 : vector<32x64xf32>
    %292 = arith.mulf %291, %291 : vector<32x64xf32>
    %cst_114 = arith.constant dense<0.000000e+00> : vector<32xf32>
    %293 = vector.multi_reduction <add>, %292, %cst_114 [1] : vector<32x64xf32> to vector<32xf32>
    %294 = vector.shape_cast %293 : vector<32xf32> to vector<32x1xf32>
    %cst_115 = arith.constant 6.400000e+01 : f32
    %295 = vector.broadcast %cst_115 : f32 to vector<32x1xf32>
    %296 = arith.divf %294, %295 : vector<32x1xf32>
    %cst_116 = arith.constant 9.99999974E-6 : f32
    %297 = vector.broadcast %cst_116 : f32 to vector<32x1xf32>
    %298 = arith.addf %296, %297 : vector<32x1xf32>
    %299 = math.rsqrt %298 : vector<32x1xf32>
    %300 = vector.broadcast %299 : vector<32x1xf32> to vector<32x64xf32>
    %301 = arith.mulf %291, %300 : vector<32x64xf32>
    %302 = vector.broadcast %284 : vector<1x64xf32> to vector<32x64xf32>
    %303 = arith.mulf %301, %302 : vector<32x64xf32>
    %304 = vector.broadcast %285 : vector<1x64xf32> to vector<32x64xf32>
    %305 = arith.addf %303, %304 : vector<32x64xf32>
    %c18 = arith.constant 18 : index
    %c0_117 = arith.constant 0 : index
    %306 = vector.load %arg3[%c18, %c0_117] : memref<26x64xf32, #tpu.memory_space<vmem>>, vector<1x64xf32>
    %c19 = arith.constant 19 : index
    %c0_118 = arith.constant 0 : index
    %307 = vector.load %arg3[%c19, %c0_118] : memref<26x64xf32, #tpu.memory_space<vmem>>, vector<1x64xf32>
    %cst_119 = arith.constant dense<0.000000e+00> : vector<16xf32>
    %308 = vector.multi_reduction <add>, %264, %cst_119 [1] : vector<16x64xf32> to vector<16xf32>
    %309 = vector.shape_cast %308 : vector<16xf32> to vector<16x1xf32>
    %cst_120 = arith.constant 6.400000e+01 : f32
    %310 = vector.broadcast %cst_120 : f32 to vector<16x1xf32>
    %311 = arith.divf %309, %310 : vector<16x1xf32>
    %312 = vector.broadcast %311 : vector<16x1xf32> to vector<16x64xf32>
    %313 = arith.subf %264, %312 : vector<16x64xf32>
    %314 = arith.mulf %313, %313 : vector<16x64xf32>
    %cst_121 = arith.constant dense<0.000000e+00> : vector<16xf32>
    %315 = vector.multi_reduction <add>, %314, %cst_121 [1] : vector<16x64xf32> to vector<16xf32>
    %316 = vector.shape_cast %315 : vector<16xf32> to vector<16x1xf32>
    %cst_122 = arith.constant 6.400000e+01 : f32
    %317 = vector.broadcast %cst_122 : f32 to vector<16x1xf32>
    %318 = arith.divf %316, %317 : vector<16x1xf32>
    %cst_123 = arith.constant 9.99999974E-6 : f32
    %319 = vector.broadcast %cst_123 : f32 to vector<16x1xf32>
    %320 = arith.addf %318, %319 : vector<16x1xf32>
    %321 = math.rsqrt %320 : vector<16x1xf32>
    %322 = vector.broadcast %321 : vector<16x1xf32> to vector<16x64xf32>
    %323 = arith.mulf %313, %322 : vector<16x64xf32>
    %324 = vector.broadcast %306 : vector<1x64xf32> to vector<16x64xf32>
    %325 = arith.mulf %323, %324 : vector<16x64xf32>
    %326 = vector.broadcast %307 : vector<1x64xf32> to vector<16x64xf32>
    %327 = arith.addf %325, %326 : vector<16x64xf32>
    %cst_124 = arith.constant 1.000000e+00 : f32
    %328 = vector.broadcast %cst_124 : f32 to vector<16x64xf32>
    %329 = arith.addf %328, %275 : vector<16x64xf32>
    %330 = arith.mulf %327, %329 : vector<16x64xf32>
    %331 = arith.addf %330, %271 : vector<16x64xf32>
    %c4 = arith.constant 4 : index
    %c0_125 = arith.constant 0 : index
    %c0_126 = arith.constant 0 : index
    %332 = vector.load %arg6[%c4, %c0_125, %c0_126] : memref<6x64x64xf32, #tpu.memory_space<vmem>>, vector<1x64x64xf32>
    %333 = vector.shape_cast %332 : vector<1x64x64xf32> to vector<64x64xf32>
    %cst_127 = arith.constant dense<0.000000e+00> : vector<16x64xf32>
    %334 = tpu.matmul %331, %333, %cst_127 {dimension_numbers = #tpu.dot_dimension_numbers<[1], [0], [0], [1], [0, 0, 1, 1], [], []>} : vector<16x64xf32>, vector<64x64xf32>, vector<16x64xf32> -> vector<16x64xf32>
    %335 = vector.shape_cast %305 : vector<32x64xf32> to vector<2x16x64xf32>
    %336 = vector.shape_cast %331 : vector<16x64xf32> to vector<2x8x64xf32>
    %337 = tpu.concatenate %335, %336 in 1 : vector<2x16x64xf32>, vector<2x8x64xf32> -> vector<2x24x64xf32>
    %338 = vector.shape_cast %337 : vector<2x24x64xf32> to vector<48x64xf32>
    %c1_128 = arith.constant 1 : index
    %c0_129 = arith.constant 0 : index
    %c0_130 = arith.constant 0 : index
    %339 = vector.load %arg7[%c1_128, %c0_129, %c0_130] : memref<2x64x128xf32, #tpu.memory_space<vmem>>, vector<1x64x128xf32>
    %340 = vector.shape_cast %339 : vector<1x64x128xf32> to vector<64x128xf32>
    %cst_131 = arith.constant dense<0.000000e+00> : vector<48x128xf32>
    %341 = tpu.matmul %338, %340, %cst_131 {dimension_numbers = #tpu.dot_dimension_numbers<[1], [0], [0], [1], [0, 0, 1, 1], [], []>} : vector<48x64xf32>, vector<64x128xf32>, vector<48x128xf32> -> vector<48x128xf32>
    %342 = vector.shape_cast %334 : vector<16x64xf32> to vector<2x8x64xf32>
    %343 = vector.shape_cast %341 : vector<48x128xf32> to vector<2x24x128xf32>
    %344 = vector.extract_strided_slice %342 {offsets = [0, 0, 0], sizes = [2, 8, 16], strides = [1, 1, 1]} : vector<2x8x64xf32> to vector<2x8x16xf32>
    %345 = vector.extract_strided_slice %343 {offsets = [0, 0, 0], sizes = [2, 24, 16], strides = [1, 1, 1]} : vector<2x24x128xf32> to vector<2x24x16xf32>
    %346 = vector.extract_strided_slice %343 {offsets = [0, 0, 64], sizes = [2, 24, 16], strides = [1, 1, 1]} : vector<2x24x128xf32> to vector<2x24x16xf32>
    "tpu.trace_start"() <{level = 10 : i32, message = "bqd,bkd->bqk"}> : () -> ()
    %cst_132 = arith.constant dense<0.000000e+00> : vector<2x8x24xf32>
    %347 = tpu.matmul %344, %345, %cst_132 {dimension_numbers = #tpu.dot_dimension_numbers<[2], [2], [1], [1], [0, 0, 0, 1, 1, 1], [0], [0]>} : vector<2x8x16xf32>, vector<2x24x16xf32>, vector<2x8x24xf32> -> vector<2x8x24xf32>
    "tpu.trace_stop"() : () -> ()
    %cst_133 = arith.constant dense<0xFF800000> : vector<2x8xf32>
    %348 = vector.multi_reduction <maximumf>, %347, %cst_133 [2] : vector<2x8x24xf32> to vector<2x8xf32>
    %349 = vector.shape_cast %348 : vector<2x8xf32> to vector<2x8x1xf32>
    %350 = vector.broadcast %349 : vector<2x8x1xf32> to vector<2x8x24xf32>
    %351 = arith.subf %347, %350 : vector<2x8x24xf32>
    %352 = math.exp %351 : vector<2x8x24xf32>
    %cst_134 = arith.constant dense<0.000000e+00> : vector<2x8xf32>
    %353 = vector.multi_reduction <add>, %352, %cst_134 [2] : vector<2x8x24xf32> to vector<2x8xf32>
    %354 = vector.shape_cast %353 : vector<2x8xf32> to vector<2x8x1xf32>
    %355 = vector.broadcast %354 : vector<2x8x1xf32> to vector<2x8x24xf32>
    %356 = arith.divf %352, %355 : vector<2x8x24xf32>
    "tpu.trace_start"() <{level = 10 : i32, message = "bqk,bkd->bqd"}> : () -> ()
    %cst_135 = arith.constant dense<0.000000e+00> : vector<2x8x16xf32>
    %357 = tpu.matmul %356, %346, %cst_135 {dimension_numbers = #tpu.dot_dimension_numbers<[2], [1], [1], [2], [0, 0, 0, 1, 1, 2], [0], [0]>} : vector<2x8x24xf32>, vector<2x24x16xf32>, vector<2x8x16xf32> -> vector<2x8x16xf32>
    "tpu.trace_stop"() : () -> ()
    %358 = vector.extract_strided_slice %342 {offsets = [0, 0, 16], sizes = [2, 8, 16], strides = [1, 1, 1]} : vector<2x8x64xf32> to vector<2x8x16xf32>
    %359 = vector.extract_strided_slice %343 {offsets = [0, 0, 16], sizes = [2, 24, 16], strides = [1, 1, 1]} : vector<2x24x128xf32> to vector<2x24x16xf32>
    %360 = vector.extract_strided_slice %343 {offsets = [0, 0, 80], sizes = [2, 24, 16], strides = [1, 1, 1]} : vector<2x24x128xf32> to vector<2x24x16xf32>
    "tpu.trace_start"() <{level = 10 : i32, message = "bqd,bkd->bqk"}> : () -> ()
    %cst_136 = arith.constant dense<0.000000e+00> : vector<2x8x24xf32>
    %361 = tpu.matmul %358, %359, %cst_136 {dimension_numbers = #tpu.dot_dimension_numbers<[2], [2], [1], [1], [0, 0, 0, 1, 1, 1], [0], [0]>} : vector<2x8x16xf32>, vector<2x24x16xf32>, vector<2x8x24xf32> -> vector<2x8x24xf32>
    "tpu.trace_stop"() : () -> ()
    %cst_137 = arith.constant dense<0xFF800000> : vector<2x8xf32>
    %362 = vector.multi_reduction <maximumf>, %361, %cst_137 [2] : vector<2x8x24xf32> to vector<2x8xf32>
    %363 = vector.shape_cast %362 : vector<2x8xf32> to vector<2x8x1xf32>
    %364 = vector.broadcast %363 : vector<2x8x1xf32> to vector<2x8x24xf32>
    %365 = arith.subf %361, %364 : vector<2x8x24xf32>
    %366 = math.exp %365 : vector<2x8x24xf32>
    %cst_138 = arith.constant dense<0.000000e+00> : vector<2x8xf32>
    %367 = vector.multi_reduction <add>, %366, %cst_138 [2] : vector<2x8x24xf32> to vector<2x8xf32>
    %368 = vector.shape_cast %367 : vector<2x8xf32> to vector<2x8x1xf32>
    %369 = vector.broadcast %368 : vector<2x8x1xf32> to vector<2x8x24xf32>
    %370 = arith.divf %366, %369 : vector<2x8x24xf32>
    "tpu.trace_start"() <{level = 10 : i32, message = "bqk,bkd->bqd"}> : () -> ()
    %cst_139 = arith.constant dense<0.000000e+00> : vector<2x8x16xf32>
    %371 = tpu.matmul %370, %360, %cst_139 {dimension_numbers = #tpu.dot_dimension_numbers<[2], [1], [1], [2], [0, 0, 0, 1, 1, 2], [0], [0]>} : vector<2x8x24xf32>, vector<2x24x16xf32>, vector<2x8x16xf32> -> vector<2x8x16xf32>
    "tpu.trace_stop"() : () -> ()
    %372 = vector.extract_strided_slice %342 {offsets = [0, 0, 32], sizes = [2, 8, 16], strides = [1, 1, 1]} : vector<2x8x64xf32> to vector<2x8x16xf32>
    %373 = vector.extract_strided_slice %343 {offsets = [0, 0, 32], sizes = [2, 24, 16], strides = [1, 1, 1]} : vector<2x24x128xf32> to vector<2x24x16xf32>
    %374 = vector.extract_strided_slice %343 {offsets = [0, 0, 96], sizes = [2, 24, 16], strides = [1, 1, 1]} : vector<2x24x128xf32> to vector<2x24x16xf32>
    "tpu.trace_start"() <{level = 10 : i32, message = "bqd,bkd->bqk"}> : () -> ()
    %cst_140 = arith.constant dense<0.000000e+00> : vector<2x8x24xf32>
    %375 = tpu.matmul %372, %373, %cst_140 {dimension_numbers = #tpu.dot_dimension_numbers<[2], [2], [1], [1], [0, 0, 0, 1, 1, 1], [0], [0]>} : vector<2x8x16xf32>, vector<2x24x16xf32>, vector<2x8x24xf32> -> vector<2x8x24xf32>
    "tpu.trace_stop"() : () -> ()
    %cst_141 = arith.constant dense<0xFF800000> : vector<2x8xf32>
    %376 = vector.multi_reduction <maximumf>, %375, %cst_141 [2] : vector<2x8x24xf32> to vector<2x8xf32>
    %377 = vector.shape_cast %376 : vector<2x8xf32> to vector<2x8x1xf32>
    %378 = vector.broadcast %377 : vector<2x8x1xf32> to vector<2x8x24xf32>
    %379 = arith.subf %375, %378 : vector<2x8x24xf32>
    %380 = math.exp %379 : vector<2x8x24xf32>
    %cst_142 = arith.constant dense<0.000000e+00> : vector<2x8xf32>
    %381 = vector.multi_reduction <add>, %380, %cst_142 [2] : vector<2x8x24xf32> to vector<2x8xf32>
    %382 = vector.shape_cast %381 : vector<2x8xf32> to vector<2x8x1xf32>
    %383 = vector.broadcast %382 : vector<2x8x1xf32> to vector<2x8x24xf32>
    %384 = arith.divf %380, %383 : vector<2x8x24xf32>
    "tpu.trace_start"() <{level = 10 : i32, message = "bqk,bkd->bqd"}> : () -> ()
    %cst_143 = arith.constant dense<0.000000e+00> : vector<2x8x16xf32>
    %385 = tpu.matmul %384, %374, %cst_143 {dimension_numbers = #tpu.dot_dimension_numbers<[2], [1], [1], [2], [0, 0, 0, 1, 1, 2], [0], [0]>} : vector<2x8x24xf32>, vector<2x24x16xf32>, vector<2x8x16xf32> -> vector<2x8x16xf32>
    "tpu.trace_stop"() : () -> ()
    %386 = vector.extract_strided_slice %342 {offsets = [0, 0, 48], sizes = [2, 8, 16], strides = [1, 1, 1]} : vector<2x8x64xf32> to vector<2x8x16xf32>
    %387 = vector.extract_strided_slice %343 {offsets = [0, 0, 48], sizes = [2, 24, 16], strides = [1, 1, 1]} : vector<2x24x128xf32> to vector<2x24x16xf32>
    %388 = vector.extract_strided_slice %343 {offsets = [0, 0, 112], sizes = [2, 24, 16], strides = [1, 1, 1]} : vector<2x24x128xf32> to vector<2x24x16xf32>
    "tpu.trace_start"() <{level = 10 : i32, message = "bqd,bkd->bqk"}> : () -> ()
    %cst_144 = arith.constant dense<0.000000e+00> : vector<2x8x24xf32>
    %389 = tpu.matmul %386, %387, %cst_144 {dimension_numbers = #tpu.dot_dimension_numbers<[2], [2], [1], [1], [0, 0, 0, 1, 1, 1], [0], [0]>} : vector<2x8x16xf32>, vector<2x24x16xf32>, vector<2x8x24xf32> -> vector<2x8x24xf32>
    "tpu.trace_stop"() : () -> ()
    %cst_145 = arith.constant dense<0xFF800000> : vector<2x8xf32>
    %390 = vector.multi_reduction <maximumf>, %389, %cst_145 [2] : vector<2x8x24xf32> to vector<2x8xf32>
    %391 = vector.shape_cast %390 : vector<2x8xf32> to vector<2x8x1xf32>
    %392 = vector.broadcast %391 : vector<2x8x1xf32> to vector<2x8x24xf32>
    %393 = arith.subf %389, %392 : vector<2x8x24xf32>
    %394 = math.exp %393 : vector<2x8x24xf32>
    %cst_146 = arith.constant dense<0.000000e+00> : vector<2x8xf32>
    %395 = vector.multi_reduction <add>, %394, %cst_146 [2] : vector<2x8x24xf32> to vector<2x8xf32>
    %396 = vector.shape_cast %395 : vector<2x8xf32> to vector<2x8x1xf32>
    %397 = vector.broadcast %396 : vector<2x8x1xf32> to vector<2x8x24xf32>
    %398 = arith.divf %394, %397 : vector<2x8x24xf32>
    "tpu.trace_start"() <{level = 10 : i32, message = "bqk,bkd->bqd"}> : () -> ()
    %cst_147 = arith.constant dense<0.000000e+00> : vector<2x8x16xf32>
    %399 = tpu.matmul %398, %388, %cst_147 {dimension_numbers = #tpu.dot_dimension_numbers<[2], [1], [1], [2], [0, 0, 0, 1, 1, 2], [0], [0]>} : vector<2x8x24xf32>, vector<2x24x16xf32>, vector<2x8x16xf32> -> vector<2x8x16xf32>
    "tpu.trace_stop"() : () -> ()
    %400 = tpu.concatenate %357, %371, %385, %399 in 2 : vector<2x8x16xf32>, vector<2x8x16xf32>, vector<2x8x16xf32>, vector<2x8x16xf32> -> vector<2x8x64xf32>
    %401 = vector.shape_cast %400 : vector<2x8x64xf32> to vector<16x64xf32>
    %c5 = arith.constant 5 : index
    %c0_148 = arith.constant 0 : index
    %c0_149 = arith.constant 0 : index
    %402 = vector.load %arg6[%c5, %c0_148, %c0_149] : memref<6x64x64xf32, #tpu.memory_space<vmem>>, vector<1x64x64xf32>
    %403 = vector.shape_cast %402 : vector<1x64x64xf32> to vector<64x64xf32>
    %cst_150 = arith.constant dense<0.000000e+00> : vector<16x64xf32>
    %404 = tpu.matmul %401, %403, %cst_150 {dimension_numbers = #tpu.dot_dimension_numbers<[1], [0], [0], [1], [0, 0, 1, 1], [], []>} : vector<16x64xf32>, vector<64x64xf32>, vector<16x64xf32> -> vector<16x64xf32>
    %405 = arith.addf %264, %404 : vector<16x64xf32>
    %c20 = arith.constant 20 : index
    %c0_151 = arith.constant 0 : index
    %406 = vector.load %arg3[%c20, %c0_151] : memref<26x64xf32, #tpu.memory_space<vmem>>, vector<1x64xf32>
    %c21 = arith.constant 21 : index
    %c0_152 = arith.constant 0 : index
    %407 = vector.load %arg3[%c21, %c0_152] : memref<26x64xf32, #tpu.memory_space<vmem>>, vector<1x64xf32>
    %cst_153 = arith.constant dense<0.000000e+00> : vector<16xf32>
    %408 = vector.multi_reduction <add>, %405, %cst_153 [1] : vector<16x64xf32> to vector<16xf32>
    %409 = vector.shape_cast %408 : vector<16xf32> to vector<16x1xf32>
    %cst_154 = arith.constant 6.400000e+01 : f32
    %410 = vector.broadcast %cst_154 : f32 to vector<16x1xf32>
    %411 = arith.divf %409, %410 : vector<16x1xf32>
    %412 = vector.broadcast %411 : vector<16x1xf32> to vector<16x64xf32>
    %413 = arith.subf %405, %412 : vector<16x64xf32>
    %414 = arith.mulf %413, %413 : vector<16x64xf32>
    %cst_155 = arith.constant dense<0.000000e+00> : vector<16xf32>
    %415 = vector.multi_reduction <add>, %414, %cst_155 [1] : vector<16x64xf32> to vector<16xf32>
    %416 = vector.shape_cast %415 : vector<16xf32> to vector<16x1xf32>
    %cst_156 = arith.constant 6.400000e+01 : f32
    %417 = vector.broadcast %cst_156 : f32 to vector<16x1xf32>
    %418 = arith.divf %416, %417 : vector<16x1xf32>
    %cst_157 = arith.constant 9.99999974E-6 : f32
    %419 = vector.broadcast %cst_157 : f32 to vector<16x1xf32>
    %420 = arith.addf %418, %419 : vector<16x1xf32>
    %421 = math.rsqrt %420 : vector<16x1xf32>
    %422 = vector.broadcast %421 : vector<16x1xf32> to vector<16x64xf32>
    %423 = arith.mulf %413, %422 : vector<16x64xf32>
    %424 = vector.broadcast %406 : vector<1x64xf32> to vector<16x64xf32>
    %425 = arith.mulf %423, %424 : vector<16x64xf32>
    %426 = vector.broadcast %407 : vector<1x64xf32> to vector<16x64xf32>
    %427 = arith.addf %425, %426 : vector<16x64xf32>
    %cst_158 = arith.constant 1.000000e+00 : f32
    %428 = vector.broadcast %cst_158 : f32 to vector<16x64xf32>
    %429 = arith.addf %428, %283 : vector<16x64xf32>
    %430 = arith.mulf %427, %429 : vector<16x64xf32>
    %431 = arith.addf %430, %279 : vector<16x64xf32>
    %c1_159 = arith.constant 1 : index
    %c0_160 = arith.constant 0 : index
    %c0_161 = arith.constant 0 : index
    %432 = vector.load %arg9[%c1_159, %c0_160, %c0_161] : memref<2x64x256xf32, #tpu.memory_space<vmem>>, vector<1x64x256xf32>
    %433 = vector.shape_cast %432 : vector<1x64x256xf32> to vector<64x256xf32>
    %cst_162 = arith.constant dense<0.000000e+00> : vector<16x256xf32>
    %434 = tpu.matmul %431, %433, %cst_162 {dimension_numbers = #tpu.dot_dimension_numbers<[1], [0], [0], [1], [0, 0, 1, 1], [], []>} : vector<16x64xf32>, vector<64x256xf32>, vector<16x256xf32> -> vector<16x256xf32>
    %cst_163 = arith.constant 5.000000e-01 : f32
    %435 = vector.broadcast %cst_163 : f32 to vector<16x256xf32>
    %436 = arith.mulf %435, %434 : vector<16x256xf32>
    %cst_164 = arith.constant 0.707106769 : f32
    %437 = vector.broadcast %cst_164 : f32 to vector<16x256xf32>
    %438 = arith.mulf %434, %437 : vector<16x256xf32>
    %cst_165 = arith.constant 0.000000e+00 : f32
    %439 = vector.broadcast %cst_165 : f32 to vector<16x256xf32>
    %440 = arith.cmpf oge, %438, %439 : vector<16x256xf32>
    %cst_166 = arith.constant 1.000000e+00 : f32
    %cst_167 = arith.constant -1.000000e+00 : f32
    %441 = vector.broadcast %cst_166 : f32 to vector<16x256xf32>
    %442 = vector.broadcast %cst_167 : f32 to vector<16x256xf32>
    %443 = arith.select %440, %441, %442 : vector<16x256xi1>, vector<16x256xf32>
    %444 = math.absf %438 : vector<16x256xf32>
    %cst_168 = arith.constant 0.327591091 : f32
    %445 = vector.broadcast %cst_168 : f32 to vector<16x256xf32>
    %446 = arith.mulf %445, %444 : vector<16x256xf32>
    %cst_169 = arith.constant 1.000000e+00 : f32
    %447 = vector.broadcast %cst_169 : f32 to vector<16x256xf32>
    %448 = arith.addf %447, %446 : vector<16x256xf32>
    %cst_170 = arith.constant 1.000000e+00 : f32
    %449 = vector.broadcast %cst_170 : f32 to vector<16x256xf32>
    %450 = arith.divf %449, %448 : vector<16x256xf32>
    %cst_171 = arith.constant 1.06140542 : f32
    %451 = vector.broadcast %cst_171 : f32 to vector<16x256xf32>
    %452 = arith.mulf %451, %450 : vector<16x256xf32>
    %cst_172 = arith.constant 1.45315206 : f32
    %453 = vector.broadcast %cst_172 : f32 to vector<16x256xf32>
    %454 = arith.subf %452, %453 : vector<16x256xf32>
    %455 = arith.mulf %454, %450 : vector<16x256xf32>
    %cst_173 = arith.constant 1.42141378 : f32
    %456 = vector.broadcast %cst_173 : f32 to vector<16x256xf32>
    %457 = arith.addf %455, %456 : vector<16x256xf32>
    %458 = arith.mulf %457, %450 : vector<16x256xf32>
    %cst_174 = arith.constant 0.284496725 : f32
    %459 = vector.broadcast %cst_174 : f32 to vector<16x256xf32>
    %460 = arith.subf %458, %459 : vector<16x256xf32>
    %461 = arith.mulf %460, %450 : vector<16x256xf32>
    %cst_175 = arith.constant 0.254829586 : f32
    %462 = vector.broadcast %cst_175 : f32 to vector<16x256xf32>
    %463 = arith.addf %461, %462 : vector<16x256xf32>
    %464 = arith.mulf %463, %450 : vector<16x256xf32>
    %cst_176 = arith.constant 0.000000e+00 : f32
    %465 = vector.broadcast %cst_176 : f32 to vector<16x256xf32>
    %466 = arith.subf %465, %444 : vector<16x256xf32>
    %467 = arith.mulf %466, %444 : vector<16x256xf32>
    %468 = math.exp %467 : vector<16x256xf32>
    %469 = arith.mulf %464, %468 : vector<16x256xf32>
    %cst_177 = arith.constant 1.000000e+00 : f32
    %470 = vector.broadcast %cst_177 : f32 to vector<16x256xf32>
    %471 = arith.subf %470, %469 : vector<16x256xf32>
    %472 = arith.mulf %443, %471 : vector<16x256xf32>
    %cst_178 = arith.constant 1.000000e+00 : f32
    %473 = vector.broadcast %cst_178 : f32 to vector<16x256xf32>
    %474 = arith.addf %473, %472 : vector<16x256xf32>
    %475 = arith.mulf %436, %474 : vector<16x256xf32>
    %c1_179 = arith.constant 1 : index
    %c0_180 = arith.constant 0 : index
    %c0_181 = arith.constant 0 : index
    %476 = vector.load %arg10[%c1_179, %c0_180, %c0_181] : memref<2x256x64xf32, #tpu.memory_space<vmem>>, vector<1x256x64xf32>
    %477 = vector.shape_cast %476 : vector<1x256x64xf32> to vector<256x64xf32>
    %cst_182 = arith.constant dense<0.000000e+00> : vector<16x64xf32>
    %478 = tpu.matmul %475, %477, %cst_182 {dimension_numbers = #tpu.dot_dimension_numbers<[1], [0], [0], [1], [0, 0, 1, 1], [], []>} : vector<16x256xf32>, vector<256x64xf32>, vector<16x64xf32> -> vector<16x64xf32>
    %479 = arith.addf %405, %478 : vector<16x64xf32>
    %c1_183 = arith.constant 1 : index
    %c0_184 = arith.constant 0 : index
    %c0_185 = arith.constant 0 : index
    %480 = vector.load %arg6[%c1_183, %c0_184, %c0_185] : memref<6x64x64xf32, #tpu.memory_space<vmem>>, vector<1x64x64xf32>
    %481 = vector.shape_cast %480 : vector<1x64x64xf32> to vector<64x64xf32>
    %cst_186 = arith.constant dense<0.000000e+00> : vector<16x64xf32>
    %482 = tpu.matmul %479, %481, %cst_186 {dimension_numbers = #tpu.dot_dimension_numbers<[1], [0], [0], [1], [0, 0, 1, 1], [], []>} : vector<16x64xf32>, vector<64x64xf32>, vector<16x64xf32> -> vector<16x64xf32>
    %c3_187 = arith.constant 3 : index
    %c0_188 = arith.constant 0 : index
    %483 = vector.load %arg3[%c3_187, %c0_188] : memref<26x64xf32, #tpu.memory_space<vmem>>, vector<1x64xf32>
    %484 = vector.broadcast %483 : vector<1x64xf32> to vector<16x64xf32>
    %485 = arith.addf %482, %484 : vector<16x64xf32>
    %c4_189 = arith.constant 4 : index
    %c0_190 = arith.constant 0 : index
    %486 = vector.load %arg3[%c4_189, %c0_190] : memref<26x64xf32, #tpu.memory_space<vmem>>, vector<1x64xf32>
    %c5_191 = arith.constant 5 : index
    %c0_192 = arith.constant 0 : index
    %487 = vector.load %arg3[%c5_191, %c0_192] : memref<26x64xf32, #tpu.memory_space<vmem>>, vector<1x64xf32>
    %cst_193 = arith.constant dense<0.000000e+00> : vector<16xf32>
    %488 = vector.multi_reduction <add>, %485, %cst_193 [1] : vector<16x64xf32> to vector<16xf32>
    %489 = vector.shape_cast %488 : vector<16xf32> to vector<16x1xf32>
    %cst_194 = arith.constant 6.400000e+01 : f32
    %490 = vector.broadcast %cst_194 : f32 to vector<16x1xf32>
    %491 = arith.divf %489, %490 : vector<16x1xf32>
    %492 = vector.broadcast %491 : vector<16x1xf32> to vector<16x64xf32>
    %493 = arith.subf %485, %492 : vector<16x64xf32>
    %494 = arith.mulf %493, %493 : vector<16x64xf32>
    %cst_195 = arith.constant dense<0.000000e+00> : vector<16xf32>
    %495 = vector.multi_reduction <add>, %494, %cst_195 [1] : vector<16x64xf32> to vector<16xf32>
    %496 = vector.shape_cast %495 : vector<16xf32> to vector<16x1xf32>
    %cst_196 = arith.constant 6.400000e+01 : f32
    %497 = vector.broadcast %cst_196 : f32 to vector<16x1xf32>
    %498 = arith.divf %496, %497 : vector<16x1xf32>
    %cst_197 = arith.constant 9.99999974E-6 : f32
    %499 = vector.broadcast %cst_197 : f32 to vector<16x1xf32>
    %500 = arith.addf %498, %499 : vector<16x1xf32>
    %501 = math.rsqrt %500 : vector<16x1xf32>
    %502 = vector.broadcast %501 : vector<16x1xf32> to vector<16x64xf32>
    %503 = arith.mulf %493, %502 : vector<16x64xf32>
    %504 = vector.broadcast %486 : vector<1x64xf32> to vector<16x64xf32>
    %505 = arith.mulf %503, %504 : vector<16x64xf32>
    %506 = vector.broadcast %487 : vector<1x64xf32> to vector<16x64xf32>
    %507 = arith.addf %505, %506 : vector<16x64xf32>
    %c0_198 = arith.constant 0 : index
    %c0_199 = arith.constant 0 : index
    %508 = vector.load %arg11[%c0_198, %c0_199] : memref<16x64xf32, #tpu.memory_space<vmem>>, vector<16x64xf32>
    tpu.vector_store %arg11[%c0_198, %c0_199], %507 {strides = array<i32>} : memref<16x64xf32, #tpu.memory_space<vmem>>, vector<16x64xf32>,
    return
  }
}

</mosaic_0001>

<llo_original>
// kernel: time_resampler_forward.1
$region0: #{time_resampler_forward.1}
  #allocation0 [shape = 'u32[]', space=smem, size = 0x4, offset = 0x4, fixed_abs, tag = 'smem constant byte address 0x4 - core index']
  #allocation1 [shape = 'u32[144,128]{1,0:T(1,128)}', space=vmem, size = 0x12000, scoped, tag = 'internal scratch']
  %s0 = inlined_call_operand.vmem [shape: f32[2,32], index: 0, kind: input, shape index: {}]
  %s1 = inlined_call_operand.vmem [shape: f32[32,32], index: 1, kind: input, shape index: {}]
  %s2 = inlined_call_operand.hbm [shape: f32[8,64], index: 2, kind: input, shape index: {}]
  %s3 = inlined_call_operand.hbm [shape: f32[26,64], index: 3, kind: input, shape index: {}]
  %s4 = inlined_call_operand.hbm [shape: f32[32,64], index: 4, kind: input, shape index: {}]
  %s5 = inlined_call_operand.hbm [shape: f32[32,64], index: 5, kind: input, shape index: {}]
  %s6 = inlined_call_operand.vmem [shape: f32[6,64,64], index: 6, kind: input, shape index: {}]
  %s7 = inlined_call_operand.vmem [shape: f32[2,64,128], index: 7, kind: input, shape index: {}]
  %s8 = inlined_call_operand.vmem [shape: f32[2,64,256], index: 8, kind: input, shape index: {}]
  %s9 = inlined_call_operand.hbm [shape: f32[2,64,256], index: 9, kind: input, shape index: {}]
  %s10 = inlined_call_operand.vmem [shape: f32[2,256,64], index: 10, kind: input, shape index: {}]
  %s11 = inlined_call_operand.hbm [shape: f32[16,64], index: 11, kind: output, shape index: {}]
  %s12 = sld [smem:[#allocation0]]
  $region74: #{time_resampler_forward.1} parent=0
    _
  %s14 = ssub.s32 1, %s12
  %s15 = scalar_select 0, %s14, %s12
  $region1: #{time_resampler_forward.1} parent=0
    #allocation2 [shape = 'u8[4096]{0}', space=vmem, size = 0x1000, scoped, tag = 'input window, operand 2, single buffered']
    #allocation3 [shape = 's32[1]{0}', space=sflag, size = 0x4, scoped, tag = 'scoped memory for time_resampler_forward.1']
    #allocation4 [shape = 's32[1]{0}', space=sflag, size = 0x4, scoped, tag = 'scoped memory for time_resampler_forward.1']
    #allocation5 [shape = 'u8[16384]{0}', space=vmem, size = 0x4000, scoped, tag = 'input window, operand 3, single buffered']
    #allocation6 [shape = 's32[1]{0}', space=sflag, size = 0x4, scoped, tag = 'scoped memory for time_resampler_forward.1']
    #allocation7 [shape = 'u8[16384]{0}', space=vmem, size = 0x4000, scoped, tag = 'input window, operand 4, single buffered']
    #allocation8 [shape = 'u8[16384]{0}', space=vmem, size = 0x4000, scoped, tag = 'input window, operand 5, single buffered']
    #allocation9 [shape = 's32[1]{0}', space=sflag, size = 0x4, scoped, tag = 'scoped memory for time_resampler_forward.1']
    #allocation10 [shape = 'u8[131072]{0}', space=vmem, size = 0x20000, scoped, tag = 'input window, operand 9, single buffered']
    #allocation11 [shape = 'u8[8192]{0}', space=vmem, size = 0x2000, scoped, tag = 'output window, operand 0, single buffered']
    %16 = vsyncpa [#allocation3], 0
    %17 = vsyncpa [#allocation6], 0
    %18 = vsyncpa [#allocation9], 0
    %19 = vsyncpa [#allocation4], 0
    // Predicated region
    $region2: #{time_resampler_forward.1} parent=1 // pred_check
      _
    $region3: #{time_resampler_forward.1} parent=1 // pred_check_branch
      %21 = sbr.rel (0) target = $region5
    $region4: #{time_resampler_forward.1} parent=1 // pred_region
      _
    $region5: #{time_resampler_forward.1} parent=1 // pred_fallthru
      _
    // Predicated region
    $region6: #{time_resampler_forward.1} parent=1 // pred_check
      _
    $region7: #{time_resampler_forward.1} parent=1 // pred_check_branch
      %23 = sbr.rel (0) target = $region9
    $region8: #{time_resampler_forward.1} parent=1 // pred_region
      _
    $region9: #{time_resampler_forward.1} parent=1 // pred_fallthru
      _
    // Predicated region
    $region10: #{time_resampler_forward.1} parent=1 // pred_check
      _
    $region11: #{time_resampler_forward.1} parent=1 // pred_check_branch
      %25 = sbr.rel (0) target = $region13
    $region12: #{time_resampler_forward.1} parent=1 // pred_region
      %s27 = ssub.s32 128, 128
      %28 = vsyncadd [#allocation3], %s27
      %s30 = sshll.u32 [#allocation2], 4
      %s31 = int_to_ptr.vmem [resolvable:$true] %s30
      %33 = dma.hbm_to_vmem [thread:$0]  %s2, 128, %s31, [#allocation3]
    $region13: #{time_resampler_forward.1} parent=1 // pred_fallthru
      _
    // Predicated region
    $region14: #{time_resampler_forward.1} parent=1 // pred_check
      _
    $region15: #{time_resampler_forward.1} parent=1 // pred_check_branch
      %35 = sbr.rel (0) target = $region17
    $region16: #{time_resampler_forward.1} parent=1 // pred_region
      %s37 = ssub.s32 512, 512
      %38 = vsyncadd [#allocation6], %s37
      %s39 = sshll.u32 [#allocation5], 4
      %s40 = int_to_ptr.vmem [resolvable:$true] %s39
      %45 = dma.hbm_to_vmem [thread:$0]  %s3, 512, %s40, [#allocation6], 128, 128, 8
    $region17: #{time_resampler_forward.1} parent=1 // pred_fallthru
      _
    // Predicated region
    $region18: #{time_resampler_forward.1} parent=1 // pred_check
      _
    $region19: #{time_resampler_forward.1} parent=1 // pred_check_branch
      %47 = sbr.rel (0) target = $region21
    $region20: #{time_resampler_forward.1} parent=1 // pred_region
      %s49 = ssub.s32 512, 512
      %50 = vsyncadd [#allocation6], %s49
      %s51 = sshll.u32 [#allocation7], 4
      %s52 = int_to_ptr.vmem [resolvable:$true] %s51
      %57 = dma.hbm_to_vmem [thread:$0]  %s4, 512, %s52, [#allocation6], 128, 128, 8
    $region21: #{time_resampler_forward.1} parent=1 // pred_fallthru
      _
    // Predicated region
    $region22: #{time_resampler_forward.1} parent=1 // pred_check
      _
    $region23: #{time_resampler_forward.1} parent=1 // pred_check_branch
      %59 = sbr.rel (0) target = $region25
    $region24: #{time_resampler_forward.1} parent=1 // pred_region
      %s61 = ssub.s32 512, 512
      %62 = vsyncadd [#allocation9], %s61
      %s63 = sshll.u32 [#allocation8], 4
      %s64 = int_to_ptr.vmem [resolvable:$true] %s63
      %69 = dma.hbm_to_vmem [thread:$0]  %s5, 512, %s64, [#allocation9], 128, 128, 8
    $region25: #{time_resampler_forward.1} parent=1 // pred_fallthru
      _
    // Predicated region
    $region26: #{time_resampler_forward.1} parent=1 // pred_check
      _
    $region27: #{time_resampler_forward.1} parent=1 // pred_check_branch
      %71 = sbr.rel (0) target = $region29
    $region28: #{time_resampler_forward.1} parent=1 // pred_region
      _
    $region29: #{time_resampler_forward.1} parent=1 // pred_fallthru
      _
    // Predicated region
    $region30: #{time_resampler_forward.1} parent=1 // pred_check
      _
    $region31: #{time_resampler_forward.1} parent=1 // pred_check_branch
      %73 = sbr.rel (0) target = $region33
    $region32: #{time_resampler_forward.1} parent=1 // pred_region
      _
    $region33: #{time_resampler_forward.1} parent=1 // pred_fallthru
      _
    // Predicated region
    $region34: #{time_resampler_forward.1} parent=1 // pred_check
      _
    $region35: #{time_resampler_forward.1} parent=1 // pred_check_branch
      %75 = sbr.rel (0) target = $region37
    $region36: #{time_resampler_forward.1} parent=1 // pred_region
      _
    $region37: #{time_resampler_forward.1} parent=1 // pred_fallthru
      _
    // Predicated region
    $region38: #{time_resampler_forward.1} parent=1 // pred_check
      _
    $region39: #{time_resampler_forward.1} parent=1 // pred_check_branch
      %77 = sbr.rel (0) target = $region41
    $region40: #{time_resampler_forward.1} parent=1 // pred_region
      %s79 = ssub.s32 4096, 4096
      %80 = vsyncadd [#allocation9], %s79
      %s81 = sshll.u32 [#allocation10], 4
      %s82 = int_to_ptr.vmem [resolvable:$true] %s81
      %87 = dma.hbm_to_vmem [thread:$0]  %s9, 4096, %s82, [#allocation9], 256, 256, 16
    $region41: #{time_resampler_forward.1} parent=1 // pred_fallthru
      _
    // Predicated region
    $region42: #{time_resampler_forward.1} parent=1 // pred_check
      _
    $region43: #{time_resampler_forward.1} parent=1 // pred_check_branch
      %89 = sbr.rel (0) target = $region45
    $region44: #{time_resampler_forward.1} parent=1 // pred_region
      _
    $region45: #{time_resampler_forward.1} parent=1 // pred_fallthru
      _
    // Predicated region
    $region46: #{time_resampler_forward.1} parent=1 // pred_check
      _
    $region47: #{time_resampler_forward.1} parent=1 // pred_check_branch
      %91 = sbr.rel (0) target = $region49
    $region48: #{time_resampler_forward.1} parent=1 // pred_region
      %92 = dma.done [#allocation3], 128
    $region49: #{time_resampler_forward.1} parent=1 // pred_fallthru
      _
    // Predicated region
    $region50: #{time_resampler_forward.1} parent=1 // pred_check
      _
    $region51: #{time_resampler_forward.1} parent=1 // pred_check_branch
      %94 = sbr.rel (0) target = $region53
    $region52: #{time_resampler_forward.1} parent=1 // pred_region
      %95 = dma.done [#allocation6], 512
    $region53: #{time_resampler_forward.1} parent=1 // pred_fallthru
      _
    // Predicated region
    $region54: #{time_resampler_forward.1} parent=1 // pred_check
      _
    $region55: #{time_resampler_forward.1} parent=1 // pred_check_branch
      %97 = sbr.rel (0) target = $region57
    $region56: #{time_resampler_forward.1} parent=1 // pred_region
      %98 = dma.done [#allocation6], 512
    $region57: #{time_resampler_forward.1} parent=1 // pred_fallthru
      _
    // Predicated region
    $region58: #{time_resampler_forward.1} parent=1 // pred_check
      _
    $region59: #{time_resampler_forward.1} parent=1 // pred_check_branch
      %100 = sbr.rel (0) target = $region61
    $region60: #{time_resampler_forward.1} parent=1 // pred_region
      %101 = dma.done [#allocation9], 512
    $region61: #{time_resampler_forward.1} parent=1 // pred_fallthru
      _
    // Predicated region
    $region62: #{time_resampler_forward.1} parent=1 // pred_check
      _
    $region63: #{time_resampler_forward.1} parent=1 // pred_check_branch
      %103 = sbr.rel (0) target = $region65
    $region64: #{time_resampler_forward.1} parent=1 // pred_region
      %104 = dma.done [#allocation9], 4096
    $region65: #{time_resampler_forward.1} parent=1 // pred_fallthru
      _
    %v105 = vld [vmem:[%s0] sm:$0x3]
    %v106 = vld [vmem:[#allocation8] sm:$0xff]
    %v107 = vld [vmem:[#allocation8 + $0x8] sm:$0xff]
    %v108 = vld [vmem:[#allocation8 + $0x10] sm:$0xff]
    %v109 = vld [vmem:[#allocation8 + $0x18] sm:$0xff]
    %v110 = vld [vmem:[#allocation5 + $0x1] sm:$0x1]
    %v111 = vlaneseq
    %v112 = vshrl.u32 %v111, 7
    %v113 = vsub.s32 0, %v112
    %v114 = vrot.slane %v110, %v113
    %vm115 = vcmask 261120
    %v117 = vsel %vm115, %v105, 0
    %119 = vmatprep.subr.mxu0 0.0
    %120 = vmatpush1.msra.mxu0 %v106
    %121 = vmatprep.subr.mxu0 0.0
    %122 = vmatpush1.msra.mxu0 %v107
    %123 = vmatprep.subr.mxu0 0.0
    %124 = vmatpush1.msra.mxu0 %v108
    %125 = vmatprep.subr.mxu0 0.0
    %126 = vmatpush1.msra.mxu0 %v109
    %127 = vmatprep.subr.mxu0 0.0
    %128 = vmatpush1.msra.mxu0 0.0
    %129 = vmatprep.subr.mxu0 0.0
    %130 = vmatpush1.msra.mxu0 0.0
    %131 = vmatprep.subr.mxu0 0.0
    %132 = vmatpush1.msra.mxu0 0.0
    %133 = vmatprep.subr.mxu0 0.0
    %134 = vmatpush1.msra.mxu0 0.0
    %135 = vmatprep.subr.mxu0 0.0
    %136 = vmatpush1.msra.mxu0 0.0
    %137 = vmatprep.subr.mxu0 0.0
    %138 = vmatpush1.msra.mxu0 0.0
    %139 = vmatprep.subr.mxu0 0.0
    %140 = vmatpush1.msra.mxu0 0.0
    %141 = vmatprep.subr.mxu0 0.0
    %142 = vmatpush1.msra.mxu0 0.0
    %143 = vmatprep.subr.mxu0 0.0
    %144 = vmatpush1.msra.mxu0 0.0
    %145 = vmatprep.subr.mxu0 0.0
    %146 = vmatpush1.msra.mxu0 0.0
    %147 = vmatprep.subr.mxu0 0.0
    %148 = vmatpush1.msra.mxu0 0.0
    %149 = vmatprep.subr.mxu0 0.0
    %150 = vmatpush1.msra.mxu0 0.0
    %151 = vmatprep.subr.mxu0 0.0
    %152 = vmatpush1.msra.mxu0 0.0
    %153 = vmatprep.subr.mxu0 0.0
    %154 = vmatpush1.msra.mxu0 0.0
    %155 = vmatprep.subr.mxu0 0.0
    %156 = vmatpush1.msra.mxu0 0.0
    %157 = vmatprep.subr.mxu0 0.0
    %158 = vmatpush1.msra.mxu0 0.0
    %159 = vmatprep.subr.mxu0 0.0
    %160 = vmatpush1.msra.mxu0 0.0
    %161 = vmatprep.subr.mxu0 0.0
    %162 = vmatpush1.msra.mxu0 0.0
    %163 = vmatprep.subr.mxu0 0.0
    %164 = vmatpush1.msra.mxu0 0.0
    %165 = vmatprep.subr.mxu0 0.0
    %166 = vmatpush1.msra.mxu0 0.0
    %167 = vmatprep.subr.mxu0 0.0
    %168 = vmatpush1.msra.mxu0 0.0
    %169 = vmatprep.subr.mxu0 0.0
    %170 = vmatpush1.msra.mxu0 0.0
    %171 = vmatprep.subr.mxu0 0.0
    %172 = vmatpush1.msra.mxu0 0.0
    %173 = vmatprep.subr.mxu0 0.0
    %174 = vmatpush1.msra.mxu0 0.0
    %175 = vmatprep.subr.mxu0 0.0
    %176 = vmatpush1.msra.mxu0 0.0
    %177 = vmatprep.subr.mxu0 0.0
    %178 = vmatpush1.msra.mxu0 0.0
    %179 = vmatprep.subr.mxu0 0.0
    %180 = vmatpush1.msra.mxu0 0.0
    %181 = vmatprep.subr.mxu0 0.0
    %182 = vmatpush1.msra.mxu0 0.0
    %183 = vmatprep.mubr.f32.mxu0 0.0
    %184 = vmatmul.mubr.f32.gmra.mrb[0].mxu0 %v117
    %v185 = vpop.f32.mrb[0].mxu0
    %v186 = vadd.f32 %v114, %v185
    %v187 = vpop.f32.mrb[0].mxu0
    %188 = vdwg.mxu0
    %v189 = vxor.u32 %v186, 2147483648
    %v190 = vmul.f32 %v189, 1.442695
    %v191 = vpow.pop %v190
    %v192 = vadd.f32 %v191, 1.0
    %v193 = vrcp.pop %v192
    %v194 = vmul.f32 1.0, %v193
    %v195 = vmul.f32 %v186, %v194
    %v196 = vld [vmem:[%s6] sm:$0xff]
    %v197 = vld [vmem:[%s6 + $0x8] sm:$0xff]
    %v198 = vld [vmem:[%s6 + $0x10] sm:$0xff]
    %v199 = vld [vmem:[%s6 + $0x18] sm:$0xff]
    %v200 = vld [vmem:[%s6 + $0x20] sm:$0xff]
    %v201 = vld [vmem:[%s6 + $0x28] sm:$0xff]
    %v202 = vld [vmem:[%s6 + $0x30] sm:$0xff]
    %v203 = vld [vmem:[%s6 + $0x38] sm:$0xff]
    %v204 = vld [vmem:[#allocation5 + $0x2] sm:$0x1]
    %v205 = vlaneseq
    %v206 = vshrl.u32 %v205, 7
    %v207 = vsub.s32 0, %v206
    %v208 = vrot.slane %v204, %v207
    %vm209 = vcmask 523264
    %v211 = vsel %vm209, %v195, 0
    %213 = vmatprep.subr.mxu0 0.0
    %214 = vmatpush1.msra.mxu0 %v196
    %215 = vmatprep.subr.mxu0 0.0
    %216 = vmatpush1.msra.mxu0 %v197
    %217 = vmatprep.subr.mxu0 0.0
    %218 = vmatpush1.msra.mxu0 %v198
    %219 = vmatprep.subr.mxu0 0.0
    %220 = vmatpush1.msra.mxu0 %v199
    %221 = vmatprep.subr.mxu0 0.0
    %222 = vmatpush1.msra.mxu0 %v200
    %223 = vmatprep.subr.mxu0 0.0
    %224 = vmatpush1.msra.mxu0 %v201
    %225 = vmatprep.subr.mxu0 0.0
    %226 = vmatpush1.msra.mxu0 %v202
    %227 = vmatprep.subr.mxu0 0.0
    %228 = vmatpush1.msra.mxu0 %v203
    %229 = vmatprep.subr.mxu0 0.0
    %230 = vmatpush1.msra.mxu0 0.0
    %231 = vmatprep.subr.mxu0 0.0
    %232 = vmatpush1.msra.mxu0 0.0
    %233 = vmatprep.subr.mxu0 0.0
    %234 = vmatpush1.msra.mxu0 0.0
    %235 = vmatprep.subr.mxu0 0.0
    %236 = vmatpush1.msra.mxu0 0.0
    %237 = vmatprep.subr.mxu0 0.0
    %238 = vmatpush1.msra.mxu0 0.0
    %239 = vmatprep.subr.mxu0 0.0
    %240 = vmatpush1.msra.mxu0 0.0
    %241 = vmatprep.subr.mxu0 0.0
    %242 = vmatpush1.msra.mxu0 0.0
    %243 = vmatprep.subr.mxu0 0.0
    %244 = vmatpush1.msra.mxu0 0.0
    %245 = vmatprep.subr.mxu0 0.0
    %246 = vmatpush1.msra.mxu0 0.0
    %247 = vmatprep.subr.mxu0 0.0
    %248 = vmatpush1.msra.mxu0 0.0
    %249 = vmatprep.subr.mxu0 0.0
    %250 = vmatpush1.msra.mxu0 0.0
    %251 = vmatprep.subr.mxu0 0.0
    %252 = vmatpush1.msra.mxu0 0.0
    %253 = vmatprep.subr.mxu0 0.0
    %254 = vmatpush1.msra.mxu0 0.0
    %255 = vmatprep.subr.mxu0 0.0
    %256 = vmatpush1.msra.mxu0 0.0
    %257 = vmatprep.subr.mxu0 0.0
    %258 = vmatpush1.msra.mxu0 0.0
    %259 = vmatprep.subr.mxu0 0.0
    %260 = vmatpush1.msra.mxu0 0.0
    %261 = vmatprep.subr.mxu0 0.0
    %262 = vmatpush1.msra.mxu0 0.0
    %263 = vmatprep.subr.mxu0 0.0
    %264 = vmatpush1.msra.mxu0 0.0
    %265 = vmatprep.subr.mxu0 0.0
    %266 = vmatpush1.msra.mxu0 0.0
    %267 = vmatprep.subr.mxu0 0.0
    %268 = vmatpush1.msra.mxu0 0.0
    %269 = vmatprep.subr.mxu0 0.0
    %270 = vmatpush1.msra.mxu0 0.0
    %271 = vmatprep.subr.mxu0 0.0
    %272 = vmatpush1.msra.mxu0 0.0
    %273 = vmatprep.subr.mxu0 0.0
    %274 = vmatpush1.msra.mxu0 0.0
    %275 = vmatprep.subr.mxu0 0.0
    %276 = vmatpush1.msra.mxu0 0.0
    %277 = vmatprep.mubr.f32.mxu0 0.0
    %278 = vmatmul.mubr.f32.gmra.mrb[0].mxu0 %v211
    %v279 = vpop.f32.mrb[0].mxu0
    %v280 = vadd.f32 %v208, %v279
    %v281 = vpop.f32.mrb[0].mxu0
    %282 = vdwg.mxu0
    %v283 = vld [vmem:[%s1] sm:$0xff]
    %v284 = vld [vmem:[%s1 + $0x8] sm:$0xff]
    %v285 = vld [vmem:[%s1 + $0x10] sm:$0xff]
    %v286 = vld [vmem:[%s1 + $0x18] sm:$0xff]
    %v287 = vld [vmem:[#allocation7] sm:$0xff]
    %v288 = vld [vmem:[#allocation7 + $0x8] sm:$0xff]
    %v289 = vld [vmem:[#allocation7 + $0x10] sm:$0xff]
    %v290 = vld [vmem:[#allocation7 + $0x18] sm:$0xff]
    %v291 = vld [vmem:[#allocation5] sm:$0x1]
    %v292 = vlaneseq
    %v293 = vshrl.u32 %v292, 7
    %v294 = vsub.s32 0, %v293
    %v295 = vrot.slane %v291, %v294
    %v297 = vsel %vm115, %v283, 0
    %v300 = vsel %vm115, %v284, 0
    %v303 = vsel %vm115, %v285, 0
    %v306 = vsel %vm115, %v286, 0
    %308 = vmatprep.subr.mxu0 0.0
    %309 = vmatpush1.msra.mxu0 %v287
    %310 = vmatprep.subr.mxu0 0.0
    %311 = vmatpush1.msra.mxu0 %v288
    %312 = vmatprep.subr.mxu0 0.0
    %313 = vmatpush1.msra.mxu0 %v289
    %314 = vmatprep.subr.mxu0 0.0
    %315 = vmatpush1.msra.mxu0 %v290
    %316 = vmatprep.subr.mxu0 0.0
    %317 = vmatpush1.msra.mxu0 0.0
    %318 = vmatprep.subr.mxu0 0.0
    %319 = vmatpush1.msra.mxu0 0.0
    %320 = vmatprep.subr.mxu0 0.0
    %321 = vmatpush1.msra.mxu0 0.0
    %322 = vmatprep.subr.mxu0 0.0
    %323 = vmatpush1.msra.mxu0 0.0
    %324 = vmatprep.subr.mxu0 0.0
    %325 = vmatpush1.msra.mxu0 0.0
    %326 = vmatprep.subr.mxu0 0.0
    %327 = vmatpush1.msra.mxu0 0.0
    %328 = vmatprep.subr.mxu0 0.0
    %329 = vmatpush1.msra.mxu0 0.0
    %330 = vmatprep.subr.mxu0 0.0
    %331 = vmatpush1.msra.mxu0 0.0
    %332 = vmatprep.subr.mxu0 0.0
    %333 = vmatpush1.msra.mxu0 0.0
    %334 = vmatprep.subr.mxu0 0.0
    %335 = vmatpush1.msra.mxu0 0.0
    %336 = vmatprep.subr.mxu0 0.0
    %337 = vmatpush1.msra.mxu0 0.0
    %338 = vmatprep.subr.mxu0 0.0
    %339 = vmatpush1.msra.mxu0 0.0
    %340 = vmatprep.subr.mxu0 0.0
    %341 = vmatpush1.msra.mxu0 0.0
    %342 = vmatprep.subr.mxu0 0.0
    %343 = vmatpush1.msra.mxu0 0.0
    %344 = vmatprep.subr.mxu0 0.0
    %345 = vmatpush1.msra.mxu0 0.0
    %346 = vmatprep.subr.mxu0 0.0
    %347 = vmatpush1.msra.mxu0 0.0
    %348 = vmatprep.subr.mxu0 0.0
    %349 = vmatpush1.msra.mxu0 0.0
    %350 = vmatprep.subr.mxu0 0.0
    %351 = vmatpush1.msra.mxu0 0.0
    %352 = vmatprep.subr.mxu0 0.0
    %353 = vmatpush1.msra.mxu0 0.0
    %354 = vmatprep.subr.mxu0 0.0
    %355 = vmatpush1.msra.mxu0 0.0
    %356 = vmatprep.subr.mxu0 0.0
    %357 = vmatpush1.msra.mxu0 0.0
    %358 = vmatprep.subr.mxu0 0.0
    %359 = vmatpush1.msra.mxu0 0.0
    %360 = vmatprep.subr.mxu0 0.0
    %361 = vmatpush1.msra.mxu0 0.0
    %362 = vmatprep.subr.mxu0 0.0
    %363 = vmatpush1.msra.mxu0 0.0
    %364 = vmatprep.subr.mxu0 0.0
    %365 = vmatpush1.msra.mxu0 0.0
    %366 = vmatprep.subr.mxu0 0.0
    %367 = vmatpush1.msra.mxu0 0.0
    %368 = vmatprep.subr.mxu0 0.0
    %369 = vmatpush1.msra.mxu0 0.0
    %370 = vmatprep.subr.mxu0 0.0
    %371 = vmatpush1.msra.mxu0 0.0
    %372 = vmatprep.mubr.f32.mxu0 0.0
    %373 = vmatmul.mubr.f32.gmra.mrb[0].mxu0 %v297
    %v374 = vpop.f32.mrb[0].mxu0
    %v375 = vadd.f32 %v295, %v374
    %v376 = vpop.f32.mrb[0].mxu0
    %377 = vmatprep.mubr.f32.mxu0 0.0
    %378 = vmatmul.mubr.f32.gmra.mrb[0].mxu0 %v300
    %v379 = vpop.f32.mrb[0].mxu0
    %v380 = vadd.f32 %v295, %v379
    %v381 = vpop.f32.mrb[0].mxu0
    %382 = vmatprep.mubr.f32.mxu0 0.0
    %383 = vmatmul.mubr.f32.gmra.mrb[0].mxu0 %v303
    %v384 = vpop.f32.mrb[0].mxu0
    %v385 = vadd.f32 %v295, %v384
    %v386 = vpop.f32.mrb[0].mxu0
    %387 = vmatprep.mubr.f32.mxu0 0.0
    %388 = vmatmul.mubr.f32.gmra.mrb[0].mxu0 %v306
    %v389 = vpop.f32.mrb[0].mxu0
    %v390 = vadd.f32 %v295, %v389
    %v391 = vpop.f32.mrb[0].mxu0
    %392 = vdwg.mxu0
    %v393 = vlaneseq
    %v394 = vshrl.u32 %v393, 7
    %v395 = vsub.s32 0, %v394
    %v396 = vrot.slane %v280, %v395
    %v397 = vlaneseq
    %v398 = vshrl.u32 %v397, 7
    %v399 = vsub.s32 1, %v398
    %v400 = vrot.slane %v280, %v399
    %v401 = vadd.f32 %v375, %v396
    %v402 = vadd.f32 %v380, %v396
    %v403 = vadd.f32 %v385, %v400
    %v404 = vadd.f32 %v390, %v400
    %v405 = vld [vmem:[#allocation2] sm:$0xff]
    %v406 = vxor.u32 %v280, 2147483648
    %v407 = vmul.f32 %v406, 1.442695
    %v408 = vpow.pop %v407
    %v409 = vadd.f32 %v408, 1.0
    %v410 = vrcp.pop %v409
    %v411 = vmul.f32 1.0, %v410
    %v412 = vmul.f32 %v280, %v411
    %v413 = vlaneseq
    %v414 = vshrl.u32 %v413, 7
    %v415 = vsub.s32 0, %v414
    %v416 = vrot.slane %v412, %v415
    %v417 = vlaneseq
    %v418 = vshrl.u32 %v417, 7
    %v419 = vsub.s32 1, %v418
    %v420 = vrot.slane %v412, %v419
    %v421 = vld [vmem:[%s8] sm:$0xff]
    %v422 = vld [vmem:[%s8 + $0x8] sm:$0xff]
    %v423 = vld [vmem:[%s8 + $0x10] sm:$0xff]
    %v424 = vld [vmem:[%s8 + $0x18] sm:$0xff]
    %v425 = vld [vmem:[%s8 + $0x20] sm:$0xff]
    %v426 = vld [vmem:[%s8 + $0x28] sm:$0xff]
    %v427 = vld [vmem:[%s8 + $0x30] sm:$0xff]
    %v428 = vld [vmem:[%s8 + $0x38] sm:$0xff]
    %v429 = vld [vmem:[%s8 + $0x40] sm:$0xff]
    %v430 = vld [vmem:[%s8 + $0x48] sm:$0xff]
    %v431 = vld [vmem:[%s8 + $0x50] sm:$0xff]
    %v432 = vld [vmem:[%s8 + $0x58] sm:$0xff]
    %v433 = vld [vmem:[%s8 + $0x60] sm:$0xff]
    %v434 = vld [vmem:[%s8 + $0x68] sm:$0xff]
    %v435 = vld [vmem:[%s8 + $0x70] sm:$0xff]
    %v436 = vld [vmem:[%s8 + $0x78] sm:$0xff]
    %v438 = vsel %vm209, %v416, 0
    %v441 = vsel %vm209, %v420, 0
    %443 = vmatprep.subr.mxu0 %v422
    %444 = vmatpush1.msra.mxu0 %v421
    %445 = vmatprep.subr.mxu0 %v424
    %446 = vmatpush1.msra.mxu0 %v423
    %447 = vmatprep.subr.mxu0 %v426
    %448 = vmatpush1.msra.mxu0 %v425
    %449 = vmatprep.subr.mxu0 %v428
    %450 = vmatpush1.msra.mxu0 %v427
    %451 = vmatprep.subr.mxu0 %v430
    %452 = vmatpush1.msra.mxu0 %v429
    %453 = vmatprep.subr.mxu0 %v432
    %454 = vmatpush1.msra.mxu0 %v431
    %455 = vmatprep.subr.mxu0 %v434
    %456 = vmatpush1.msra.mxu0 %v433
    %457 = vmatprep.subr.mxu0 %v436
    %458 = vmatpush1.msra.mxu0 %v435
    %459 = vmatprep.subr.mxu0 0.0
    %460 = vmatpush1.msra.mxu0 0.0
    %461 = vmatprep.subr.mxu0 0.0
    %462 = vmatpush1.msra.mxu0 0.0
    %463 = vmatprep.subr.mxu0 0.0
    %464 = vmatpush1.msra.mxu0 0.0
    %465 = vmatprep.subr.mxu0 0.0
    %466 = vmatpush1.msra.mxu0 0.0
    %467 = vmatprep.subr.mxu0 0.0
    %468 = vmatpush1.msra.mxu0 0.0
    %469 = vmatprep.subr.mxu0 0.0
    %470 = vmatpush1.msra.mxu0 0.0
    %471 = vmatprep.subr.mxu0 0.0
    %472 = vmatpush1.msra.mxu0 0.0
    %473 = vmatprep.subr.mxu0 0.0
    %474 = vmatpush1.msra.mxu0 0.0
    %475 = vmatprep.subr.mxu0 0.0
    %476 = vmatpush1.msra.mxu0 0.0
    %477 = vmatprep.subr.mxu0 0.0
    %478 = vmatpush1.msra.mxu0 0.0
    %479 = vmatprep.subr.mxu0 0.0
    %480 = vmatpush1.msra.mxu0 0.0
    %481 = vmatprep.subr.mxu0 0.0
    %482 = vmatpush1.msra.mxu0 0.0
    %483 = vmatprep.subr.mxu0 0.0
    %484 = vmatpush1.msra.mxu0 0.0
    %485 = vmatprep.subr.mxu0 0.0
    %486 = vmatpush1.msra.mxu0 0.0
    %487 = vmatprep.subr.mxu0 0.0
    %488 = vmatpush1.msra.mxu0 0.0
    %489 = vmatprep.subr.mxu0 0.0
    %490 = vmatpush1.msra.mxu0 0.0
    %491 = vmatprep.subr.mxu0 0.0
    %492 = vmatpush1.msra.mxu0 0.0
    %493 = vmatprep.subr.mxu0 0.0
    %494 = vmatpush1.msra.mxu0 0.0
    %495 = vmatprep.subr.mxu0 0.0
    %496 = vmatpush1.msra.mxu0 0.0
    %497 = vmatprep.subr.mxu0 0.0
    %498 = vmatpush1.msra.mxu0 0.0
    %499 = vmatprep.subr.mxu0 0.0
    %500 = vmatpush1.msra.mxu0 0.0
    %501 = vmatprep.subr.mxu0 0.0
    %502 = vmatpush1.msra.mxu0 0.0
    %503 = vmatprep.subr.mxu0 0.0
    %504 = vmatpush1.msra.mxu0 0.0
    %505 = vmatprep.subr.mxu0 0.0
    %506 = vmatpush1.msra.mxu0 0.0
    %507 = vmatprep.mubr.f32.mxu0 0.0
    %508 = vmatmul.mubr.f32.gmra.mrb[0].mxu0 %v438
    %v509 = vpop.f32.mrb[0].mxu0
    %v510 = vadd.f32 0.0, %v509
    %v511 = vpop.f32.mrb[0].mxu0
    %v512 = vadd.f32 0.0, %v511
    %513 = vmatprep.mubr.f32.mxu0 0.0
    %514 = vmatmul.mubr.f32.gmra.mrb[0].mxu0 %v441
    %v515 = vpop.f32.mrb[0].mxu0
    %v516 = vadd.f32 0.0, %v515
    %v517 = vpop.f32.mrb[0].mxu0
    %v518 = vadd.f32 0.0, %v517
    %519 = vdwg.mxu0
    %v520 = vld [vmem:[#allocation5 + $0xc] sm:$0x1]
    %v521 = vlaneseq
    %v522 = vshrl.u32 %v521, 7
    %v523 = vsub.s32 0, %v522
    %v524 = vrot.slane %v520, %v523
    %v525 = vadd.f32 %v510, %v524
    %v526 = vadd.f32 %v516, %v524
    %v527 = vld [vmem:[#allocation5 + $0xd] sm:$0x1]
    %v528 = vlaneseq
    %v529 = vshrl.u32 %v528, 7
    %v530 = vsub.s32 0, %v529
    %v531 = vrot.slane %v527, %v530
    %533 = vrot.lane.b32.xlu0 %v531, 64
    %v534 = vpop.permute.xlu0 %533
    %v536 = vadd.f32 %v510, %v534
    %v537 = vadd.f32 %v516, %v534
    %v538 = vld [vmem:[#allocation5 + $0xe] sm:$0x1]
    %v539 = vlaneseq
    %v540 = vshrl.u32 %v539, 7
    %v541 = vsub.s32 0, %v540
    %v542 = vrot.slane %v538, %v541
    %v543 = vadd.f32 %v512, %v542
    %v544 = vadd.f32 %v518, %v542
    %v545 = vld [vmem:[#allocation5 + $0xf] sm:$0x1]
    %v546 = vlaneseq
    %v547 = vshrl.u32 %v546, 7
    %v548 = vsub.s32 0, %v547
    %v549 = vrot.slane %v545, %v548
    %551 = vrot.lane.b32.xlu0 %v549, 64
    %v552 = vpop.permute.xlu0 %551
    %v554 = vadd.f32 %v512, %v552
    %v555 = vadd.f32 %v518, %v552
    %v556 = vld [vmem:[#allocation5 + $0x6] sm:$0x1]
    %v557 = vld [vmem:[#allocation5 + $0x7] sm:$0x1]
    %v558 = vsel %vm209, %v401, 0.0
    %559 = vadd.xlane.f32.xlu0 %v558
    %v560 = vpop.xlane.xlu0 %559
    %v561 = vsel %vm209, %v402, 0.0
    %562 = vadd.xlane.f32.xlu0 %v561
    %v563 = vpop.xlane.xlu0 %562
    %v564 = vsel %vm209, %v403, 0.0
    %565 = vadd.xlane.f32.xlu0 %v564
    %v566 = vpop.xlane.xlu0 %565
    %v567 = vsel %vm209, %v404, 0.0
    %568 = vadd.xlane.f32.xlu0 %v567
    %v569 = vpop.xlane.xlu0 %568
    %v570 = vrcp.pop 64.0
    %v571 = vmul.f32 %v560, %v570
    %v572 = vmul.f32 %v563, %v570
    %v573 = vmul.f32 %v566, %v570
    %v574 = vmul.f32 %v569, %v570
    %v575 = vsub.f32 %v401, %v571
    %v576 = vsub.f32 %v402, %v572
    %v577 = vsub.f32 %v403, %v573
    %v578 = vsub.f32 %v404, %v574
    %v579 = vmul.f32 %v575, %v575
    %v580 = vmul.f32 %v576, %v576
    %v581 = vmul.f32 %v577, %v577
    %v582 = vmul.f32 %v578, %v578
    %v583 = vsel %vm209, %v579, 0.0
    %584 = vadd.xlane.f32.xlu0 %v583
    %v585 = vpop.xlane.xlu0 %584
    %v586 = vsel %vm209, %v580, 0.0
    %587 = vadd.xlane.f32.xlu0 %v586
    %v588 = vpop.xlane.xlu0 %587
    %v589 = vsel %vm209, %v581, 0.0
    %590 = vadd.xlane.f32.xlu0 %v589
    %v591 = vpop.xlane.xlu0 %590
    %v592 = vsel %vm209, %v582, 0.0
    %593 = vadd.xlane.f32.xlu0 %v592
    %v594 = vpop.xlane.xlu0 %593
    %v595 = vmul.f32 %v585, %v570
    %v596 = vmul.f32 %v588, %v570
    %v597 = vmul.f32 %v591, %v570
    %v598 = vmul.f32 %v594, %v570
    %v599 = vadd.f32 %v595, 1e-05
    %v600 = vadd.f32 %v596, 1e-05
    %v601 = vadd.f32 %v597, 1e-05
    %v602 = vadd.f32 %v598, 1e-05
    %v603 = vrsqrt.pop %v599
    %v604 = vrsqrt.pop %v600
    %v605 = vrsqrt.pop %v601
    %v606 = vrsqrt.pop %v602
    %v607 = vmul.f32 %v575, %v603
    %v608 = vmul.f32 %v576, %v604
    %v609 = vmul.f32 %v577, %v605
    %v610 = vmul.f32 %v578, %v606
    %v611 = vlaneseq
    %v612 = vshrl.u32 %v611, 7
    %v613 = vsub.s32 0, %v612
    %v614 = vrot.slane %v556, %v613
    %v615 = vmul.f32 %v607, %v614
    %v616 = vmul.f32 %v608, %v614
    %v617 = vmul.f32 %v609, %v614
    %v618 = vmul.f32 %v610, %v614
    %v619 = vlaneseq
    %v620 = vshrl.u32 %v619, 7
    %v621 = vsub.s32 0, %v620
    %v622 = vrot.slane %v557, %v621
    %v623 = vadd.f32 %v615, %v622
    %v624 = vadd.f32 %v616, %v622
    %v625 = vadd.f32 %v617, %v622
    %v626 = vadd.f32 %v618, %v622
    %v627 = vld [vmem:[#allocation5 + $0x8] sm:$0x1]
    %v628 = vld [vmem:[#allocation5 + $0x9] sm:$0x1]
    %v629 = vsel %vm209, %v405, 0.0
    %630 = vadd.xlane.f32.xlu0 %v629
    %v631 = vpop.xlane.xlu0 %630
    %v632 = vmul.f32 %v631, %v570
    %v633 = vsub.f32 %v405, %v632
    %v634 = vmul.f32 %v633, %v633
    %v635 = vsel %vm209, %v634, 0.0
    %636 = vadd.xlane.f32.xlu0 %v635
    %v637 = vpop.xlane.xlu0 %636
    %v638 = vmul.f32 %v637, %v570
    %v639 = vadd.f32 %v638, 1e-05
    %v640 = vrsqrt.pop %v639
    %v641 = vmul.f32 %v633, %v640
    %v642 = vlaneseq
    %v643 = vshrl.u32 %v642, 7
    %v644 = vsub.s32 0, %v643
    %v645 = vrot.slane %v627, %v644
    %v646 = vmul.f32 %v641, %v645
    %v647 = vlaneseq
    %v648 = vshrl.u32 %v647, 7
    %v649 = vsub.s32 0, %v648
    %v650 = vrot.slane %v628, %v649
    %v651 = vadd.f32 %v646, %v650
    %v652 = vadd.f32 %v536, 1.0
    %v653 = vadd.f32 %v537, 1.0
    %656 = vrot.lane.b32.xlu0 %v652, 64
    %v657 = vpop.permute.xlu0 %656
    %658 = vrot.lane.b32.xlu0 %v653, 64
    %v659 = vpop.permute.xlu0 %658
    %v662 = vmul.f32 %v651, %v657
    %v663 = vmul.f32 %v651, %v659
    %v664 = vadd.f32 %v662, %v525
    %v665 = vadd.f32 %v663, %v526
    %s666 = scalar_lea.vmem %s6, 128
    %v667 = vld [vmem:[%s666] sm:$0xff]
    %v668 = vld [vmem:[%s666 + $0x8] sm:$0xff]
    %v669 = vld [vmem:[%s666 + $0x10] sm:$0xff]
    %v670 = vld [vmem:[%s666 + $0x18] sm:$0xff]
    %v671 = vld [vmem:[%s666 + $0x20] sm:$0xff]
    %v672 = vld [vmem:[%s666 + $0x28] sm:$0xff]
    %v673 = vld [vmem:[%s666 + $0x30] sm:$0xff]
    %v674 = vld [vmem:[%s666 + $0x38] sm:$0xff]
    %v676 = vsel %vm209, %v664, 0
    %v679 = vsel %vm209, %v665, 0
    %681 = vmatprep.subr.mxu0 0.0
    %682 = vmatpush1.msra.mxu0 %v667
    %683 = vmatprep.subr.mxu0 0.0
    %684 = vmatpush1.msra.mxu0 %v668
    %685 = vmatprep.subr.mxu0 0.0
    %686 = vmatpush1.msra.mxu0 %v669
    %687 = vmatprep.subr.mxu0 0.0
    %688 = vmatpush1.msra.mxu0 %v670
    %689 = vmatprep.subr.mxu0 0.0
    %690 = vmatpush1.msra.mxu0 %v671
    %691 = vmatprep.subr.mxu0 0.0
    %692 = vmatpush1.msra.mxu0 %v672
    %693 = vmatprep.subr.mxu0 0.0
    %694 = vmatpush1.msra.mxu0 %v673
    %695 = vmatprep.subr.mxu0 0.0
    %696 = vmatpush1.msra.mxu0 %v674
    %697 = vmatprep.subr.mxu0 0.0
    %698 = vmatpush1.msra.mxu0 0.0
    %699 = vmatprep.subr.mxu0 0.0
    %700 = vmatpush1.msra.mxu0 0.0
    %701 = vmatprep.subr.mxu0 0.0
    %702 = vmatpush1.msra.mxu0 0.0
    %703 = vmatprep.subr.mxu0 0.0
    %704 = vmatpush1.msra.mxu0 0.0
    %705 = vmatprep.subr.mxu0 0.0
    %706 = vmatpush1.msra.mxu0 0.0
    %707 = vmatprep.subr.mxu0 0.0
    %708 = vmatpush1.msra.mxu0 0.0
    %709 = vmatprep.subr.mxu0 0.0
    %710 = vmatpush1.msra.mxu0 0.0
    %711 = vmatprep.subr.mxu0 0.0
    %712 = vmatpush1.msra.mxu0 0.0
    %713 = vmatprep.subr.mxu0 0.0
    %714 = vmatpush1.msra.mxu0 0.0
    %715 = vmatprep.subr.mxu0 0.0
    %716 = vmatpush1.msra.mxu0 0.0
    %717 = vmatprep.subr.mxu0 0.0
    %718 = vmatpush1.msra.mxu0 0.0
    %719 = vmatprep.subr.mxu0 0.0
    %720 = vmatpush1.msra.mxu0 0.0
    %721 = vmatprep.subr.mxu0 0.0
    %722 = vmatpush1.msra.mxu0 0.0
    %723 = vmatprep.subr.mxu0 0.0
    %724 = vmatpush1.msra.mxu0 0.0
    %725 = vmatprep.subr.mxu0 0.0
    %726 = vmatpush1.msra.mxu0 0.0
    %727 = vmatprep.subr.mxu0 0.0
    %728 = vmatpush1.msra.mxu0 0.0
    %729 = vmatprep.subr.mxu0 0.0
    %730 = vmatpush1.msra.mxu0 0.0
    %731 = vmatprep.subr.mxu0 0.0
    %732 = vmatpush1.msra.mxu0 0.0
    %733 = vmatprep.subr.mxu0 0.0
    %734 = vmatpush1.msra.mxu0 0.0
    %735 = vmatprep.subr.mxu0 0.0
    %736 = vmatpush1.msra.mxu0 0.0
    %737 = vmatprep.subr.mxu0 0.0
    %738 = vmatpush1.msra.mxu0 0.0
    %739 = vmatprep.subr.mxu0 0.0
    %740 = vmatpush1.msra.mxu0 0.0
    %741 = vmatprep.subr.mxu0 0.0
    %742 = vmatpush1.msra.mxu0 0.0
    %743 = vmatprep.subr.mxu0 0.0
    %744 = vmatpush1.msra.mxu0 0.0
    %745 = vmatprep.mubr.f32.mxu0 0.0
    %746 = vmatmul.mubr.f32.gmra.mrb[0].mxu0 %v676
    %v747 = vpop.f32.mrb[0].mxu0
    %v748 = vadd.f32 0.0, %v747
    %v749 = vpop.f32.mrb[0].mxu0
    %750 = vmatprep.mubr.f32.mxu0 0.0
    %751 = vmatmul.mubr.f32.gmra.mrb[0].mxu0 %v679
    %v752 = vpop.f32.mrb[0].mxu0
    %v753 = vadd.f32 0.0, %v752
    %v754 = vpop.f32.mrb[0].mxu0
    %755 = vdwg.mxu0
    %v756 = vld [vmem:[%s7] sm:$0xff]
    %v757 = vld [vmem:[%s7 + $0x8] sm:$0xff]
    %v758 = vld [vmem:[%s7 + $0x10] sm:$0xff]
    %v759 = vld [vmem:[%s7 + $0x18] sm:$0xff]
    %v760 = vld [vmem:[%s7 + $0x20] sm:$0xff]
    %v761 = vld [vmem:[%s7 + $0x28] sm:$0xff]
    %v762 = vld [vmem:[%s7 + $0x30] sm:$0xff]
    %v763 = vld [vmem:[%s7 + $0x38] sm:$0xff]
    %v765 = vsel %vm209, %v623, 0
    %v768 = vsel %vm209, %v624, 0
    %v771 = vsel %vm209, %v625, 0
    %v774 = vsel %vm209, %v626, 0
    %776 = vmatprep.subr.mxu0 0.0
    %777 = vmatpush1.msra.mxu0 %v756
    %778 = vmatprep.subr.mxu0 0.0
    %779 = vmatpush1.msra.mxu0 %v757
    %780 = vmatprep.subr.mxu0 0.0
    %781 = vmatpush1.msra.mxu0 %v758
    %782 = vmatprep.subr.mxu0 0.0
    %783 = vmatpush1.msra.mxu0 %v759
    %784 = vmatprep.subr.mxu0 0.0
    %785 = vmatpush1.msra.mxu0 %v760
    %786 = vmatprep.subr.mxu0 0.0
    %787 = vmatpush1.msra.mxu0 %v761
    %788 = vmatprep.subr.mxu0 0.0
    %789 = vmatpush1.msra.mxu0 %v762
    %790 = vmatprep.subr.mxu0 0.0
    %791 = vmatpush1.msra.mxu0 %v763
    %792 = vmatprep.subr.mxu0 0.0
    %793 = vmatpush1.msra.mxu0 0.0
    %794 = vmatprep.subr.mxu0 0.0
    %795 = vmatpush1.msra.mxu0 0.0
    %796 = vmatprep.subr.mxu0 0.0
    %797 = vmatpush1.msra.mxu0 0.0
    %798 = vmatprep.subr.mxu0 0.0
    %799 = vmatpush1.msra.mxu0 0.0
    %800 = vmatprep.subr.mxu0 0.0
    %801 = vmatpush1.msra.mxu0 0.0
    %802 = vmatprep.subr.mxu0 0.0
    %803 = vmatpush1.msra.mxu0 0.0
    %804 = vmatprep.subr.mxu0 0.0
    %805 = vmatpush1.msra.mxu0 0.0
    %806 = vmatprep.subr.mxu0 0.0
    %807 = vmatpush1.msra.mxu0 0.0
    %808 = vmatprep.subr.mxu0 0.0
    %809 = vmatpush1.msra.mxu0 0.0
    %810 = vmatprep.subr.mxu0 0.0
    %811 = vmatpush1.msra.mxu0 0.0
    %812 = vmatprep.subr.mxu0 0.0
    %813 = vmatpush1.msra.mxu0 0.0
    %814 = vmatprep.subr.mxu0 0.0
    %815 = vmatpush1.msra.mxu0 0.0
    %816 = vmatprep.subr.mxu0 0.0
    %817 = vmatpush1.msra.mxu0 0.0
    %818 = vmatprep.subr.mxu0 0.0
    %819 = vmatpush1.msra.mxu0 0.0
    %820 = vmatprep.subr.mxu0 0.0
    %821 = vmatpush1.msra.mxu0 0.0
    %822 = vmatprep.subr.mxu0 0.0
    %823 = vmatpush1.msra.mxu0 0.0
    %824 = vmatprep.subr.mxu0 0.0
    %825 = vmatpush1.msra.mxu0 0.0
    %826 = vmatprep.subr.mxu0 0.0
    %827 = vmatpush1.msra.mxu0 0.0
    %828 = vmatprep.subr.mxu0 0.0
    %829 = vmatpush1.msra.mxu0 0.0
    %830 = vmatprep.subr.mxu0 0.0
    %831 = vmatpush1.msra.mxu0 0.0
    %832 = vmatprep.subr.mxu0 0.0
    %833 = vmatpush1.msra.mxu0 0.0
    %834 = vmatprep.subr.mxu0 0.0
    %835 = vmatpush1.msra.mxu0 0.0
    %836 = vmatprep.subr.mxu0 0.0
    %837 = vmatpush1.msra.mxu0 0.0
    %838 = vmatprep.subr.mxu0 0.0
    %839 = vmatpush1.msra.mxu0 0.0
    %840 = vmatprep.mubr.f32.mxu0 0.0
    %841 = vmatmul.mubr.f32.gmra.mrb[0].mxu0 %v765
    %v842 = vpop.f32.mrb[0].mxu0
    %v843 = vadd.f32 0.0, %v842
    %v844 = vpop.f32.mrb[0].mxu0
    %845 = vmatprep.mubr.f32.mxu0 0.0
    %846 = vmatmul.mubr.f32.gmra.mrb[0].mxu0 %v768
    %v847 = vpop.f32.mrb[0].mxu0
    %v848 = vadd.f32 0.0, %v847
    %v849 = vpop.f32.mrb[0].mxu0
    %850 = vmatprep.mubr.f32.mxu0 0.0
    %851 = vmatmul.mubr.f32.gmra.mrb[0].mxu0 %v676
    %v852 = vpop.f32.mrb[0].mxu0
    %v853 = vadd.f32 0.0, %v852
    %v854 = vpop.f32.mrb[0].mxu0
    %855 = vmatprep.mubr.f32.mxu0 0.0
    %856 = vmatmul.mubr.f32.gmra.mrb[0].mxu0 %v771
    %v857 = vpop.f32.mrb[0].mxu0
    %v858 = vadd.f32 0.0, %v857
    %v859 = vpop.f32.mrb[0].mxu0
    %860 = vmatprep.mubr.f32.mxu0 0.0
    %861 = vmatmul.mubr.f32.gmra.mrb[0].mxu0 %v774
    %v862 = vpop.f32.mrb[0].mxu0
    %v863 = vadd.f32 0.0, %v862
    %v864 = vpop.f32.mrb[0].mxu0
    %865 = vmatprep.mubr.f32.mxu0 0.0
    %866 = vmatmul.mubr.f32.gmra.mrb[0].mxu0 %v679
    %v867 = vpop.f32.mrb[0].mxu0
    %v868 = vadd.f32 0.0, %v867
    %v869 = vpop.f32.mrb[0].mxu0
    %870 = vdwg.mxu0
    %vm871 = vcmask 130048
    %v873 = vsel %vm871, %v748, 0
    %v876 = vsel %vm871, %v843, 0
    %v879 = vsel %vm871, %v848, 0
    %v882 = vsel %vm871, %v853, 0
    %884 = vmatprep.subr.mxu0 0.0
    %885 = vmatpush1.xpose.msra.mxu0 %v876
    %886 = vmatprep.subr.mxu0 0.0
    %887 = vmatpush1.xpose.msra.mxu0 %v879
    %888 = vmatprep.subr.mxu0 0.0
    %889 = vmatpush1.xpose.msra.mxu0 %v882
    %890 = vmatprep.subr.mxu0 0.0
    %891 = vmatpush1.xpose.msra.mxu0 0.0
    %892 = vmatprep.subr.mxu0 0.0
    %893 = vmatpush1.xpose.msra.mxu0 0.0
    %894 = vmatprep.subr.mxu0 0.0
    %895 = vmatpush1.xpose.msra.mxu0 0.0
    %896 = vmatprep.subr.mxu0 0.0
    %897 = vmatpush1.xpose.msra.mxu0 0.0
    %898 = vmatprep.subr.mxu0 0.0
    %899 = vmatpush1.xpose.msra.mxu0 0.0
    %900 = vmatprep.subr.mxu0 0.0
    %901 = vmatpush1.xpose.msra.mxu0 0.0
    %902 = vmatprep.subr.mxu0 0.0
    %903 = vmatpush1.xpose.msra.mxu0 0.0
    %904 = vmatprep.subr.mxu0 0.0
    %905 = vmatpush1.xpose.msra.mxu0 0.0
    %906 = vmatprep.subr.mxu0 0.0
    %907 = vmatpush1.xpose.msra.mxu0 0.0
    %908 = vmatprep.subr.mxu0 0.0
    %909 = vmatpush1.xpose.msra.mxu0 0.0
    %910 = vmatprep.subr.mxu0 0.0
    %911 = vmatpush1.xpose.msra.mxu0 0.0
    %912 = vmatprep.subr.mxu0 0.0
    %913 = vmatpush1.xpose.msra.mxu0 0.0
    %914 = vmatprep.subr.mxu0 0.0
    %915 = vmatpush1.xpose.msra.mxu0 0.0
    %916 = vmatprep.subr.mxu0 0.0
    %917 = vmatpush1.xpose.msra.mxu0 0.0
    %918 = vmatprep.subr.mxu0 0.0
    %919 = vmatpush1.xpose.msra.mxu0 0.0
    %920 = vmatprep.subr.mxu0 0.0
    %921 = vmatpush1.xpose.msra.mxu0 0.0
    %922 = vmatprep.subr.mxu0 0.0
    %923 = vmatpush1.xpose.msra.mxu0 0.0
    %924 = vmatprep.subr.mxu0 0.0
    %925 = vmatpush1.xpose.msra.mxu0 0.0
    %926 = vmatprep.subr.mxu0 0.0
    %927 = vmatpush1.xpose.msra.mxu0 0.0
    %928 = vmatprep.subr.mxu0 0.0
    %929 = vmatpush1.xpose.msra.mxu0 0.0
    %930 = vmatprep.subr.mxu0 0.0
    %931 = vmatpush1.xpose.msra.mxu0 0.0
    %932 = vmatprep.subr.mxu0 0.0
    %933 = vmatpush1.xpose.msra.mxu0 0.0
    %934 = vmatprep.subr.mxu0 0.0
    %935 = vmatpush1.xpose.msra.mxu0 0.0
    %936 = vmatprep.subr.mxu0 0.0
    %937 = vmatpush1.xpose.msra.mxu0 0.0
    %938 = vmatprep.subr.mxu0 0.0
    %939 = vmatpush1.xpose.msra.mxu0 0.0
    %940 = vmatprep.subr.mxu0 0.0
    %941 = vmatpush1.xpose.msra.mxu0 0.0
    %942 = vmatprep.subr.mxu0 0.0
    %943 = vmatpush1.xpose.msra.mxu0 0.0
    %944 = vmatprep.subr.mxu0 0.0
    %945 = vmatpush1.xpose.msra.mxu0 0.0
    %946 = vmatprep.subr.mxu0 0.0
    %947 = vmatpush1.xpose.msra.mxu0 0.0
    %948 = vmatprep.mubr.f32.mxu0 0.0
    %949 = vmatmul.mubr.f32.gmra.mrb[0].mxu0 %v873
    %v950 = vpop.f32.mrb[0].mxu0
    %v951 = vadd.f32 0.0, %v950
    %v952 = vpop.f32.mrb[0].mxu0
    %953 = vdwg.mxu0
    %v955 = vsel %vm871, %v753, 0
    %v958 = vsel %vm871, %v858, 0
    %v961 = vsel %vm871, %v863, 0
    %v964 = vsel %vm871, %v868, 0
    %966 = vmatprep.subr.mxu0 0.0
    %967 = vmatpush1.xpose.msra.mxu0 %v958
    %968 = vmatprep.subr.mxu0 0.0
    %969 = vmatpush1.xpose.msra.mxu0 %v961
    %970 = vmatprep.subr.mxu0 0.0
    %971 = vmatpush1.xpose.msra.mxu0 %v964
    %972 = vmatprep.subr.mxu0 0.0
    %973 = vmatpush1.xpose.msra.mxu0 0.0
    %974 = vmatprep.subr.mxu0 0.0
    %975 = vmatpush1.xpose.msra.mxu0 0.0
    %976 = vmatprep.subr.mxu0 0.0
    %977 = vmatpush1.xpose.msra.mxu0 0.0
    %978 = vmatprep.subr.mxu0 0.0
    %979 = vmatpush1.xpose.msra.mxu0 0.0
    %980 = vmatprep.subr.mxu0 0.0
    %981 = vmatpush1.xpose.msra.mxu0 0.0
    %982 = vmatprep.subr.mxu0 0.0
    %983 = vmatpush1.xpose.msra.mxu0 0.0
    %984 = vmatprep.subr.mxu0 0.0
    %985 = vmatpush1.xpose.msra.mxu0 0.0
    %986 = vmatprep.subr.mxu0 0.0
    %987 = vmatpush1.xpose.msra.mxu0 0.0
    %988 = vmatprep.subr.mxu0 0.0
    %989 = vmatpush1.xpose.msra.mxu0 0.0
    %990 = vmatprep.subr.mxu0 0.0
    %991 = vmatpush1.xpose.msra.mxu0 0.0
    %992 = vmatprep.subr.mxu0 0.0
    %993 = vmatpush1.xpose.msra.mxu0 0.0
    %994 = vmatprep.subr.mxu0 0.0
    %995 = vmatpush1.xpose.msra.mxu0 0.0
    %996 = vmatprep.subr.mxu0 0.0
    %997 = vmatpush1.xpose.msra.mxu0 0.0
    %998 = vmatprep.subr.mxu0 0.0
    %999 = vmatpush1.xpose.msra.mxu0 0.0
    %1000 = vmatprep.subr.mxu0 0.0
    %1001 = vmatpush1.xpose.msra.mxu0 0.0
    %1002 = vmatprep.subr.mxu0 0.0
    %1003 = vmatpush1.xpose.msra.mxu0 0.0
    %1004 = vmatprep.subr.mxu0 0.0
    %1005 = vmatpush1.xpose.msra.mxu0 0.0
    %1006 = vmatprep.subr.mxu0 0.0
    %1007 = vmatpush1.xpose.msra.mxu0 0.0
    %1008 = vmatprep.subr.mxu0 0.0
    %1009 = vmatpush1.xpose.msra.mxu0 0.0
    %1010 = vmatprep.subr.mxu0 0.0
    %1011 = vmatpush1.xpose.msra.mxu0 0.0
    %1012 = vmatprep.subr.mxu0 0.0
    %1013 = vmatpush1.xpose.msra.mxu0 0.0
    %1014 = vmatprep.subr.mxu0 0.0
    %1015 = vmatpush1.xpose.msra.mxu0 0.0
    %1016 = vmatprep.subr.mxu0 0.0
    %1017 = vmatpush1.xpose.msra.mxu0 0.0
    %1018 = vmatprep.subr.mxu0 0.0
    %1019 = vmatpush1.xpose.msra.mxu0 0.0
    %1020 = vmatprep.subr.mxu0 0.0
    %1021 = vmatpush1.xpose.msra.mxu0 0.0
    %1022 = vmatprep.subr.mxu0 0.0
    %1023 = vmatpush1.xpose.msra.mxu0 0.0
    %1024 = vmatprep.subr.mxu0 0.0
    %1025 = vmatpush1.xpose.msra.mxu0 0.0
    %1026 = vmatprep.subr.mxu0 0.0
    %1027 = vmatpush1.xpose.msra.mxu0 0.0
    %1028 = vmatprep.subr.mxu0 0.0
    %1029 = vmatpush1.xpose.msra.mxu0 0.0
    %1030 = vmatprep.mubr.f32.mxu0 0.0
    %1031 = vmatmul.mubr.f32.gmra.mrb[0].mxu0 %v955
    %v1032 = vpop.f32.mrb[0].mxu0
    %v1033 = vadd.f32 0.0, %v1032
    %v1034 = vpop.f32.mrb[0].mxu0
    %1035 = vdwg.mxu0
    %vm1036 = vcmask 195584
    %v1037 = vsel %vm1036, %v951, -inf
    %1038 = vmax.xlane.f32.xlu0 %v1037
    %v1039 = vpop.xlane.xlu0 %1038
    %v1040 = vsel %vm1036, %v1033, -inf
    %1041 = vmax.xlane.f32.xlu0 %v1040
    %v1042 = vpop.xlane.xlu0 %1041
    %v1043 = vsub.f32 %v951, %v1039
    %v1044 = vsub.f32 %v1033, %v1042
    %v1045 = vmul.f32 %v1043, 1.442695
    %v1046 = vpow.pop %v1045
    %v1047 = vmul.f32 %v1044, 1.442695
    %v1048 = vpow.pop %v1047
    %v1049 = vsel %vm1036, %v1046, 0.0
    %1050 = vadd.xlane.f32.xlu0 %v1049
    %v1051 = vpop.xlane.xlu0 %1050
    %v1052 = vsel %vm1036, %v1048, 0.0
    %1053 = vadd.xlane.f32.xlu0 %v1052
    %v1054 = vpop.xlane.xlu0 %1053
    %v1055 = vrcp.pop %v1051
    %v1056 = vmul.f32 %v1046, %v1055
    %v1057 = vrcp.pop %v1054
    %v1058 = vmul.f32 %v1048, %v1057
    %1059 = vrot.lane.b32.xlu0 %v843, 64
    %v1060 = vpop.permute.xlu0 %1059
    %1061 = vrot.lane.b32.xlu0 %v848, 64
    %v1062 = vpop.permute.xlu0 %1061
    %1063 = vrot.lane.b32.xlu0 %v853, 64
    %v1064 = vpop.permute.xlu0 %1063
    %v1069 = vsel %vm1036, %v1056, 0
    %1071 = vmatprep.subr.mxu0 0.0
    %1072 = vmatpush1.msra.mxu0 %v1060
    %1073 = vmatprep.subr.mxu0 0.0
    %1074 = vmatpush1.msra.mxu0 %v1062
    %1075 = vmatprep.subr.mxu0 0.0
    %1076 = vmatpush1.msra.mxu0 %v1064
    %1077 = vmatprep.subr.mxu0 0.0
    %1078 = vmatpush1.msra.mxu0 0.0
    %1079 = vmatprep.subr.mxu0 0.0
    %1080 = vmatpush1.msra.mxu0 0.0
    %1081 = vmatprep.subr.mxu0 0.0
    %1082 = vmatpush1.msra.mxu0 0.0
    %1083 = vmatprep.subr.mxu0 0.0
    %1084 = vmatpush1.msra.mxu0 0.0
    %1085 = vmatprep.subr.mxu0 0.0
    %1086 = vmatpush1.msra.mxu0 0.0
    %1087 = vmatprep.subr.mxu0 0.0
    %1088 = vmatpush1.msra.mxu0 0.0
    %1089 = vmatprep.subr.mxu0 0.0
    %1090 = vmatpush1.msra.mxu0 0.0
    %1091 = vmatprep.subr.mxu0 0.0
    %1092 = vmatpush1.msra.mxu0 0.0
    %1093 = vmatprep.subr.mxu0 0.0
    %1094 = vmatpush1.msra.mxu0 0.0
    %1095 = vmatprep.subr.mxu0 0.0
    %1096 = vmatpush1.msra.mxu0 0.0
    %1097 = vmatprep.subr.mxu0 0.0
    %1098 = vmatpush1.msra.mxu0 0.0
    %1099 = vmatprep.subr.mxu0 0.0
    %1100 = vmatpush1.msra.mxu0 0.0
    %1101 = vmatprep.subr.mxu0 0.0
    %1102 = vmatpush1.msra.mxu0 0.0
    %1103 = vmatprep.subr.mxu0 0.0
    %1104 = vmatpush1.msra.mxu0 0.0
    %1105 = vmatprep.subr.mxu0 0.0
    %1106 = vmatpush1.msra.mxu0 0.0
    %1107 = vmatprep.subr.mxu0 0.0
    %1108 = vmatpush1.msra.mxu0 0.0
    %1109 = vmatprep.subr.mxu0 0.0
    %1110 = vmatpush1.msra.mxu0 0.0
    %1111 = vmatprep.subr.mxu0 0.0
    %1112 = vmatpush1.msra.mxu0 0.0
    %1113 = vmatprep.subr.mxu0 0.0
    %1114 = vmatpush1.msra.mxu0 0.0
    %1115 = vmatprep.subr.mxu0 0.0
    %1116 = vmatpush1.msra.mxu0 0.0
    %1117 = vmatprep.subr.mxu0 0.0
    %1118 = vmatpush1.msra.mxu0 0.0
    %1119 = vmatprep.subr.mxu0 0.0
    %1120 = vmatpush1.msra.mxu0 0.0
    %1121 = vmatprep.subr.mxu0 0.0
    %1122 = vmatpush1.msra.mxu0 0.0
    %1123 = vmatprep.subr.mxu0 0.0
    %1124 = vmatpush1.msra.mxu0 0.0
    %1125 = vmatprep.subr.mxu0 0.0
    %1126 = vmatpush1.msra.mxu0 0.0
    %1127 = vmatprep.subr.mxu0 0.0
    %1128 = vmatpush1.msra.mxu0 0.0
    %1129 = vmatprep.subr.mxu0 0.0
    %1130 = vmatpush1.msra.mxu0 0.0
    %1131 = vmatprep.subr.mxu0 0.0
    %1132 = vmatpush1.msra.mxu0 0.0
    %1133 = vmatprep.subr.mxu0 0.0
    %1134 = vmatpush1.msra.mxu0 0.0
    %1135 = vmatprep.mubr.f32.mxu0 0.0
    %1136 = vmatmul.mubr.f32.gmra.mrb[0].mxu0 %v1069
    %v1137 = vpop.f32.mrb[0].mxu0
    %v1138 = vadd.f32 0.0, %v1137
    %v1139 = vpop.f32.mrb[0].mxu0
    %1140 = vdwg.mxu0
    %1141 = vrot.lane.b32.xlu0 %v858, 64
    %v1142 = vpop.permute.xlu0 %1141
    %1143 = vrot.lane.b32.xlu0 %v863, 64
    %v1144 = vpop.permute.xlu0 %1143
    %1145 = vrot.lane.b32.xlu0 %v868, 64
    %v1146 = vpop.permute.xlu0 %1145
    %v1151 = vsel %vm1036, %v1058, 0
    %1153 = vmatprep.subr.mxu0 0.0
    %1154 = vmatpush1.msra.mxu0 %v1142
    %1155 = vmatprep.subr.mxu0 0.0
    %1156 = vmatpush1.msra.mxu0 %v1144
    %1157 = vmatprep.subr.mxu0 0.0
    %1158 = vmatpush1.msra.mxu0 %v1146
    %1159 = vmatprep.subr.mxu0 0.0
    %1160 = vmatpush1.msra.mxu0 0.0
    %1161 = vmatprep.subr.mxu0 0.0
    %1162 = vmatpush1.msra.mxu0 0.0
    %1163 = vmatprep.subr.mxu0 0.0
    %1164 = vmatpush1.msra.mxu0 0.0
    %1165 = vmatprep.subr.mxu0 0.0
    %1166 = vmatpush1.msra.mxu0 0.0
    %1167 = vmatprep.subr.mxu0 0.0
    %1168 = vmatpush1.msra.mxu0 0.0
    %1169 = vmatprep.subr.mxu0 0.0
    %1170 = vmatpush1.msra.mxu0 0.0
    %1171 = vmatprep.subr.mxu0 0.0
    %1172 = vmatpush1.msra.mxu0 0.0
    %1173 = vmatprep.subr.mxu0 0.0
    %1174 = vmatpush1.msra.mxu0 0.0
    %1175 = vmatprep.subr.mxu0 0.0
    %1176 = vmatpush1.msra.mxu0 0.0
    %1177 = vmatprep.subr.mxu0 0.0
    %1178 = vmatpush1.msra.mxu0 0.0
    %1179 = vmatprep.subr.mxu0 0.0
    %1180 = vmatpush1.msra.mxu0 0.0
    %1181 = vmatprep.subr.mxu0 0.0
    %1182 = vmatpush1.msra.mxu0 0.0
    %1183 = vmatprep.subr.mxu0 0.0
    %1184 = vmatpush1.msra.mxu0 0.0
    %1185 = vmatprep.subr.mxu0 0.0
    %1186 = vmatpush1.msra.mxu0 0.0
    %1187 = vmatprep.subr.mxu0 0.0
    %1188 = vmatpush1.msra.mxu0 0.0
    %1189 = vmatprep.subr.mxu0 0.0
    %1190 = vmatpush1.msra.mxu0 0.0
    %1191 = vmatprep.subr.mxu0 0.0
    %1192 = vmatpush1.msra.mxu0 0.0
    %1193 = vmatprep.subr.mxu0 0.0
    %1194 = vmatpush1.msra.mxu0 0.0
    %1195 = vmatprep.subr.mxu0 0.0
    %1196 = vmatpush1.msra.mxu0 0.0
    %1197 = vmatprep.subr.mxu0 0.0
    %1198 = vmatpush1.msra.mxu0 0.0
    %1199 = vmatprep.subr.mxu0 0.0
    %1200 = vmatpush1.msra.mxu0 0.0
    %1201 = vmatprep.subr.mxu0 0.0
    %1202 = vmatpush1.msra.mxu0 0.0
    %1203 = vmatprep.subr.mxu0 0.0
    %1204 = vmatpush1.msra.mxu0 0.0
    %1205 = vmatprep.subr.mxu0 0.0
    %1206 = vmatpush1.msra.mxu0 0.0
    %1207 = vmatprep.subr.mxu0 0.0
    %1208 = vmatpush1.msra.mxu0 0.0
    %1209 = vmatprep.subr.mxu0 0.0
    %1210 = vmatpush1.msra.mxu0 0.0
    %1211 = vmatprep.subr.mxu0 0.0
    %1212 = vmatpush1.msra.mxu0 0.0
    %1213 = vmatprep.subr.mxu0 0.0
    %1214 = vmatpush1.msra.mxu0 0.0
    %1215 = vmatprep.subr.mxu0 0.0
    %1216 = vmatpush1.msra.mxu0 0.0
    %1217 = vmatprep.mubr.f32.mxu0 0.0
    %1218 = vmatmul.mubr.f32.gmra.mrb[0].mxu0 %v1151
    %v1219 = vpop.f32.mrb[0].mxu0
    %v1220 = vadd.f32 0.0, %v1219
    %v1221 = vpop.f32.mrb[0].mxu0
    %1222 = vdwg.mxu0
    %1223 = vrot.lane.b32.xlu0 %v748, 112
    %v1224 = vpop.permute.xlu0 %1223
    %1225 = vrot.lane.b32.xlu0 %v843, 112
    %v1226 = vpop.permute.xlu0 %1225
    %1227 = vrot.lane.b32.xlu0 %v848, 112
    %v1228 = vpop.permute.xlu0 %1227
    %1229 = vrot.lane.b32.xlu0 %v853, 112
    %v1230 = vpop.permute.xlu0 %1229
    %v1231 = vsel %vm871, %v1224, 0
    %v1233 = vsel %vm871, %v1226, 0
    %v1235 = vsel %vm871, %v1228, 0
    %v1237 = vsel %vm871, %v1230, 0
    %1239 = vmatprep.subr.mxu0 0.0
    %1240 = vmatpush1.xpose.msra.mxu0 %v1233
    %1241 = vmatprep.subr.mxu0 0.0
    %1242 = vmatpush1.xpose.msra.mxu0 %v1235
    %1243 = vmatprep.subr.mxu0 0.0
    %1244 = vmatpush1.xpose.msra.mxu0 %v1237
    %1245 = vmatprep.subr.mxu0 0.0
    %1246 = vmatpush1.xpose.msra.mxu0 0.0
    %1247 = vmatprep.subr.mxu0 0.0
    %1248 = vmatpush1.xpose.msra.mxu0 0.0
    %1249 = vmatprep.subr.mxu0 0.0
    %1250 = vmatpush1.xpose.msra.mxu0 0.0
    %1251 = vmatprep.subr.mxu0 0.0
    %1252 = vmatpush1.xpose.msra.mxu0 0.0
    %1253 = vmatprep.subr.mxu0 0.0
    %1254 = vmatpush1.xpose.msra.mxu0 0.0
    %1255 = vmatprep.subr.mxu0 0.0
    %1256 = vmatpush1.xpose.msra.mxu0 0.0
    %1257 = vmatprep.subr.mxu0 0.0
    %1258 = vmatpush1.xpose.msra.mxu0 0.0
    %1259 = vmatprep.subr.mxu0 0.0
    %1260 = vmatpush1.xpose.msra.mxu0 0.0
    %1261 = vmatprep.subr.mxu0 0.0
    %1262 = vmatpush1.xpose.msra.mxu0 0.0
    %1263 = vmatprep.subr.mxu0 0.0
    %1264 = vmatpush1.xpose.msra.mxu0 0.0
    %1265 = vmatprep.subr.mxu0 0.0
    %1266 = vmatpush1.xpose.msra.mxu0 0.0
    %1267 = vmatprep.subr.mxu0 0.0
    %1268 = vmatpush1.xpose.msra.mxu0 0.0
    %1269 = vmatprep.subr.mxu0 0.0
    %1270 = vmatpush1.xpose.msra.mxu0 0.0
    %1271 = vmatprep.subr.mxu0 0.0
    %1272 = vmatpush1.xpose.msra.mxu0 0.0
    %1273 = vmatprep.subr.mxu0 0.0
    %1274 = vmatpush1.xpose.msra.mxu0 0.0
    %1275 = vmatprep.subr.mxu0 0.0
    %1276 = vmatpush1.xpose.msra.mxu0 0.0
    %1277 = vmatprep.subr.mxu0 0.0
    %1278 = vmatpush1.xpose.msra.mxu0 0.0
    %1279 = vmatprep.subr.mxu0 0.0
    %1280 = vmatpush1.xpose.msra.mxu0 0.0
    %1281 = vmatprep.subr.mxu0 0.0
    %1282 = vmatpush1.xpose.msra.mxu0 0.0
    %1283 = vmatprep.subr.mxu0 0.0
    %1284 = vmatpush1.xpose.msra.mxu0 0.0
    %1285 = vmatprep.subr.mxu0 0.0
    %1286 = vmatpush1.xpose.msra.mxu0 0.0
    %1287 = vmatprep.subr.mxu0 0.0
    %1288 = vmatpush1.xpose.msra.mxu0 0.0
    %1289 = vmatprep.subr.mxu0 0.0
    %1290 = vmatpush1.xpose.msra.mxu0 0.0
    %1291 = vmatprep.subr.mxu0 0.0
    %1292 = vmatpush1.xpose.msra.mxu0 0.0
    %1293 = vmatprep.subr.mxu0 0.0
    %1294 = vmatpush1.xpose.msra.mxu0 0.0
    %1295 = vmatprep.subr.mxu0 0.0
    %1296 = vmatpush1.xpose.msra.mxu0 0.0
    %1297 = vmatprep.subr.mxu0 0.0
    %1298 = vmatpush1.xpose.msra.mxu0 0.0
    %1299 = vmatprep.subr.mxu0 0.0
    %1300 = vmatpush1.xpose.msra.mxu0 0.0
    %1301 = vmatprep.subr.mxu0 0.0
    %1302 = vmatpush1.xpose.msra.mxu0 0.0
    %1303 = vmatprep.mubr.f32.mxu0 0.0
    %1304 = vmatmul.mubr.f32.gmra.mrb[0].mxu0 %v1231
    %v1305 = vpop.f32.mrb[0].mxu0
    %v1306 = vadd.f32 0.0, %v1305
    %v1307 = vpop.f32.mrb[0].mxu0
    %1308 = vdwg.mxu0
    %1309 = vrot.lane.b32.xlu0 %v753, 112
    %v1310 = vpop.permute.xlu0 %1309
    %1311 = vrot.lane.b32.xlu0 %v858, 112
    %v1312 = vpop.permute.xlu0 %1311
    %1313 = vrot.lane.b32.xlu0 %v863, 112
    %v1314 = vpop.permute.xlu0 %1313
    %1315 = vrot.lane.b32.xlu0 %v868, 112
    %v1316 = vpop.permute.xlu0 %1315
    %v1317 = vsel %vm871, %v1310, 0
    %v1319 = vsel %vm871, %v1312, 0
    %v1321 = vsel %vm871, %v1314, 0
    %v1323 = vsel %vm871, %v1316, 0
    %1325 = vmatprep.subr.mxu0 0.0
    %1326 = vmatpush1.xpose.msra.mxu0 %v1319
    %1327 = vmatprep.subr.mxu0 0.0
    %1328 = vmatpush1.xpose.msra.mxu0 %v1321
    %1329 = vmatprep.subr.mxu0 0.0
    %1330 = vmatpush1.xpose.msra.mxu0 %v1323
    %1331 = vmatprep.subr.mxu0 0.0
    %1332 = vmatpush1.xpose.msra.mxu0 0.0
    %1333 = vmatprep.subr.mxu0 0.0
    %1334 = vmatpush1.xpose.msra.mxu0 0.0
    %1335 = vmatprep.subr.mxu0 0.0
    %1336 = vmatpush1.xpose.msra.mxu0 0.0
    %1337 = vmatprep.subr.mxu0 0.0
    %1338 = vmatpush1.xpose.msra.mxu0 0.0
    %1339 = vmatprep.subr.mxu0 0.0
    %1340 = vmatpush1.xpose.msra.mxu0 0.0
    %1341 = vmatprep.subr.mxu0 0.0
    %1342 = vmatpush1.xpose.msra.mxu0 0.0
    %1343 = vmatprep.subr.mxu0 0.0
    %1344 = vmatpush1.xpose.msra.mxu0 0.0
    %1345 = vmatprep.subr.mxu0 0.0
    %1346 = vmatpush1.xpose.msra.mxu0 0.0
    %1347 = vmatprep.subr.mxu0 0.0
    %1348 = vmatpush1.xpose.msra.mxu0 0.0
    %1349 = vmatprep.subr.mxu0 0.0
    %1350 = vmatpush1.xpose.msra.mxu0 0.0
    %1351 = vmatprep.subr.mxu0 0.0
    %1352 = vmatpush1.xpose.msra.mxu0 0.0
    %1353 = vmatprep.subr.mxu0 0.0
    %1354 = vmatpush1.xpose.msra.mxu0 0.0
    %1355 = vmatprep.subr.mxu0 0.0
    %1356 = vmatpush1.xpose.msra.mxu0 0.0
    %1357 = vmatprep.subr.mxu0 0.0
    %1358 = vmatpush1.xpose.msra.mxu0 0.0
    %1359 = vmatprep.subr.mxu0 0.0
    %1360 = vmatpush1.xpose.msra.mxu0 0.0
    %1361 = vmatprep.subr.mxu0 0.0
    %1362 = vmatpush1.xpose.msra.mxu0 0.0
    %1363 = vmatprep.subr.mxu0 0.0
    %1364 = vmatpush1.xpose.msra.mxu0 0.0
    %1365 = vmatprep.subr.mxu0 0.0
    %1366 = vmatpush1.xpose.msra.mxu0 0.0
    %1367 = vmatprep.subr.mxu0 0.0
    %1368 = vmatpush1.xpose.msra.mxu0 0.0
    %1369 = vmatprep.subr.mxu0 0.0
    %1370 = vmatpush1.xpose.msra.mxu0 0.0
    %1371 = vmatprep.subr.mxu0 0.0
    %1372 = vmatpush1.xpose.msra.mxu0 0.0
    %1373 = vmatprep.subr.mxu0 0.0
    %1374 = vmatpush1.xpose.msra.mxu0 0.0
    %1375 = vmatprep.subr.mxu0 0.0
    %1376 = vmatpush1.xpose.msra.mxu0 0.0
    %1377 = vmatprep.subr.mxu0 0.0
    %1378 = vmatpush1.xpose.msra.mxu0 0.0
    %1379 = vmatprep.subr.mxu0 0.0
    %1380 = vmatpush1.xpose.msra.mxu0 0.0
    %1381 = vmatprep.subr.mxu0 0.0
    %1382 = vmatpush1.xpose.msra.mxu0 0.0
    %1383 = vmatprep.subr.mxu0 0.0
    %1384 = vmatpush1.xpose.msra.mxu0 0.0
    %1385 = vmatprep.subr.mxu0 0.0
    %1386 = vmatpush1.xpose.msra.mxu0 0.0
    %1387 = vmatprep.subr.mxu0 0.0
    %1388 = vmatpush1.xpose.msra.mxu0 0.0
    %1389 = vmatprep.mubr.f32.mxu0 0.0
    %1390 = vmatmul.mubr.f32.gmra.mrb[0].mxu0 %v1317
    %v1391 = vpop.f32.mrb[0].mxu0
    %v1392 = vadd.f32 0.0, %v1391
    %v1393 = vpop.f32.mrb[0].mxu0
    %1394 = vdwg.mxu0
    %v1395 = vsel %vm1036, %v1306, -inf
    %1396 = vmax.xlane.f32.xlu0 %v1395
    %v1397 = vpop.xlane.xlu0 %1396
    %v1398 = vsel %vm1036, %v1392, -inf
    %1399 = vmax.xlane.f32.xlu0 %v1398
    %v1400 = vpop.xlane.xlu0 %1399
    %v1401 = vsub.f32 %v1306, %v1397
    %v1402 = vsub.f32 %v1392, %v1400
    %v1403 = vmul.f32 %v1401, 1.442695
    %v1404 = vpow.pop %v1403
    %v1405 = vmul.f32 %v1402, 1.442695
    %v1406 = vpow.pop %v1405
    %v1407 = vsel %vm1036, %v1404, 0.0
    %1408 = vadd.xlane.f32.xlu0 %v1407
    %v1409 = vpop.xlane.xlu0 %1408
    %v1410 = vsel %vm1036, %v1406, 0.0
    %1411 = vadd.xlane.f32.xlu0 %v1410
    %v1412 = vpop.xlane.xlu0 %1411
    %v1413 = vrcp.pop %v1409
    %v1414 = vmul.f32 %v1404, %v1413
    %v1415 = vrcp.pop %v1412
    %v1416 = vmul.f32 %v1406, %v1415
    %1417 = vrot.lane.b32.xlu0 %v843, 48
    %v1418 = vpop.permute.xlu0 %1417
    %1419 = vrot.lane.b32.xlu0 %v848, 48
    %v1420 = vpop.permute.xlu0 %1419
    %1421 = vrot.lane.b32.xlu0 %v853, 48
    %v1422 = vpop.permute.xlu0 %1421
    %v1427 = vsel %vm1036, %v1414, 0
    %1429 = vmatprep.subr.mxu0 0.0
    %1430 = vmatpush1.msra.mxu0 %v1418
    %1431 = vmatprep.subr.mxu0 0.0
    %1432 = vmatpush1.msra.mxu0 %v1420
    %1433 = vmatprep.subr.mxu0 0.0
    %1434 = vmatpush1.msra.mxu0 %v1422
    %1435 = vmatprep.subr.mxu0 0.0
    %1436 = vmatpush1.msra.mxu0 0.0
    %1437 = vmatprep.subr.mxu0 0.0
    %1438 = vmatpush1.msra.mxu0 0.0
    %1439 = vmatprep.subr.mxu0 0.0
    %1440 = vmatpush1.msra.mxu0 0.0
    %1441 = vmatprep.subr.mxu0 0.0
    %1442 = vmatpush1.msra.mxu0 0.0
    %1443 = vmatprep.subr.mxu0 0.0
    %1444 = vmatpush1.msra.mxu0 0.0
    %1445 = vmatprep.subr.mxu0 0.0
    %1446 = vmatpush1.msra.mxu0 0.0
    %1447 = vmatprep.subr.mxu0 0.0
    %1448 = vmatpush1.msra.mxu0 0.0
    %1449 = vmatprep.subr.mxu0 0.0
    %1450 = vmatpush1.msra.mxu0 0.0
    %1451 = vmatprep.subr.mxu0 0.0
    %1452 = vmatpush1.msra.mxu0 0.0
    %1453 = vmatprep.subr.mxu0 0.0
    %1454 = vmatpush1.msra.mxu0 0.0
    %1455 = vmatprep.subr.mxu0 0.0
    %1456 = vmatpush1.msra.mxu0 0.0
    %1457 = vmatprep.subr.mxu0 0.0
    %1458 = vmatpush1.msra.mxu0 0.0
    %1459 = vmatprep.subr.mxu0 0.0
    %1460 = vmatpush1.msra.mxu0 0.0
    %1461 = vmatprep.subr.mxu0 0.0
    %1462 = vmatpush1.msra.mxu0 0.0
    %1463 = vmatprep.subr.mxu0 0.0
    %1464 = vmatpush1.msra.mxu0 0.0
    %1465 = vmatprep.subr.mxu0 0.0
    %1466 = vmatpush1.msra.mxu0 0.0
    %1467 = vmatprep.subr.mxu0 0.0
    %1468 = vmatpush1.msra.mxu0 0.0
    %1469 = vmatprep.subr.mxu0 0.0
    %1470 = vmatpush1.msra.mxu0 0.0
    %1471 = vmatprep.subr.mxu0 0.0
    %1472 = vmatpush1.msra.mxu0 0.0
    %1473 = vmatprep.subr.mxu0 0.0
    %1474 = vmatpush1.msra.mxu0 0.0
    %1475 = vmatprep.subr.mxu0 0.0
    %1476 = vmatpush1.msra.mxu0 0.0
    %1477 = vmatprep.subr.mxu0 0.0
    %1478 = vmatpush1.msra.mxu0 0.0
    %1479 = vmatprep.subr.mxu0 0.0
    %1480 = vmatpush1.msra.mxu0 0.0
    %1481 = vmatprep.subr.mxu0 0.0
    %1482 = vmatpush1.msra.mxu0 0.0
    %1483 = vmatprep.subr.mxu0 0.0
    %1484 = vmatpush1.msra.mxu0 0.0
    %1485 = vmatprep.subr.mxu0 0.0
    %1486 = vmatpush1.msra.mxu0 0.0
    %1487 = vmatprep.subr.mxu0 0.0
    %1488 = vmatpush1.msra.mxu0 0.0
    %1489 = vmatprep.subr.mxu0 0.0
    %1490 = vmatpush1.msra.mxu0 0.0
    %1491 = vmatprep.subr.mxu0 0.0
    %1492 = vmatpush1.msra.mxu0 0.0
    %1493 = vmatprep.mubr.f32.mxu0 0.0
    %1494 = vmatmul.mubr.f32.gmra.mrb[0].mxu0 %v1427
    %v1495 = vpop.f32.mrb[0].mxu0
    %v1496 = vadd.f32 0.0, %v1495
    %v1497 = vpop.f32.mrb[0].mxu0
    %1498 = vdwg.mxu0
    %1499 = vrot.lane.b32.xlu0 %v858, 48
    %v1500 = vpop.permute.xlu0 %1499
    %1501 = vrot.lane.b32.xlu0 %v863, 48
    %v1502 = vpop.permute.xlu0 %1501
    %1503 = vrot.lane.b32.xlu0 %v868, 48
    %v1504 = vpop.permute.xlu0 %1503
    %v1509 = vsel %vm1036, %v1416, 0
    %1511 = vmatprep.subr.mxu0 0.0
    %1512 = vmatpush1.msra.mxu0 %v1500
    %1513 = vmatprep.subr.mxu0 0.0
    %1514 = vmatpush1.msra.mxu0 %v1502
    %1515 = vmatprep.subr.mxu0 0.0
    %1516 = vmatpush1.msra.mxu0 %v1504
    %1517 = vmatprep.subr.mxu0 0.0
    %1518 = vmatpush1.msra.mxu0 0.0
    %1519 = vmatprep.subr.mxu0 0.0
    %1520 = vmatpush1.msra.mxu0 0.0
    %1521 = vmatprep.subr.mxu0 0.0
    %1522 = vmatpush1.msra.mxu0 0.0
    %1523 = vmatprep.subr.mxu0 0.0
    %1524 = vmatpush1.msra.mxu0 0.0
    %1525 = vmatprep.subr.mxu0 0.0
    %1526 = vmatpush1.msra.mxu0 0.0
    %1527 = vmatprep.subr.mxu0 0.0
    %1528 = vmatpush1.msra.mxu0 0.0
    %1529 = vmatprep.subr.mxu0 0.0
    %1530 = vmatpush1.msra.mxu0 0.0
    %1531 = vmatprep.subr.mxu0 0.0
    %1532 = vmatpush1.msra.mxu0 0.0
    %1533 = vmatprep.subr.mxu0 0.0
    %1534 = vmatpush1.msra.mxu0 0.0
    %1535 = vmatprep.subr.mxu0 0.0
    %1536 = vmatpush1.msra.mxu0 0.0
    %1537 = vmatprep.subr.mxu0 0.0
    %1538 = vmatpush1.msra.mxu0 0.0
    %1539 = vmatprep.subr.mxu0 0.0
    %1540 = vmatpush1.msra.mxu0 0.0
    %1541 = vmatprep.subr.mxu0 0.0
    %1542 = vmatpush1.msra.mxu0 0.0
    %1543 = vmatprep.subr.mxu0 0.0
    %1544 = vmatpush1.msra.mxu0 0.0
    %1545 = vmatprep.subr.mxu0 0.0
    %1546 = vmatpush1.msra.mxu0 0.0
    %1547 = vmatprep.subr.mxu0 0.0
    %1548 = vmatpush1.msra.mxu0 0.0
    %1549 = vmatprep.subr.mxu0 0.0
    %1550 = vmatpush1.msra.mxu0 0.0
    %1551 = vmatprep.subr.mxu0 0.0
    %1552 = vmatpush1.msra.mxu0 0.0
    %1553 = vmatprep.subr.mxu0 0.0
    %1554 = vmatpush1.msra.mxu0 0.0
    %1555 = vmatprep.subr.mxu0 0.0
    %1556 = vmatpush1.msra.mxu0 0.0
    %1557 = vmatprep.subr.mxu0 0.0
    %1558 = vmatpush1.msra.mxu0 0.0
    %1559 = vmatprep.subr.mxu0 0.0
    %1560 = vmatpush1.msra.mxu0 0.0
    %1561 = vmatprep.subr.mxu0 0.0
    %1562 = vmatpush1.msra.mxu0 0.0
    %1563 = vmatprep.subr.mxu0 0.0
    %1564 = vmatpush1.msra.mxu0 0.0
    %1565 = vmatprep.subr.mxu0 0.0
    %1566 = vmatpush1.msra.mxu0 0.0
    %1567 = vmatprep.subr.mxu0 0.0
    %1568 = vmatpush1.msra.mxu0 0.0
    %1569 = vmatprep.subr.mxu0 0.0
    %1570 = vmatpush1.msra.mxu0 0.0
    %1571 = vmatprep.subr.mxu0 0.0
    %1572 = vmatpush1.msra.mxu0 0.0
    %1573 = vmatprep.subr.mxu0 0.0
    %1574 = vmatpush1.msra.mxu0 0.0
    %1575 = vmatprep.mubr.f32.mxu0 0.0
    %1576 = vmatmul.mubr.f32.gmra.mrb[0].mxu0 %v1509
    %v1577 = vpop.f32.mrb[0].mxu0
    %v1578 = vadd.f32 0.0, %v1577
    %v1579 = vpop.f32.mrb[0].mxu0
    %1580 = vdwg.mxu0
    %1581 = vrot.lane.b32.xlu0 %v748, 96
    %v1582 = vpop.permute.xlu0 %1581
    %1583 = vrot.lane.b32.xlu0 %v843, 96
    %v1584 = vpop.permute.xlu0 %1583
    %1585 = vrot.lane.b32.xlu0 %v848, 96
    %v1586 = vpop.permute.xlu0 %1585
    %1587 = vrot.lane.b32.xlu0 %v853, 96
    %v1588 = vpop.permute.xlu0 %1587
    %v1589 = vsel %vm871, %v1582, 0
    %v1591 = vsel %vm871, %v1584, 0
    %v1593 = vsel %vm871, %v1586, 0
    %v1595 = vsel %vm871, %v1588, 0
    %1597 = vmatprep.subr.mxu0 0.0
    %1598 = vmatpush1.xpose.msra.mxu0 %v1591
    %1599 = vmatprep.subr.mxu0 0.0
    %1600 = vmatpush1.xpose.msra.mxu0 %v1593
    %1601 = vmatprep.subr.mxu0 0.0
    %1602 = vmatpush1.xpose.msra.mxu0 %v1595
    %1603 = vmatprep.subr.mxu0 0.0
    %1604 = vmatpush1.xpose.msra.mxu0 0.0
    %1605 = vmatprep.subr.mxu0 0.0
    %1606 = vmatpush1.xpose.msra.mxu0 0.0
    %1607 = vmatprep.subr.mxu0 0.0
    %1608 = vmatpush1.xpose.msra.mxu0 0.0
    %1609 = vmatprep.subr.mxu0 0.0
    %1610 = vmatpush1.xpose.msra.mxu0 0.0
    %1611 = vmatprep.subr.mxu0 0.0
    %1612 = vmatpush1.xpose.msra.mxu0 0.0
    %1613 = vmatprep.subr.mxu0 0.0
    %1614 = vmatpush1.xpose.msra.mxu0 0.0
    %1615 = vmatprep.subr.mxu0 0.0
    %1616 = vmatpush1.xpose.msra.mxu0 0.0
    %1617 = vmatprep.subr.mxu0 0.0
    %1618 = vmatpush1.xpose.msra.mxu0 0.0
    %1619 = vmatprep.subr.mxu0 0.0
    %1620 = vmatpush1.xpose.msra.mxu0 0.0
    %1621 = vmatprep.subr.mxu0 0.0
    %1622 = vmatpush1.xpose.msra.mxu0 0.0
    %1623 = vmatprep.subr.mxu0 0.0
    %1624 = vmatpush1.xpose.msra.mxu0 0.0
    %1625 = vmatprep.subr.mxu0 0.0
    %1626 = vmatpush1.xpose.msra.mxu0 0.0
    %1627 = vmatprep.subr.mxu0 0.0
    %1628 = vmatpush1.xpose.msra.mxu0 0.0
    %1629 = vmatprep.subr.mxu0 0.0
    %1630 = vmatpush1.xpose.msra.mxu0 0.0
    %1631 = vmatprep.subr.mxu0 0.0
    %1632 = vmatpush1.xpose.msra.mxu0 0.0
    %1633 = vmatprep.subr.mxu0 0.0
    %1634 = vmatpush1.xpose.msra.mxu0 0.0
    %1635 = vmatprep.subr.mxu0 0.0
    %1636 = vmatpush1.xpose.msra.mxu0 0.0
    %1637 = vmatprep.subr.mxu0 0.0
    %1638 = vmatpush1.xpose.msra.mxu0 0.0
    %1639 = vmatprep.subr.mxu0 0.0
    %1640 = vmatpush1.xpose.msra.mxu0 0.0
    %1641 = vmatprep.subr.mxu0 0.0
    %1642 = vmatpush1.xpose.msra.mxu0 0.0
    %1643 = vmatprep.subr.mxu0 0.0
    %1644 = vmatpush1.xpose.msra.mxu0 0.0
    %1645 = vmatprep.subr.mxu0 0.0
    %1646 = vmatpush1.xpose.msra.mxu0 0.0
    %1647 = vmatprep.subr.mxu0 0.0
    %1648 = vmatpush1.xpose.msra.mxu0 0.0
    %1649 = vmatprep.subr.mxu0 0.0
    %1650 = vmatpush1.xpose.msra.mxu0 0.0
    %1651 = vmatprep.subr.mxu0 0.0
    %1652 = vmatpush1.xpose.msra.mxu0 0.0
    %1653 = vmatprep.subr.mxu0 0.0
    %1654 = vmatpush1.xpose.msra.mxu0 0.0
    %1655 = vmatprep.subr.mxu0 0.0
    %1656 = vmatpush1.xpose.msra.mxu0 0.0
    %1657 = vmatprep.subr.mxu0 0.0
    %1658 = vmatpush1.xpose.msra.mxu0 0.0
    %1659 = vmatprep.subr.mxu0 0.0
    %1660 = vmatpush1.xpose.msra.mxu0 0.0
    %1661 = vmatprep.mubr.f32.mxu0 0.0
    %1662 = vmatmul.mubr.f32.gmra.mrb[0].mxu0 %v1589
    %v1663 = vpop.f32.mrb[0].mxu0
    %v1664 = vadd.f32 0.0, %v1663
    %v1665 = vpop.f32.mrb[0].mxu0
    %1666 = vdwg.mxu0
    %1667 = vrot.lane.b32.xlu0 %v753, 96
    %v1668 = vpop.permute.xlu0 %1667
    %1669 = vrot.lane.b32.xlu0 %v858, 96
    %v1670 = vpop.permute.xlu0 %1669
    %1671 = vrot.lane.b32.xlu0 %v863, 96
    %v1672 = vpop.permute.xlu0 %1671
    %1673 = vrot.lane.b32.xlu0 %v868, 96
    %v1674 = vpop.permute.xlu0 %1673
    %v1675 = vsel %vm871, %v1668, 0
    %v1677 = vsel %vm871, %v1670, 0
    %v1679 = vsel %vm871, %v1672, 0
    %v1681 = vsel %vm871, %v1674, 0
    %1683 = vmatprep.subr.mxu0 0.0
    %1684 = vmatpush1.xpose.msra.mxu0 %v1677
    %1685 = vmatprep.subr.mxu0 0.0
    %1686 = vmatpush1.xpose.msra.mxu0 %v1679
    %1687 = vmatprep.subr.mxu0 0.0
    %1688 = vmatpush1.xpose.msra.mxu0 %v1681
    %1689 = vmatprep.subr.mxu0 0.0
    %1690 = vmatpush1.xpose.msra.mxu0 0.0
    %1691 = vmatprep.subr.mxu0 0.0
    %1692 = vmatpush1.xpose.msra.mxu0 0.0
    %1693 = vmatprep.subr.mxu0 0.0
    %1694 = vmatpush1.xpose.msra.mxu0 0.0
    %1695 = vmatprep.subr.mxu0 0.0
    %1696 = vmatpush1.xpose.msra.mxu0 0.0
    %1697 = vmatprep.subr.mxu0 0.0
    %1698 = vmatpush1.xpose.msra.mxu0 0.0
    %1699 = vmatprep.subr.mxu0 0.0
    %1700 = vmatpush1.xpose.msra.mxu0 0.0
    %1701 = vmatprep.subr.mxu0 0.0
    %1702 = vmatpush1.xpose.msra.mxu0 0.0
    %1703 = vmatprep.subr.mxu0 0.0
    %1704 = vmatpush1.xpose.msra.mxu0 0.0
    %1705 = vmatprep.subr.mxu0 0.0
    %1706 = vmatpush1.xpose.msra.mxu0 0.0
    %1707 = vmatprep.subr.mxu0 0.0
    %1708 = vmatpush1.xpose.msra.mxu0 0.0
    %1709 = vmatprep.subr.mxu0 0.0
    %1710 = vmatpush1.xpose.msra.mxu0 0.0
    %1711 = vmatprep.subr.mxu0 0.0
    %1712 = vmatpush1.xpose.msra.mxu0 0.0
    %1713 = vmatprep.subr.mxu0 0.0
    %1714 = vmatpush1.xpose.msra.mxu0 0.0
    %1715 = vmatprep.subr.mxu0 0.0
    %1716 = vmatpush1.xpose.msra.mxu0 0.0
    %1717 = vmatprep.subr.mxu0 0.0
    %1718 = vmatpush1.xpose.msra.mxu0 0.0
    %1719 = vmatprep.subr.mxu0 0.0
    %1720 = vmatpush1.xpose.msra.mxu0 0.0
    %1721 = vmatprep.subr.mxu0 0.0
    %1722 = vmatpush1.xpose.msra.mxu0 0.0
    %1723 = vmatprep.subr.mxu0 0.0
    %1724 = vmatpush1.xpose.msra.mxu0 0.0
    %1725 = vmatprep.subr.mxu0 0.0
    %1726 = vmatpush1.xpose.msra.mxu0 0.0
    %1727 = vmatprep.subr.mxu0 0.0
    %1728 = vmatpush1.xpose.msra.mxu0 0.0
    %1729 = vmatprep.subr.mxu0 0.0
    %1730 = vmatpush1.xpose.msra.mxu0 0.0
    %1731 = vmatprep.subr.mxu0 0.0
    %1732 = vmatpush1.xpose.msra.mxu0 0.0
    %1733 = vmatprep.subr.mxu0 0.0
    %1734 = vmatpush1.xpose.msra.mxu0 0.0
    %1735 = vmatprep.subr.mxu0 0.0
    %1736 = vmatpush1.xpose.msra.mxu0 0.0
    %1737 = vmatprep.subr.mxu0 0.0
    %1738 = vmatpush1.xpose.msra.mxu0 0.0
    %1739 = vmatprep.subr.mxu0 0.0
    %1740 = vmatpush1.xpose.msra.mxu0 0.0
    %1741 = vmatprep.subr.mxu0 0.0
    %1742 = vmatpush1.xpose.msra.mxu0 0.0
    %1743 = vmatprep.subr.mxu0 0.0
    %1744 = vmatpush1.xpose.msra.mxu0 0.0
    %1745 = vmatprep.subr.mxu0 0.0
    %1746 = vmatpush1.xpose.msra.mxu0 0.0
    %1747 = vmatprep.mubr.f32.mxu0 0.0
    %1748 = vmatmul.mubr.f32.gmra.mrb[0].mxu0 %v1675
    %v1749 = vpop.f32.mrb[0].mxu0
    %v1750 = vadd.f32 0.0, %v1749
    %v1751 = vpop.f32.mrb[0].mxu0
    %1752 = vdwg.mxu0
    %v1753 = vsel %vm1036, %v1664, -inf
    %1754 = vmax.xlane.f32.xlu0 %v1753
    %v1755 = vpop.xlane.xlu0 %1754
    %v1756 = vsel %vm1036, %v1750, -inf
    %1757 = vmax.xlane.f32.xlu0 %v1756
    %v1758 = vpop.xlane.xlu0 %1757
    %v1759 = vsub.f32 %v1664, %v1755
    %v1760 = vsub.f32 %v1750, %v1758
    %v1761 = vmul.f32 %v1759, 1.442695
    %v1762 = vpow.pop %v1761
    %v1763 = vmul.f32 %v1760, 1.442695
    %v1764 = vpow.pop %v1763
    %v1765 = vsel %vm1036, %v1762, 0.0
    %1766 = vadd.xlane.f32.xlu0 %v1765
    %v1767 = vpop.xlane.xlu0 %1766
    %v1768 = vsel %vm1036, %v1764, 0.0
    %1769 = vadd.xlane.f32.xlu0 %v1768
    %v1770 = vpop.xlane.xlu0 %1769
    %v1771 = vrcp.pop %v1767
    %v1772 = vmul.f32 %v1762, %v1771
    %v1773 = vrcp.pop %v1770
    %v1774 = vmul.f32 %v1764, %v1773
    %1775 = vrot.lane.b32.xlu0 %v843, 32
    %v1776 = vpop.permute.xlu0 %1775
    %1777 = vrot.lane.b32.xlu0 %v848, 32
    %v1778 = vpop.permute.xlu0 %1777
    %1779 = vrot.lane.b32.xlu0 %v853, 32
    %v1780 = vpop.permute.xlu0 %1779
    %v1785 = vsel %vm1036, %v1772, 0
    %1787 = vmatprep.subr.mxu0 0.0
    %1788 = vmatpush1.msra.mxu0 %v1776
    %1789 = vmatprep.subr.mxu0 0.0
    %1790 = vmatpush1.msra.mxu0 %v1778
    %1791 = vmatprep.subr.mxu0 0.0
    %1792 = vmatpush1.msra.mxu0 %v1780
    %1793 = vmatprep.subr.mxu0 0.0
    %1794 = vmatpush1.msra.mxu0 0.0
    %1795 = vmatprep.subr.mxu0 0.0
    %1796 = vmatpush1.msra.mxu0 0.0
    %1797 = vmatprep.subr.mxu0 0.0
    %1798 = vmatpush1.msra.mxu0 0.0
    %1799 = vmatprep.subr.mxu0 0.0
    %1800 = vmatpush1.msra.mxu0 0.0
    %1801 = vmatprep.subr.mxu0 0.0
    %1802 = vmatpush1.msra.mxu0 0.0
    %1803 = vmatprep.subr.mxu0 0.0
    %1804 = vmatpush1.msra.mxu0 0.0
    %1805 = vmatprep.subr.mxu0 0.0
    %1806 = vmatpush1.msra.mxu0 0.0
    %1807 = vmatprep.subr.mxu0 0.0
    %1808 = vmatpush1.msra.mxu0 0.0
    %1809 = vmatprep.subr.mxu0 0.0
    %1810 = vmatpush1.msra.mxu0 0.0
    %1811 = vmatprep.subr.mxu0 0.0
    %1812 = vmatpush1.msra.mxu0 0.0
    %1813 = vmatprep.subr.mxu0 0.0
    %1814 = vmatpush1.msra.mxu0 0.0
    %1815 = vmatprep.subr.mxu0 0.0
    %1816 = vmatpush1.msra.mxu0 0.0
    %1817 = vmatprep.subr.mxu0 0.0
    %1818 = vmatpush1.msra.mxu0 0.0
    %1819 = vmatprep.subr.mxu0 0.0
    %1820 = vmatpush1.msra.mxu0 0.0
    %1821 = vmatprep.subr.mxu0 0.0
    %1822 = vmatpush1.msra.mxu0 0.0
    %1823 = vmatprep.subr.mxu0 0.0
    %1824 = vmatpush1.msra.mxu0 0.0
    %1825 = vmatprep.subr.mxu0 0.0
    %1826 = vmatpush1.msra.mxu0 0.0
    %1827 = vmatprep.subr.mxu0 0.0
    %1828 = vmatpush1.msra.mxu0 0.0
    %1829 = vmatprep.subr.mxu0 0.0
    %1830 = vmatpush1.msra.mxu0 0.0
    %1831 = vmatprep.subr.mxu0 0.0
    %1832 = vmatpush1.msra.mxu0 0.0
    %1833 = vmatprep.subr.mxu0 0.0
    %1834 = vmatpush1.msra.mxu0 0.0
    %1835 = vmatprep.subr.mxu0 0.0
    %1836 = vmatpush1.msra.mxu0 0.0
    %1837 = vmatprep.subr.mxu0 0.0
    %1838 = vmatpush1.msra.mxu0 0.0
    %1839 = vmatprep.subr.mxu0 0.0
    %1840 = vmatpush1.msra.mxu0 0.0
    %1841 = vmatprep.subr.mxu0 0.0
    %1842 = vmatpush1.msra.mxu0 0.0
    %1843 = vmatprep.subr.mxu0 0.0
    %1844 = vmatpush1.msra.mxu0 0.0
    %1845 = vmatprep.subr.mxu0 0.0
    %1846 = vmatpush1.msra.mxu0 0.0
    %1847 = vmatprep.subr.mxu0 0.0
    %1848 = vmatpush1.msra.mxu0 0.0
    %1849 = vmatprep.subr.mxu0 0.0
    %1850 = vmatpush1.msra.mxu0 0.0
    %1851 = vmatprep.mubr.f32.mxu0 0.0
    %1852 = vmatmul.mubr.f32.gmra.mrb[0].mxu0 %v1785
    %v1853 = vpop.f32.mrb[0].mxu0
    %v1854 = vadd.f32 0.0, %v1853
    %v1855 = vpop.f32.mrb[0].mxu0
    %1856 = vdwg.mxu0
    %1857 = vrot.lane.b32.xlu0 %v858, 32
    %v1858 = vpop.permute.xlu0 %1857
    %1859 = vrot.lane.b32.xlu0 %v863, 32
    %v1860 = vpop.permute.xlu0 %1859
    %1861 = vrot.lane.b32.xlu0 %v868, 32
    %v1862 = vpop.permute.xlu0 %1861
    %v1867 = vsel %vm1036, %v1774, 0
    %1869 = vmatprep.subr.mxu0 0.0
    %1870 = vmatpush1.msra.mxu0 %v1858
    %1871 = vmatprep.subr.mxu0 0.0
    %1872 = vmatpush1.msra.mxu0 %v1860
    %1873 = vmatprep.subr.mxu0 0.0
    %1874 = vmatpush1.msra.mxu0 %v1862
    %1875 = vmatprep.subr.mxu0 0.0
    %1876 = vmatpush1.msra.mxu0 0.0
    %1877 = vmatprep.subr.mxu0 0.0
    %1878 = vmatpush1.msra.mxu0 0.0
    %1879 = vmatprep.subr.mxu0 0.0
    %1880 = vmatpush1.msra.mxu0 0.0
    %1881 = vmatprep.subr.mxu0 0.0
    %1882 = vmatpush1.msra.mxu0 0.0
    %1883 = vmatprep.subr.mxu0 0.0
    %1884 = vmatpush1.msra.mxu0 0.0
    %1885 = vmatprep.subr.mxu0 0.0
    %1886 = vmatpush1.msra.mxu0 0.0
    %1887 = vmatprep.subr.mxu0 0.0
    %1888 = vmatpush1.msra.mxu0 0.0
    %1889 = vmatprep.subr.mxu0 0.0
    %1890 = vmatpush1.msra.mxu0 0.0
    %1891 = vmatprep.subr.mxu0 0.0
    %1892 = vmatpush1.msra.mxu0 0.0
    %1893 = vmatprep.subr.mxu0 0.0
    %1894 = vmatpush1.msra.mxu0 0.0
    %1895 = vmatprep.subr.mxu0 0.0
    %1896 = vmatpush1.msra.mxu0 0.0
    %1897 = vmatprep.subr.mxu0 0.0
    %1898 = vmatpush1.msra.mxu0 0.0
    %1899 = vmatprep.subr.mxu0 0.0
    %1900 = vmatpush1.msra.mxu0 0.0
    %1901 = vmatprep.subr.mxu0 0.0
    %1902 = vmatpush1.msra.mxu0 0.0
    %1903 = vmatprep.subr.mxu0 0.0
    %1904 = vmatpush1.msra.mxu0 0.0
    %1905 = vmatprep.subr.mxu0 0.0
    %1906 = vmatpush1.msra.mxu0 0.0
    %1907 = vmatprep.subr.mxu0 0.0
    %1908 = vmatpush1.msra.mxu0 0.0
    %1909 = vmatprep.subr.mxu0 0.0
    %1910 = vmatpush1.msra.mxu0 0.0
    %1911 = vmatprep.subr.mxu0 0.0
    %1912 = vmatpush1.msra.mxu0 0.0
    %1913 = vmatprep.subr.mxu0 0.0
    %1914 = vmatpush1.msra.mxu0 0.0
    %1915 = vmatprep.subr.mxu0 0.0
    %1916 = vmatpush1.msra.mxu0 0.0
    %1917 = vmatprep.subr.mxu0 0.0
    %1918 = vmatpush1.msra.mxu0 0.0
    %1919 = vmatprep.subr.mxu0 0.0
    %1920 = vmatpush1.msra.mxu0 0.0
    %1921 = vmatprep.subr.mxu0 0.0
    %1922 = vmatpush1.msra.mxu0 0.0
    %1923 = vmatprep.subr.mxu0 0.0
    %1924 = vmatpush1.msra.mxu0 0.0
    %1925 = vmatprep.subr.mxu0 0.0
    %1926 = vmatpush1.msra.mxu0 0.0
    %1927 = vmatprep.subr.mxu0 0.0
    %1928 = vmatpush1.msra.mxu0 0.0
    %1929 = vmatprep.subr.mxu0 0.0
    %1930 = vmatpush1.msra.mxu0 0.0
    %1931 = vmatprep.subr.mxu0 0.0
    %1932 = vmatpush1.msra.mxu0 0.0
    %1933 = vmatprep.mubr.f32.mxu0 0.0
    %1934 = vmatmul.mubr.f32.gmra.mrb[0].mxu0 %v1867
    %v1935 = vpop.f32.mrb[0].mxu0
    %v1936 = vadd.f32 0.0, %v1935
    %v1937 = vpop.f32.mrb[0].mxu0
    %1938 = vdwg.mxu0
    %1939 = vrot.lane.b32.xlu0 %v748, 80
    %v1940 = vpop.permute.xlu0 %1939
    %1941 = vrot.lane.b32.xlu0 %v843, 80
    %v1942 = vpop.permute.xlu0 %1941
    %1943 = vrot.lane.b32.xlu0 %v848, 80
    %v1944 = vpop.permute.xlu0 %1943
    %1945 = vrot.lane.b32.xlu0 %v853, 80
    %v1946 = vpop.permute.xlu0 %1945
    %v1947 = vsel %vm871, %v1940, 0
    %v1949 = vsel %vm871, %v1942, 0
    %v1951 = vsel %vm871, %v1944, 0
    %v1953 = vsel %vm871, %v1946, 0
    %1955 = vmatprep.subr.mxu0 0.0
    %1956 = vmatpush1.xpose.msra.mxu0 %v1949
    %1957 = vmatprep.subr.mxu0 0.0
    %1958 = vmatpush1.xpose.msra.mxu0 %v1951
    %1959 = vmatprep.subr.mxu0 0.0
    %1960 = vmatpush1.xpose.msra.mxu0 %v1953
    %1961 = vmatprep.subr.mxu0 0.0
    %1962 = vmatpush1.xpose.msra.mxu0 0.0
    %1963 = vmatprep.subr.mxu0 0.0
    %1964 = vmatpush1.xpose.msra.mxu0 0.0
    %1965 = vmatprep.subr.mxu0 0.0
    %1966 = vmatpush1.xpose.msra.mxu0 0.0
    %1967 = vmatprep.subr.mxu0 0.0
    %1968 = vmatpush1.xpose.msra.mxu0 0.0
    %1969 = vmatprep.subr.mxu0 0.0
    %1970 = vmatpush1.xpose.msra.mxu0 0.0
    %1971 = vmatprep.subr.mxu0 0.0
    %1972 = vmatpush1.xpose.msra.mxu0 0.0
    %1973 = vmatprep.subr.mxu0 0.0
    %1974 = vmatpush1.xpose.msra.mxu0 0.0
    %1975 = vmatprep.subr.mxu0 0.0
    %1976 = vmatpush1.xpose.msra.mxu0 0.0
    %1977 = vmatprep.subr.mxu0 0.0
    %1978 = vmatpush1.xpose.msra.mxu0 0.0
    %1979 = vmatprep.subr.mxu0 0.0
    %1980 = vmatpush1.xpose.msra.mxu0 0.0
    %1981 = vmatprep.subr.mxu0 0.0
    %1982 = vmatpush1.xpose.msra.mxu0 0.0
    %1983 = vmatprep.subr.mxu0 0.0
    %1984 = vmatpush1.xpose.msra.mxu0 0.0
    %1985 = vmatprep.subr.mxu0 0.0
    %1986 = vmatpush1.xpose.msra.mxu0 0.0
    %1987 = vmatprep.subr.mxu0 0.0
    %1988 = vmatpush1.xpose.msra.mxu0 0.0
    %1989 = vmatprep.subr.mxu0 0.0
    %1990 = vmatpush1.xpose.msra.mxu0 0.0
    %1991 = vmatprep.subr.mxu0 0.0
    %1992 = vmatpush1.xpose.msra.mxu0 0.0
    %1993 = vmatprep.subr.mxu0 0.0
    %1994 = vmatpush1.xpose.msra.mxu0 0.0
    %1995 = vmatprep.subr.mxu0 0.0
    %1996 = vmatpush1.xpose.msra.mxu0 0.0
    %1997 = vmatprep.subr.mxu0 0.0
    %1998 = vmatpush1.xpose.msra.mxu0 0.0
    %1999 = vmatprep.subr.mxu0 0.0
    %2000 = vmatpush1.xpose.msra.mxu0 0.0
    %2001 = vmatprep.subr.mxu0 0.0
    %2002 = vmatpush1.xpose.msra.mxu0 0.0
    %2003 = vmatprep.subr.mxu0 0.0
    %2004 = vmatpush1.xpose.msra.mxu0 0.0
    %2005 = vmatprep.subr.mxu0 0.0
    %2006 = vmatpush1.xpose.msra.mxu0 0.0
    %2007 = vmatprep.subr.mxu0 0.0
    %2008 = vmatpush1.xpose.msra.mxu0 0.0
    %2009 = vmatprep.subr.mxu0 0.0
    %2010 = vmatpush1.xpose.msra.mxu0 0.0
    %2011 = vmatprep.subr.mxu0 0.0
    %2012 = vmatpush1.xpose.msra.mxu0 0.0
    %2013 = vmatprep.subr.mxu0 0.0
    %2014 = vmatpush1.xpose.msra.mxu0 0.0
    %2015 = vmatprep.subr.mxu0 0.0
    %2016 = vmatpush1.xpose.msra.mxu0 0.0
    %2017 = vmatprep.subr.mxu0 0.0
    %2018 = vmatpush1.xpose.msra.mxu0 0.0
    %2019 = vmatprep.mubr.f32.mxu0 0.0
    %2020 = vmatmul.mubr.f32.gmra.mrb[0].mxu0 %v1947
    %v2021 = vpop.f32.mrb[0].mxu0
    %v2022 = vadd.f32 0.0, %v2021
    %v2023 = vpop.f32.mrb[0].mxu0
    %2024 = vdwg.mxu0
    %2025 = vrot.lane.b32.xlu0 %v753, 80
    %v2026 = vpop.permute.xlu0 %2025
    %2027 = vrot.lane.b32.xlu0 %v858, 80
    %v2028 = vpop.permute.xlu0 %2027
    %2029 = vrot.lane.b32.xlu0 %v863, 80
    %v2030 = vpop.permute.xlu0 %2029
    %2031 = vrot.lane.b32.xlu0 %v868, 80
    %v2032 = vpop.permute.xlu0 %2031
    %v2033 = vsel %vm871, %v2026, 0
    %v2035 = vsel %vm871, %v2028, 0
    %v2037 = vsel %vm871, %v2030, 0
    %v2039 = vsel %vm871, %v2032, 0
    %2041 = vmatprep.subr.mxu0 0.0
    %2042 = vmatpush1.xpose.msra.mxu0 %v2035
    %2043 = vmatprep.subr.mxu0 0.0
    %2044 = vmatpush1.xpose.msra.mxu0 %v2037
    %2045 = vmatprep.subr.mxu0 0.0
    %2046 = vmatpush1.xpose.msra.mxu0 %v2039
    %2047 = vmatprep.subr.mxu0 0.0
    %2048 = vmatpush1.xpose.msra.mxu0 0.0
    %2049 = vmatprep.subr.mxu0 0.0
    %2050 = vmatpush1.xpose.msra.mxu0 0.0
    %2051 = vmatprep.subr.mxu0 0.0
    %2052 = vmatpush1.xpose.msra.mxu0 0.0
    %2053 = vmatprep.subr.mxu0 0.0
    %2054 = vmatpush1.xpose.msra.mxu0 0.0
    %2055 = vmatprep.subr.mxu0 0.0
    %2056 = vmatpush1.xpose.msra.mxu0 0.0
    %2057 = vmatprep.subr.mxu0 0.0
    %2058 = vmatpush1.xpose.msra.mxu0 0.0
    %2059 = vmatprep.subr.mxu0 0.0
    %2060 = vmatpush1.xpose.msra.mxu0 0.0
    %2061 = vmatprep.subr.mxu0 0.0
    %2062 = vmatpush1.xpose.msra.mxu0 0.0
    %2063 = vmatprep.subr.mxu0 0.0
    %2064 = vmatpush1.xpose.msra.mxu0 0.0
    %2065 = vmatprep.subr.mxu0 0.0
    %2066 = vmatpush1.xpose.msra.mxu0 0.0
    %2067 = vmatprep.subr.mxu0 0.0
    %2068 = vmatpush1.xpose.msra.mxu0 0.0
    %2069 = vmatprep.subr.mxu0 0.0
    %2070 = vmatpush1.xpose.msra.mxu0 0.0
    %2071 = vmatprep.subr.mxu0 0.0
    %2072 = vmatpush1.xpose.msra.mxu0 0.0
    %2073 = vmatprep.subr.mxu0 0.0
    %2074 = vmatpush1.xpose.msra.mxu0 0.0
    %2075 = vmatprep.subr.mxu0 0.0
    %2076 = vmatpush1.xpose.msra.mxu0 0.0
    %2077 = vmatprep.subr.mxu0 0.0
    %2078 = vmatpush1.xpose.msra.mxu0 0.0
    %2079 = vmatprep.subr.mxu0 0.0
    %2080 = vmatpush1.xpose.msra.mxu0 0.0
    %2081 = vmatprep.subr.mxu0 0.0
    %2082 = vmatpush1.xpose.msra.mxu0 0.0
    %2083 = vmatprep.subr.mxu0 0.0
    %2084 = vmatpush1.xpose.msra.mxu0 0.0
    %2085 = vmatprep.subr.mxu0 0.0
    %2086 = vmatpush1.xpose.msra.mxu0 0.0
    %2087 = vmatprep.subr.mxu0 0.0
    %2088 = vmatpush1.xpose.msra.mxu0 0.0
    %2089 = vmatprep.subr.mxu0 0.0
    %2090 = vmatpush1.xpose.msra.mxu0 0.0
    %2091 = vmatprep.subr.mxu0 0.0
    %2092 = vmatpush1.xpose.msra.mxu0 0.0
    %2093 = vmatprep.subr.mxu0 0.0
    %2094 = vmatpush1.xpose.msra.mxu0 0.0
    %2095 = vmatprep.subr.mxu0 0.0
    %2096 = vmatpush1.xpose.msra.mxu0 0.0
    %2097 = vmatprep.subr.mxu0 0.0
    %2098 = vmatpush1.xpose.msra.mxu0 0.0
    %2099 = vmatprep.subr.mxu0 0.0
    %2100 = vmatpush1.xpose.msra.mxu0 0.0
    %2101 = vmatprep.subr.mxu0 0.0
    %2102 = vmatpush1.xpose.msra.mxu0 0.0
    %2103 = vmatprep.subr.mxu0 0.0
    %2104 = vmatpush1.xpose.msra.mxu0 0.0
    %2105 = vmatprep.mubr.f32.mxu0 0.0
    %2106 = vmatmul.mubr.f32.gmra.mrb[0].mxu0 %v2033
    %v2107 = vpop.f32.mrb[0].mxu0
    %v2108 = vadd.f32 0.0, %v2107
    %v2109 = vpop.f32.mrb[0].mxu0
    %2110 = vdwg.mxu0
    %v2111 = vsel %vm1036, %v2022, -inf
    %2112 = vmax.xlane.f32.xlu0 %v2111
    %v2113 = vpop.xlane.xlu0 %2112
    %v2114 = vsel %vm1036, %v2108, -inf
    %2115 = vmax.xlane.f32.xlu0 %v2114
    %v2116 = vpop.xlane.xlu0 %2115
    %v2117 = vsub.f32 %v2022, %v2113
    %v2118 = vsub.f32 %v2108, %v2116
    %v2119 = vmul.f32 %v2117, 1.442695
    %v2120 = vpow.pop %v2119
    %v2121 = vmul.f32 %v2118, 1.442695
    %v2122 = vpow.pop %v2121
    %v2123 = vsel %vm1036, %v2120, 0.0
    %2124 = vadd.xlane.f32.xlu0 %v2123
    %v2125 = vpop.xlane.xlu0 %2124
    %v2126 = vsel %vm1036, %v2122, 0.0
    %2127 = vadd.xlane.f32.xlu0 %v2126
    %v2128 = vpop.xlane.xlu0 %2127
    %v2129 = vrcp.pop %v2125
    %v2130 = vmul.f32 %v2120, %v2129
    %v2131 = vrcp.pop %v2128
    %v2132 = vmul.f32 %v2122, %v2131
    %2133 = vrot.lane.b32.xlu0 %v843, 16
    %v2134 = vpop.permute.xlu0 %2133
    %2135 = vrot.lane.b32.xlu0 %v848, 16
    %v2136 = vpop.permute.xlu0 %2135
    %2137 = vrot.lane.b32.xlu0 %v853, 16
    %v2138 = vpop.permute.xlu0 %2137
    %v2143 = vsel %vm1036, %v2130, 0
    %2145 = vmatprep.subr.mxu0 0.0
    %2146 = vmatpush1.msra.mxu0 %v2134
    %2147 = vmatprep.subr.mxu0 0.0
    %2148 = vmatpush1.msra.mxu0 %v2136
    %2149 = vmatprep.subr.mxu0 0.0
    %2150 = vmatpush1.msra.mxu0 %v2138
    %2151 = vmatprep.subr.mxu0 0.0
    %2152 = vmatpush1.msra.mxu0 0.0
    %2153 = vmatprep.subr.mxu0 0.0
    %2154 = vmatpush1.msra.mxu0 0.0
    %2155 = vmatprep.subr.mxu0 0.0
    %2156 = vmatpush1.msra.mxu0 0.0
    %2157 = vmatprep.subr.mxu0 0.0
    %2158 = vmatpush1.msra.mxu0 0.0
    %2159 = vmatprep.subr.mxu0 0.0
    %2160 = vmatpush1.msra.mxu0 0.0
    %2161 = vmatprep.subr.mxu0 0.0
    %2162 = vmatpush1.msra.mxu0 0.0
    %2163 = vmatprep.subr.mxu0 0.0
    %2164 = vmatpush1.msra.mxu0 0.0
    %2165 = vmatprep.subr.mxu0 0.0
    %2166 = vmatpush1.msra.mxu0 0.0
    %2167 = vmatprep.subr.mxu0 0.0
    %2168 = vmatpush1.msra.mxu0 0.0
    %2169 = vmatprep.subr.mxu0 0.0
    %2170 = vmatpush1.msra.mxu0 0.0
    %2171 = vmatprep.subr.mxu0 0.0
    %2172 = vmatpush1.msra.mxu0 0.0
    %2173 = vmatprep.subr.mxu0 0.0
    %2174 = vmatpush1.msra.mxu0 0.0
    %2175 = vmatprep.subr.mxu0 0.0
    %2176 = vmatpush1.msra.mxu0 0.0
    %2177 = vmatprep.subr.mxu0 0.0
    %2178 = vmatpush1.msra.mxu0 0.0
    %2179 = vmatprep.subr.mxu0 0.0
    %2180 = vmatpush1.msra.mxu0 0.0
    %2181 = vmatprep.subr.mxu0 0.0
    %2182 = vmatpush1.msra.mxu0 0.0
    %2183 = vmatprep.subr.mxu0 0.0
    %2184 = vmatpush1.msra.mxu0 0.0
    %2185 = vmatprep.subr.mxu0 0.0
    %2186 = vmatpush1.msra.mxu0 0.0
    %2187 = vmatprep.subr.mxu0 0.0
    %2188 = vmatpush1.msra.mxu0 0.0
    %2189 = vmatprep.subr.mxu0 0.0
    %2190 = vmatpush1.msra.mxu0 0.0
    %2191 = vmatprep.subr.mxu0 0.0
    %2192 = vmatpush1.msra.mxu0 0.0
    %2193 = vmatprep.subr.mxu0 0.0
    %2194 = vmatpush1.msra.mxu0 0.0
    %2195 = vmatprep.subr.mxu0 0.0
    %2196 = vmatpush1.msra.mxu0 0.0
    %2197 = vmatprep.subr.mxu0 0.0
    %2198 = vmatpush1.msra.mxu0 0.0
    %2199 = vmatprep.subr.mxu0 0.0
    %2200 = vmatpush1.msra.mxu0 0.0
    %2201 = vmatprep.subr.mxu0 0.0
    %2202 = vmatpush1.msra.mxu0 0.0
    %2203 = vmatprep.subr.mxu0 0.0
    %2204 = vmatpush1.msra.mxu0 0.0
    %2205 = vmatprep.subr.mxu0 0.0
    %2206 = vmatpush1.msra.mxu0 0.0
    %2207 = vmatprep.subr.mxu0 0.0
    %2208 = vmatpush1.msra.mxu0 0.0
    %2209 = vmatprep.mubr.f32.mxu0 0.0
    %2210 = vmatmul.mubr.f32.gmra.mrb[0].mxu0 %v2143
    %v2211 = vpop.f32.mrb[0].mxu0
    %v2212 = vadd.f32 0.0, %v2211
    %v2213 = vpop.f32.mrb[0].mxu0
    %2214 = vdwg.mxu0
    %2215 = vrot.lane.b32.xlu0 %v858, 16
    %v2216 = vpop.permute.xlu0 %2215
    %2217 = vrot.lane.b32.xlu0 %v863, 16
    %v2218 = vpop.permute.xlu0 %2217
    %2219 = vrot.lane.b32.xlu0 %v868, 16
    %v2220 = vpop.permute.xlu0 %2219
    %v2225 = vsel %vm1036, %v2132, 0
    %2227 = vmatprep.subr.mxu0 0.0
    %2228 = vmatpush1.msra.mxu0 %v2216
    %2229 = vmatprep.subr.mxu0 0.0
    %2230 = vmatpush1.msra.mxu0 %v2218
    %2231 = vmatprep.subr.mxu0 0.0
    %2232 = vmatpush1.msra.mxu0 %v2220
    %2233 = vmatprep.subr.mxu0 0.0
    %2234 = vmatpush1.msra.mxu0 0.0
    %2235 = vmatprep.subr.mxu0 0.0
    %2236 = vmatpush1.msra.mxu0 0.0
    %2237 = vmatprep.subr.mxu0 0.0
    %2238 = vmatpush1.msra.mxu0 0.0
    %2239 = vmatprep.subr.mxu0 0.0
    %2240 = vmatpush1.msra.mxu0 0.0
    %2241 = vmatprep.subr.mxu0 0.0
    %2242 = vmatpush1.msra.mxu0 0.0
    %2243 = vmatprep.subr.mxu0 0.0
    %2244 = vmatpush1.msra.mxu0 0.0
    %2245 = vmatprep.subr.mxu0 0.0
    %2246 = vmatpush1.msra.mxu0 0.0
    %2247 = vmatprep.subr.mxu0 0.0
    %2248 = vmatpush1.msra.mxu0 0.0
    %2249 = vmatprep.subr.mxu0 0.0
    %2250 = vmatpush1.msra.mxu0 0.0
    %2251 = vmatprep.subr.mxu0 0.0
    %2252 = vmatpush1.msra.mxu0 0.0
    %2253 = vmatprep.subr.mxu0 0.0
    %2254 = vmatpush1.msra.mxu0 0.0
    %2255 = vmatprep.subr.mxu0 0.0
    %2256 = vmatpush1.msra.mxu0 0.0
    %2257 = vmatprep.subr.mxu0 0.0
    %2258 = vmatpush1.msra.mxu0 0.0
    %2259 = vmatprep.subr.mxu0 0.0
    %2260 = vmatpush1.msra.mxu0 0.0
    %2261 = vmatprep.subr.mxu0 0.0
    %2262 = vmatpush1.msra.mxu0 0.0
    %2263 = vmatprep.subr.mxu0 0.0
    %2264 = vmatpush1.msra.mxu0 0.0
    %2265 = vmatprep.subr.mxu0 0.0
    %2266 = vmatpush1.msra.mxu0 0.0
    %2267 = vmatprep.subr.mxu0 0.0
    %2268 = vmatpush1.msra.mxu0 0.0
    %2269 = vmatprep.subr.mxu0 0.0
    %2270 = vmatpush1.msra.mxu0 0.0
    %2271 = vmatprep.subr.mxu0 0.0
    %2272 = vmatpush1.msra.mxu0 0.0
    %2273 = vmatprep.subr.mxu0 0.0
    %2274 = vmatpush1.msra.mxu0 0.0
    %2275 = vmatprep.subr.mxu0 0.0
    %2276 = vmatpush1.msra.mxu0 0.0
    %2277 = vmatprep.subr.mxu0 0.0
    %2278 = vmatpush1.msra.mxu0 0.0
    %2279 = vmatprep.subr.mxu0 0.0
    %2280 = vmatpush1.msra.mxu0 0.0
    %2281 = vmatprep.subr.mxu0 0.0
    %2282 = vmatpush1.msra.mxu0 0.0
    %2283 = vmatprep.subr.mxu0 0.0
    %2284 = vmatpush1.msra.mxu0 0.0
    %2285 = vmatprep.subr.mxu0 0.0
    %2286 = vmatpush1.msra.mxu0 0.0
    %2287 = vmatprep.subr.mxu0 0.0
    %2288 = vmatpush1.msra.mxu0 0.0
    %2289 = vmatprep.subr.mxu0 0.0
    %2290 = vmatpush1.msra.mxu0 0.0
    %2291 = vmatprep.mubr.f32.mxu0 0.0
    %2292 = vmatmul.mubr.f32.gmra.mrb[0].mxu0 %v2225
    %v2293 = vpop.f32.mrb[0].mxu0
    %v2294 = vadd.f32 0.0, %v2293
    %v2295 = vpop.f32.mrb[0].mxu0
    %2296 = vdwg.mxu0
    %2299 = vrot.lane.b32.xlu0 %v1496, 16
    %v2300 = vpop.permute.xlu0 %2299
    %2301 = vrot.lane.b32.xlu0 %v1578, 16
    %v2302 = vpop.permute.xlu0 %2301
    %2307 = vrot.lane.b32.xlu0 %v1854, 32
    %v2308 = vpop.permute.xlu0 %2307
    %2309 = vrot.lane.b32.xlu0 %v1936, 32
    %v2310 = vpop.permute.xlu0 %2309
    %2315 = vrot.lane.b32.xlu0 %v2212, 48
    %v2316 = vpop.permute.xlu0 %2315
    %2317 = vrot.lane.b32.xlu0 %v2294, 48
    %v2318 = vpop.permute.xlu0 %2317
    %v2321 = vsel %vm871, %v1138, %v2300
    %v2322 = vsel %vm871, %v1220, %v2302
    %v2323 = vsel %vm115, %v2321, %v2308
    %v2324 = vsel %vm115, %v2322, %v2310
    %vm2325 = vcmask 392192
    %v2326 = vsel %vm2325, %v2323, %v2316
    %v2327 = vsel %vm2325, %v2324, %v2318
    %s2328 = scalar_lea.vmem %s6, 192
    %v2329 = vld [vmem:[%s2328] sm:$0xff]
    %v2330 = vld [vmem:[%s2328 + $0x8] sm:$0xff]
    %v2331 = vld [vmem:[%s2328 + $0x10] sm:$0xff]
    %v2332 = vld [vmem:[%s2328 + $0x18] sm:$0xff]
    %v2333 = vld [vmem:[%s2328 + $0x20] sm:$0xff]
    %v2334 = vld [vmem:[%s2328 + $0x28] sm:$0xff]
    %v2335 = vld [vmem:[%s2328 + $0x30] sm:$0xff]
    %v2336 = vld [vmem:[%s2328 + $0x38] sm:$0xff]
    %v2338 = vsel %vm209, %v2326, 0
    %v2341 = vsel %vm209, %v2327, 0
    %2343 = vmatprep.subr.mxu0 0.0
    %2344 = vmatpush1.msra.mxu0 %v2329
    %2345 = vmatprep.subr.mxu0 0.0
    %2346 = vmatpush1.msra.mxu0 %v2330
    %2347 = vmatprep.subr.mxu0 0.0
    %2348 = vmatpush1.msra.mxu0 %v2331
    %2349 = vmatprep.subr.mxu0 0.0
    %2350 = vmatpush1.msra.mxu0 %v2332
    %2351 = vmatprep.subr.mxu0 0.0
    %2352 = vmatpush1.msra.mxu0 %v2333
    %2353 = vmatprep.subr.mxu0 0.0
    %2354 = vmatpush1.msra.mxu0 %v2334
    %2355 = vmatprep.subr.mxu0 0.0
    %2356 = vmatpush1.msra.mxu0 %v2335
    %2357 = vmatprep.subr.mxu0 0.0
    %2358 = vmatpush1.msra.mxu0 %v2336
    %2359 = vmatprep.subr.mxu0 0.0
    %2360 = vmatpush1.msra.mxu0 0.0
    %2361 = vmatprep.subr.mxu0 0.0
    %2362 = vmatpush1.msra.mxu0 0.0
    %2363 = vmatprep.subr.mxu0 0.0
    %2364 = vmatpush1.msra.mxu0 0.0
    %2365 = vmatprep.subr.mxu0 0.0
    %2366 = vmatpush1.msra.mxu0 0.0
    %2367 = vmatprep.subr.mxu0 0.0
    %2368 = vmatpush1.msra.mxu0 0.0
    %2369 = vmatprep.subr.mxu0 0.0
    %2370 = vmatpush1.msra.mxu0 0.0
    %2371 = vmatprep.subr.mxu0 0.0
    %2372 = vmatpush1.msra.mxu0 0.0
    %2373 = vmatprep.subr.mxu0 0.0
    %2374 = vmatpush1.msra.mxu0 0.0
    %2375 = vmatprep.subr.mxu0 0.0
    %2376 = vmatpush1.msra.mxu0 0.0
    %2377 = vmatprep.subr.mxu0 0.0
    %2378 = vmatpush1.msra.mxu0 0.0
    %2379 = vmatprep.subr.mxu0 0.0
    %2380 = vmatpush1.msra.mxu0 0.0
    %2381 = vmatprep.subr.mxu0 0.0
    %2382 = vmatpush1.msra.mxu0 0.0
    %2383 = vmatprep.subr.mxu0 0.0
    %2384 = vmatpush1.msra.mxu0 0.0
    %2385 = vmatprep.subr.mxu0 0.0
    %2386 = vmatpush1.msra.mxu0 0.0
    %2387 = vmatprep.subr.mxu0 0.0
    %2388 = vmatpush1.msra.mxu0 0.0
    %2389 = vmatprep.subr.mxu0 0.0
    %2390 = vmatpush1.msra.mxu0 0.0
    %2391 = vmatprep.subr.mxu0 0.0
    %2392 = vmatpush1.msra.mxu0 0.0
    %2393 = vmatprep.subr.mxu0 0.0
    %2394 = vmatpush1.msra.mxu0 0.0
    %2395 = vmatprep.subr.mxu0 0.0
    %2396 = vmatpush1.msra.mxu0 0.0
    %2397 = vmatprep.subr.mxu0 0.0
    %2398 = vmatpush1.msra.mxu0 0.0
    %2399 = vmatprep.subr.mxu0 0.0
    %2400 = vmatpush1.msra.mxu0 0.0
    %2401 = vmatprep.subr.mxu0 0.0
    %2402 = vmatpush1.msra.mxu0 0.0
    %2403 = vmatprep.subr.mxu0 0.0
    %2404 = vmatpush1.msra.mxu0 0.0
    %2405 = vmatprep.subr.mxu0 0.0
    %2406 = vmatpush1.msra.mxu0 0.0
    %2407 = vmatprep.mubr.f32.mxu0 0.0
    %2408 = vmatmul.mubr.f32.gmra.mrb[0].mxu0 %v2338
    %v2409 = vpop.f32.mrb[0].mxu0
    %v2410 = vadd.f32 0.0, %v2409
    %v2411 = vpop.f32.mrb[0].mxu0
    %2412 = vmatprep.mubr.f32.mxu0 0.0
    %2413 = vmatmul.mubr.f32.gmra.mrb[0].mxu0 %v2341
    %v2414 = vpop.f32.mrb[0].mxu0
    %v2415 = vadd.f32 0.0, %v2414
    %v2416 = vpop.f32.mrb[0].mxu0
    %2417 = vdwg.mxu0
    %v2418 = vadd.f32 %v405, %v2410
    %v2419 = vadd.f32 %v405, %v2415
    %v2420 = vld [vmem:[#allocation5 + $0xa] sm:$0x1]
    %v2421 = vld [vmem:[#allocation5 + $0xb] sm:$0x1]
    %v2422 = vsel %vm209, %v2418, 0.0
    %2423 = vadd.xlane.f32.xlu0 %v2422
    %v2424 = vpop.xlane.xlu0 %2423
    %v2425 = vsel %vm209, %v2419, 0.0
    %2426 = vadd.xlane.f32.xlu0 %v2425
    %v2427 = vpop.xlane.xlu0 %2426
    %v2428 = vmul.f32 %v2424, %v570
    %v2429 = vmul.f32 %v2427, %v570
    %v2430 = vsub.f32 %v2418, %v2428
    %v2431 = vsub.f32 %v2419, %v2429
    %v2432 = vmul.f32 %v2430, %v2430
    %v2433 = vmul.f32 %v2431, %v2431
    %v2434 = vsel %vm209, %v2432, 0.0
    %2435 = vadd.xlane.f32.xlu0 %v2434
    %v2436 = vpop.xlane.xlu0 %2435
    %v2437 = vsel %vm209, %v2433, 0.0
    %2438 = vadd.xlane.f32.xlu0 %v2437
    %v2439 = vpop.xlane.xlu0 %2438
    %v2440 = vmul.f32 %v2436, %v570
    %v2441 = vmul.f32 %v2439, %v570
    %v2442 = vadd.f32 %v2440, 1e-05
    %v2443 = vadd.f32 %v2441, 1e-05
    %v2444 = vrsqrt.pop %v2442
    %v2445 = vrsqrt.pop %v2443
    %v2446 = vmul.f32 %v2430, %v2444
    %v2447 = vmul.f32 %v2431, %v2445
    %v2448 = vlaneseq
    %v2449 = vshrl.u32 %v2448, 7
    %v2450 = vsub.s32 0, %v2449
    %v2451 = vrot.slane %v2420, %v2450
    %v2452 = vmul.f32 %v2446, %v2451
    %v2453 = vmul.f32 %v2447, %v2451
    %v2454 = vlaneseq
    %v2455 = vshrl.u32 %v2454, 7
    %v2456 = vsub.s32 0, %v2455
    %v2457 = vrot.slane %v2421, %v2456
    %v2458 = vadd.f32 %v2452, %v2457
    %v2459 = vadd.f32 %v2453, %v2457
    %v2460 = vadd.f32 %v554, 1.0
    %v2461 = vadd.f32 %v555, 1.0
    %2464 = vrot.lane.b32.xlu0 %v2460, 64
    %v2465 = vpop.permute.xlu0 %2464
    %2466 = vrot.lane.b32.xlu0 %v2461, 64
    %v2467 = vpop.permute.xlu0 %2466
    %v2470 = vmul.f32 %v2458, %v2465
    %v2471 = vmul.f32 %v2459, %v2467
    %v2472 = vadd.f32 %v2470, %v543
    %v2473 = vadd.f32 %v2471, %v544
    %v2474 = vld [vmem:[#allocation10] sm:$0xff]
    %v2475 = vld [vmem:[#allocation10 + $0x8] sm:$0xff]
    %v2476 = vld [vmem:[#allocation10 + $0x10] sm:$0xff]
    %v2477 = vld [vmem:[#allocation10 + $0x18] sm:$0xff]
    %v2478 = vld [vmem:[#allocation10 + $0x20] sm:$0xff]
    %v2479 = vld [vmem:[#allocation10 + $0x28] sm:$0xff]
    %v2480 = vld [vmem:[#allocation10 + $0x30] sm:$0xff]
    %v2481 = vld [vmem:[#allocation10 + $0x38] sm:$0xff]
    %v2482 = vld [vmem:[#allocation10 + $0x40] sm:$0xff]
    %v2483 = vld [vmem:[#allocation10 + $0x48] sm:$0xff]
    %v2484 = vld [vmem:[#allocation10 + $0x50] sm:$0xff]
    %v2485 = vld [vmem:[#allocation10 + $0x58] sm:$0xff]
    %v2486 = vld [vmem:[#allocation10 + $0x60] sm:$0xff]
    %v2487 = vld [vmem:[#allocation10 + $0x68] sm:$0xff]
    %v2488 = vld [vmem:[#allocation10 + $0x70] sm:$0xff]
    %v2489 = vld [vmem:[#allocation10 + $0x78] sm:$0xff]
    %v2491 = vsel %vm209, %v2472, 0
    %v2494 = vsel %vm209, %v2473, 0
    %2496 = vmatprep.subr.mxu0 %v2475
    %2497 = vmatpush1.msra.mxu0 %v2474
    %2498 = vmatprep.subr.mxu0 %v2477
    %2499 = vmatpush1.msra.mxu0 %v2476
    %2500 = vmatprep.subr.mxu0 %v2479
    %2501 = vmatpush1.msra.mxu0 %v2478
    %2502 = vmatprep.subr.mxu0 %v2481
    %2503 = vmatpush1.msra.mxu0 %v2480
    %2504 = vmatprep.subr.mxu0 %v2483
    %2505 = vmatpush1.msra.mxu0 %v2482
    %2506 = vmatprep.subr.mxu0 %v2485
    %2507 = vmatpush1.msra.mxu0 %v2484
    %2508 = vmatprep.subr.mxu0 %v2487
    %2509 = vmatpush1.msra.mxu0 %v2486
    %2510 = vmatprep.subr.mxu0 %v2489
    %2511 = vmatpush1.msra.mxu0 %v2488
    %2512 = vmatprep.subr.mxu0 0.0
    %2513 = vmatpush1.msra.mxu0 0.0
    %2514 = vmatprep.subr.mxu0 0.0
    %2515 = vmatpush1.msra.mxu0 0.0
    %2516 = vmatprep.subr.mxu0 0.0
    %2517 = vmatpush1.msra.mxu0 0.0
    %2518 = vmatprep.subr.mxu0 0.0
    %2519 = vmatpush1.msra.mxu0 0.0
    %2520 = vmatprep.subr.mxu0 0.0
    %2521 = vmatpush1.msra.mxu0 0.0
    %2522 = vmatprep.subr.mxu0 0.0
    %2523 = vmatpush1.msra.mxu0 0.0
    %2524 = vmatprep.subr.mxu0 0.0
    %2525 = vmatpush1.msra.mxu0 0.0
    %2526 = vmatprep.subr.mxu0 0.0
    %2527 = vmatpush1.msra.mxu0 0.0
    %2528 = vmatprep.subr.mxu0 0.0
    %2529 = vmatpush1.msra.mxu0 0.0
    %2530 = vmatprep.subr.mxu0 0.0
    %2531 = vmatpush1.msra.mxu0 0.0
    %2532 = vmatprep.subr.mxu0 0.0
    %2533 = vmatpush1.msra.mxu0 0.0
    %2534 = vmatprep.subr.mxu0 0.0
    %2535 = vmatpush1.msra.mxu0 0.0
    %2536 = vmatprep.subr.mxu0 0.0
    %2537 = vmatpush1.msra.mxu0 0.0
    %2538 = vmatprep.subr.mxu0 0.0
    %2539 = vmatpush1.msra.mxu0 0.0
    %2540 = vmatprep.subr.mxu0 0.0
    %2541 = vmatpush1.msra.mxu0 0.0
    %2542 = vmatprep.subr.mxu0 0.0
    %2543 = vmatpush1.msra.mxu0 0.0
    %2544 = vmatprep.subr.mxu0 0.0
    %2545 = vmatpush1.msra.mxu0 0.0
    %2546 = vmatprep.subr.mxu0 0.0
    %2547 = vmatpush1.msra.mxu0 0.0
    %2548 = vmatprep.subr.mxu0 0.0
    %2549 = vmatpush1.msra.mxu0 0.0
    %2550 = vmatprep.subr.mxu0 0.0
    %2551 = vmatpush1.msra.mxu0 0.0
    %2552 = vmatprep.subr.mxu0 0.0
    %2553 = vmatpush1.msra.mxu0 0.0
    %2554 = vmatprep.subr.mxu0 0.0
    %2555 = vmatpush1.msra.mxu0 0.0
    %2556 = vmatprep.subr.mxu0 0.0
    %2557 = vmatpush1.msra.mxu0 0.0
    %2558 = vmatprep.subr.mxu0 0.0
    %2559 = vmatpush1.msra.mxu0 0.0
    %2560 = vmatprep.mubr.f32.mxu0 0.0
    %2561 = vmatmul.mubr.f32.gmra.mrb[0].mxu0 %v2491
    %v2562 = vpop.f32.mrb[0].mxu0
    %v2563 = vadd.f32 0.0, %v2562
    %v2564 = vpop.f32.mrb[0].mxu0
    %v2565 = vadd.f32 0.0, %v2564
    %2566 = vmatprep.mubr.f32.mxu0 0.0
    %2567 = vmatmul.mubr.f32.gmra.mrb[0].mxu0 %v2494
    %v2568 = vpop.f32.mrb[0].mxu0
    %v2569 = vadd.f32 0.0, %v2568
    %v2570 = vpop.f32.mrb[0].mxu0
    %v2571 = vadd.f32 0.0, %v2570
    %2572 = vdwg.mxu0
    %v2573 = vmul.f32 %v2563, 0.5
    %v2574 = vmul.f32 %v2565, 0.5
    %v2575 = vmul.f32 %v2569, 0.5
    %v2576 = vmul.f32 %v2571, 0.5
    %v2577 = vmul.f32 %v2563, 0.70710677
    %v2578 = vmul.f32 %v2565, 0.70710677
    %v2579 = vmul.f32 %v2569, 0.70710677
    %v2580 = vmul.f32 %v2571, 0.70710677
    %vm2581 = vcmp.ge.f32.partialorder %v2577, 0.0
    %vm2582 = vcmp.ge.f32.partialorder %v2578, 0.0
    %vm2583 = vcmp.ge.f32.partialorder %v2579, 0.0
    %vm2584 = vcmp.ge.f32.partialorder %v2580, 0.0
    %v2585 = vsel %vm2581, 1.0, -1.0
    %v2586 = vsel %vm2582, 1.0, -1.0
    %v2587 = vsel %vm2583, 1.0, -1.0
    %v2588 = vsel %vm2584, 1.0, -1.0
    %v2589 = vand.u32 2147483647, %v2577
    %v2590 = vand.u32 2147483647, %v2578
    %v2591 = vand.u32 2147483647, %v2579
    %v2592 = vand.u32 2147483647, %v2580
    %v2593 = vmul.f32 %v2589, 0.3275911
    %v2594 = vmul.f32 %v2590, 0.3275911
    %v2595 = vmul.f32 %v2591, 0.3275911
    %v2596 = vmul.f32 %v2592, 0.3275911
    %v2597 = vadd.f32 %v2593, 1.0
    %v2598 = vadd.f32 %v2594, 1.0
    %v2599 = vadd.f32 %v2595, 1.0
    %v2600 = vadd.f32 %v2596, 1.0
    %v2601 = vrcp.pop %v2597
    %v2602 = vmul.f32 1.0, %v2601
    %v2603 = vrcp.pop %v2598
    %v2604 = vmul.f32 1.0, %v2603
    %v2605 = vrcp.pop %v2599
    %v2606 = vmul.f32 1.0, %v2605
    %v2607 = vrcp.pop %v2600
    %v2608 = vmul.f32 1.0, %v2607
    %v2609 = vmul.f32 %v2602, 1.0614054
    %v2610 = vmul.f32 %v2604, 1.0614054
    %v2611 = vmul.f32 %v2606, 1.0614054
    %v2612 = vmul.f32 %v2608, 1.0614054
    %v2613 = vsub.f32 %v2609, 1.4531521
    %v2614 = vsub.f32 %v2610, 1.4531521
    %v2615 = vsub.f32 %v2611, 1.4531521
    %v2616 = vsub.f32 %v2612, 1.4531521
    %v2617 = vmul.f32 %v2613, %v2602
    %v2618 = vmul.f32 %v2614, %v2604
    %v2619 = vmul.f32 %v2615, %v2606
    %v2620 = vmul.f32 %v2616, %v2608
    %v2621 = vadd.f32 %v2617, 1.4214138
    %v2622 = vadd.f32 %v2618, 1.4214138
    %v2623 = vadd.f32 %v2619, 1.4214138
    %v2624 = vadd.f32 %v2620, 1.4214138
    %v2625 = vmul.f32 %v2621, %v2602
    %v2626 = vmul.f32 %v2622, %v2604
    %v2627 = vmul.f32 %v2623, %v2606
    %v2628 = vmul.f32 %v2624, %v2608
    %v2629 = vsub.f32 %v2625, 0.28449672
    %v2630 = vsub.f32 %v2626, 0.28449672
    %v2631 = vsub.f32 %v2627, 0.28449672
    %v2632 = vsub.f32 %v2628, 0.28449672
    %v2633 = vmul.f32 %v2629, %v2602
    %v2634 = vmul.f32 %v2630, %v2604
    %v2635 = vmul.f32 %v2631, %v2606
    %v2636 = vmul.f32 %v2632, %v2608
    %v2637 = vadd.f32 %v2633, 0.2548296
    %v2638 = vadd.f32 %v2634, 0.2548296
    %v2639 = vadd.f32 %v2635, 0.2548296
    %v2640 = vadd.f32 %v2636, 0.2548296
    %v2641 = vmul.f32 %v2637, %v2602
    %v2642 = vmul.f32 %v2638, %v2604
    %v2643 = vmul.f32 %v2639, %v2606
    %v2644 = vmul.f32 %v2640, %v2608
    %v2645 = vsub.f32 0.0, %v2589
    %v2646 = vsub.f32 0.0, %v2590
    %v2647 = vsub.f32 0.0, %v2591
    %v2648 = vsub.f32 0.0, %v2592
    %v2649 = vmul.f32 %v2645, %v2589
    %v2650 = vmul.f32 %v2646, %v2590
    %v2651 = vmul.f32 %v2647, %v2591
    %v2652 = vmul.f32 %v2648, %v2592
    %v2653 = vmul.f32 %v2649, 1.442695
    %v2654 = vpow.pop %v2653
    %v2655 = vmul.f32 %v2650, 1.442695
    %v2656 = vpow.pop %v2655
    %v2657 = vmul.f32 %v2651, 1.442695
    %v2658 = vpow.pop %v2657
    %v2659 = vmul.f32 %v2652, 1.442695
    %v2660 = vpow.pop %v2659
    %v2661 = vmul.f32 %v2641, %v2654
    %v2662 = vmul.f32 %v2642, %v2656
    %v2663 = vmul.f32 %v2643, %v2658
    %v2664 = vmul.f32 %v2644, %v2660
    %v2665 = vsub.f32 1.0, %v2661
    %v2666 = vsub.f32 1.0, %v2662
    %v2667 = vsub.f32 1.0, %v2663
    %v2668 = vsub.f32 1.0, %v2664
    %v2669 = vmul.f32 %v2585, %v2665
    %v2670 = vmul.f32 %v2586, %v2666
    %v2671 = vmul.f32 %v2587, %v2667
    %v2672 = vmul.f32 %v2588, %v2668
    %v2673 = vadd.f32 %v2669, 1.0
    %v2674 = vadd.f32 %v2670, 1.0
    %v2675 = vadd.f32 %v2671, 1.0
    %v2676 = vadd.f32 %v2672, 1.0
    %v2677 = vmul.f32 %v2573, %v2673
    %v2678 = vmul.f32 %v2574, %v2674
    %v2679 = vmul.f32 %v2575, %v2675
    %v2680 = vmul.f32 %v2576, %v2676
    %v2681 = vld [vmem:[%s10] sm:$0xff]
    %v2682 = vld [vmem:[%s10 + $0x8] sm:$0xff]
    %v2683 = vld [vmem:[%s10 + $0x10] sm:$0xff]
    %v2684 = vld [vmem:[%s10 + $0x18] sm:$0xff]
    %v2685 = vld [vmem:[%s10 + $0x20] sm:$0xff]
    %v2686 = vld [vmem:[%s10 + $0x28] sm:$0xff]
    %v2687 = vld [vmem:[%s10 + $0x30] sm:$0xff]
    %v2688 = vld [vmem:[%s10 + $0x38] sm:$0xff]
    %v2689 = vld [vmem:[%s10 + $0x40] sm:$0xff]
    %v2690 = vld [vmem:[%s10 + $0x48] sm:$0xff]
    %v2691 = vld [vmem:[%s10 + $0x50] sm:$0xff]
    %v2692 = vld [vmem:[%s10 + $0x58] sm:$0xff]
    %v2693 = vld [vmem:[%s10 + $0x60] sm:$0xff]
    %v2694 = vld [vmem:[%s10 + $0x68] sm:$0xff]
    %v2695 = vld [vmem:[%s10 + $0x70] sm:$0xff]
    %v2696 = vld [vmem:[%s10 + $0x78] sm:$0xff]
    %v2697 = vld [vmem:[%s10 + $0x80] sm:$0xff]
    %v2698 = vld [vmem:[%s10 + $0x88] sm:$0xff]
    %v2699 = vld [vmem:[%s10 + $0x90] sm:$0xff]
    %v2700 = vld [vmem:[%s10 + $0x98] sm:$0xff]
    %v2701 = vld [vmem:[%s10 + $0xa0] sm:$0xff]
    %v2702 = vld [vmem:[%s10 + $0xa8] sm:$0xff]
    %v2703 = vld [vmem:[%s10 + $0xb0] sm:$0xff]
    %v2704 = vld [vmem:[%s10 + $0xb8] sm:$0xff]
    %v2705 = vld [vmem:[%s10 + $0xc0] sm:$0xff]
    %v2706 = vld [vmem:[%s10 + $0xc8] sm:$0xff]
    %v2707 = vld [vmem:[%s10 + $0xd0] sm:$0xff]
    %v2708 = vld [vmem:[%s10 + $0xd8] sm:$0xff]
    %v2709 = vld [vmem:[%s10 + $0xe0] sm:$0xff]
    %v2710 = vld [vmem:[%s10 + $0xe8] sm:$0xff]
    %v2711 = vld [vmem:[%s10 + $0xf0] sm:$0xff]
    %v2712 = vld [vmem:[%s10 + $0xf8] sm:$0xff]
    %2713 = vmatprep.subr.mxu0 0.0
    %2714 = vmatpush1.msra.mxu0 %v2681
    %2715 = vmatprep.subr.mxu0 0.0
    %2716 = vmatpush1.msra.mxu0 %v2682
    %2717 = vmatprep.subr.mxu0 0.0
    %2718 = vmatpush1.msra.mxu0 %v2683
    %2719 = vmatprep.subr.mxu0 0.0
    %2720 = vmatpush1.msra.mxu0 %v2684
    %2721 = vmatprep.subr.mxu0 0.0
    %2722 = vmatpush1.msra.mxu0 %v2685
    %2723 = vmatprep.subr.mxu0 0.0
    %2724 = vmatpush1.msra.mxu0 %v2686
    %2725 = vmatprep.subr.mxu0 0.0
    %2726 = vmatpush1.msra.mxu0 %v2687
    %2727 = vmatprep.subr.mxu0 0.0
    %2728 = vmatpush1.msra.mxu0 %v2688
    %2729 = vmatprep.subr.mxu0 0.0
    %2730 = vmatpush1.msra.mxu0 %v2689
    %2731 = vmatprep.subr.mxu0 0.0
    %2732 = vmatpush1.msra.mxu0 %v2690
    %2733 = vmatprep.subr.mxu0 0.0
    %2734 = vmatpush1.msra.mxu0 %v2691
    %2735 = vmatprep.subr.mxu0 0.0
    %2736 = vmatpush1.msra.mxu0 %v2692
    %2737 = vmatprep.subr.mxu0 0.0
    %2738 = vmatpush1.msra.mxu0 %v2693
    %2739 = vmatprep.subr.mxu0 0.0
    %2740 = vmatpush1.msra.mxu0 %v2694
    %2741 = vmatprep.subr.mxu0 0.0
    %2742 = vmatpush1.msra.mxu0 %v2695
    %2743 = vmatprep.subr.mxu0 0.0
    %2744 = vmatpush1.msra.mxu0 %v2696
    %2745 = vmatprep.subr.mxu0 0.0
    %2746 = vmatpush1.msra.mxu0 %v2697
    %2747 = vmatprep.subr.mxu0 0.0
    %2748 = vmatpush1.msra.mxu0 %v2698
    %2749 = vmatprep.subr.mxu0 0.0
    %2750 = vmatpush1.msra.mxu0 %v2699
    %2751 = vmatprep.subr.mxu0 0.0
    %2752 = vmatpush1.msra.mxu0 %v2700
    %2753 = vmatprep.subr.mxu0 0.0
    %2754 = vmatpush1.msra.mxu0 %v2701
    %2755 = vmatprep.subr.mxu0 0.0
    %2756 = vmatpush1.msra.mxu0 %v2702
    %2757 = vmatprep.subr.mxu0 0.0
    %2758 = vmatpush1.msra.mxu0 %v2703
    %2759 = vmatprep.subr.mxu0 0.0
    %2760 = vmatpush1.msra.mxu0 %v2704
    %2761 = vmatprep.subr.mxu0 0.0
    %2762 = vmatpush1.msra.mxu0 %v2705
    %2763 = vmatprep.subr.mxu0 0.0
    %2764 = vmatpush1.msra.mxu0 %v2706
    %2765 = vmatprep.subr.mxu0 0.0
    %2766 = vmatpush1.msra.mxu0 %v2707
    %2767 = vmatprep.subr.mxu0 0.0
    %2768 = vmatpush1.msra.mxu0 %v2708
    %2769 = vmatprep.subr.mxu0 0.0
    %2770 = vmatpush1.msra.mxu0 %v2709
    %2771 = vmatprep.subr.mxu0 0.0
    %2772 = vmatpush1.msra.mxu0 %v2710
    %2773 = vmatprep.subr.mxu0 0.0
    %2774 = vmatpush1.msra.mxu0 %v2711
    %2775 = vmatprep.subr.mxu0 0.0
    %2776 = vmatpush1.msra.mxu0 %v2712
    %2777 = vmatprep.mubr.f32.mxu0 %v2678
    %2778 = vmatmul.mubr.f32.gmra.mrb[0].mxu0 %v2677
    %v2779 = vpop.f32.mrb[0].mxu0
    %v2780 = vadd.f32 0.0, %v2779
    %v2781 = vpop.f32.mrb[0].mxu0
    %2782 = vmatprep.mubr.f32.mxu0 %v2680
    %2783 = vmatmul.mubr.f32.gmra.mrb[0].mxu0 %v2679
    %v2784 = vpop.f32.mrb[0].mxu0
    %v2785 = vadd.f32 0.0, %v2784
    %v2786 = vpop.f32.mrb[0].mxu0
    %2787 = vdwg.mxu0
    %v2788 = vadd.f32 %v2418, %v2780
    %v2789 = vadd.f32 %v2419, %v2785
    %s2790 = scalar_lea.vmem %s8, 128
    %v2791 = vld [vmem:[%s2790] sm:$0xff]
    %v2792 = vld [vmem:[%s2790 + $0x8] sm:$0xff]
    %v2793 = vld [vmem:[%s2790 + $0x10] sm:$0xff]
    %v2794 = vld [vmem:[%s2790 + $0x18] sm:$0xff]
    %v2795 = vld [vmem:[%s2790 + $0x20] sm:$0xff]
    %v2796 = vld [vmem:[%s2790 + $0x28] sm:$0xff]
    %v2797 = vld [vmem:[%s2790 + $0x30] sm:$0xff]
    %v2798 = vld [vmem:[%s2790 + $0x38] sm:$0xff]
    %v2799 = vld [vmem:[%s2790 + $0x40] sm:$0xff]
    %v2800 = vld [vmem:[%s2790 + $0x48] sm:$0xff]
    %v2801 = vld [vmem:[%s2790 + $0x50] sm:$0xff]
    %v2802 = vld [vmem:[%s2790 + $0x58] sm:$0xff]
    %v2803 = vld [vmem:[%s2790 + $0x60] sm:$0xff]
    %v2804 = vld [vmem:[%s2790 + $0x68] sm:$0xff]
    %v2805 = vld [vmem:[%s2790 + $0x70] sm:$0xff]
    %v2806 = vld [vmem:[%s2790 + $0x78] sm:$0xff]
    %2807 = vmatprep.subr.mxu0 %v2792
    %2808 = vmatpush1.msra.mxu0 %v2791
    %2809 = vmatprep.subr.mxu0 %v2794
    %2810 = vmatpush1.msra.mxu0 %v2793
    %2811 = vmatprep.subr.mxu0 %v2796
    %2812 = vmatpush1.msra.mxu0 %v2795
    %2813 = vmatprep.subr.mxu0 %v2798
    %2814 = vmatpush1.msra.mxu0 %v2797
    %2815 = vmatprep.subr.mxu0 %v2800
    %2816 = vmatpush1.msra.mxu0 %v2799
    %2817 = vmatprep.subr.mxu0 %v2802
    %2818 = vmatpush1.msra.mxu0 %v2801
    %2819 = vmatprep.subr.mxu0 %v2804
    %2820 = vmatpush1.msra.mxu0 %v2803
    %2821 = vmatprep.subr.mxu0 %v2806
    %2822 = vmatpush1.msra.mxu0 %v2805
    %2823 = vmatprep.subr.mxu0 0.0
    %2824 = vmatpush1.msra.mxu0 0.0
    %2825 = vmatprep.subr.mxu0 0.0
    %2826 = vmatpush1.msra.mxu0 0.0
    %2827 = vmatprep.subr.mxu0 0.0
    %2828 = vmatpush1.msra.mxu0 0.0
    %2829 = vmatprep.subr.mxu0 0.0
    %2830 = vmatpush1.msra.mxu0 0.0
    %2831 = vmatprep.subr.mxu0 0.0
    %2832 = vmatpush1.msra.mxu0 0.0
    %2833 = vmatprep.subr.mxu0 0.0
    %2834 = vmatpush1.msra.mxu0 0.0
    %2835 = vmatprep.subr.mxu0 0.0
    %2836 = vmatpush1.msra.mxu0 0.0
    %2837 = vmatprep.subr.mxu0 0.0
    %2838 = vmatpush1.msra.mxu0 0.0
    %2839 = vmatprep.subr.mxu0 0.0
    %2840 = vmatpush1.msra.mxu0 0.0
    %2841 = vmatprep.subr.mxu0 0.0
    %2842 = vmatpush1.msra.mxu0 0.0
    %2843 = vmatprep.subr.mxu0 0.0
    %2844 = vmatpush1.msra.mxu0 0.0
    %2845 = vmatprep.subr.mxu0 0.0
    %2846 = vmatpush1.msra.mxu0 0.0
    %2847 = vmatprep.subr.mxu0 0.0
    %2848 = vmatpush1.msra.mxu0 0.0
    %2849 = vmatprep.subr.mxu0 0.0
    %2850 = vmatpush1.msra.mxu0 0.0
    %2851 = vmatprep.subr.mxu0 0.0
    %2852 = vmatpush1.msra.mxu0 0.0
    %2853 = vmatprep.subr.mxu0 0.0
    %2854 = vmatpush1.msra.mxu0 0.0
    %2855 = vmatprep.subr.mxu0 0.0
    %2856 = vmatpush1.msra.mxu0 0.0
    %2857 = vmatprep.subr.mxu0 0.0
    %2858 = vmatpush1.msra.mxu0 0.0
    %2859 = vmatprep.subr.mxu0 0.0
    %2860 = vmatpush1.msra.mxu0 0.0
    %2861 = vmatprep.subr.mxu0 0.0
    %2862 = vmatpush1.msra.mxu0 0.0
    %2863 = vmatprep.subr.mxu0 0.0
    %2864 = vmatpush1.msra.mxu0 0.0
    %2865 = vmatprep.subr.mxu0 0.0
    %2866 = vmatpush1.msra.mxu0 0.0
    %2867 = vmatprep.subr.mxu0 0.0
    %2868 = vmatpush1.msra.mxu0 0.0
    %2869 = vmatprep.subr.mxu0 0.0
    %2870 = vmatpush1.msra.mxu0 0.0
    %2871 = vmatprep.mubr.f32.mxu0 0.0
    %2872 = vmatmul.mubr.f32.gmra.mrb[0].mxu0 %v438
    %v2873 = vpop.f32.mrb[0].mxu0
    %v2874 = vadd.f32 0.0, %v2873
    %v2875 = vpop.f32.mrb[0].mxu0
    %v2876 = vadd.f32 0.0, %v2875
    %2877 = vmatprep.mubr.f32.mxu0 0.0
    %2878 = vmatmul.mubr.f32.gmra.mrb[0].mxu0 %v441
    %v2879 = vpop.f32.mrb[0].mxu0
    %v2880 = vadd.f32 0.0, %v2879
    %v2881 = vpop.f32.mrb[0].mxu0
    %v2882 = vadd.f32 0.0, %v2881
    %2883 = vdwg.mxu0
    %v2884 = vld [vmem:[#allocation5 + $0x16] sm:$0x1]
    %v2885 = vlaneseq
    %v2886 = vshrl.u32 %v2885, 7
    %v2887 = vsub.s32 0, %v2886
    %v2888 = vrot.slane %v2884, %v2887
    %v2889 = vadd.f32 %v2874, %v2888
    %v2890 = vadd.f32 %v2880, %v2888
    %v2891 = vld [vmem:[#allocation5 + $0x17] sm:$0x1]
    %v2892 = vlaneseq
    %v2893 = vshrl.u32 %v2892, 7
    %v2894 = vsub.s32 0, %v2893
    %v2895 = vrot.slane %v2891, %v2894
    %2897 = vrot.lane.b32.xlu0 %v2895, 64
    %v2898 = vpop.permute.xlu0 %2897
    %v2900 = vadd.f32 %v2874, %v2898
    %v2901 = vadd.f32 %v2880, %v2898
    %v2902 = vld [vmem:[#allocation5 + $0x18] sm:$0x1]
    %v2903 = vlaneseq
    %v2904 = vshrl.u32 %v2903, 7
    %v2905 = vsub.s32 0, %v2904
    %v2906 = vrot.slane %v2902, %v2905
    %v2907 = vadd.f32 %v2876, %v2906
    %v2908 = vadd.f32 %v2882, %v2906
    %v2909 = vld [vmem:[#allocation5 + $0x19] sm:$0x1]
    %v2910 = vlaneseq
    %v2911 = vshrl.u32 %v2910, 7
    %v2912 = vsub.s32 0, %v2911
    %v2913 = vrot.slane %v2909, %v2912
    %2915 = vrot.lane.b32.xlu0 %v2913, 64
    %v2916 = vpop.permute.xlu0 %2915
    %v2918 = vadd.f32 %v2876, %v2916
    %v2919 = vadd.f32 %v2882, %v2916
    %v2920 = vld [vmem:[#allocation5 + $0x10] sm:$0x1]
    %v2921 = vld [vmem:[#allocation5 + $0x11] sm:$0x1]
    %v2922 = vlaneseq
    %v2923 = vshrl.u32 %v2922, 7
    %v2924 = vsub.s32 0, %v2923
    %v2925 = vrot.slane %v2920, %v2924
    %v2926 = vmul.f32 %v607, %v2925
    %v2927 = vmul.f32 %v608, %v2925
    %v2928 = vmul.f32 %v609, %v2925
    %v2929 = vmul.f32 %v610, %v2925
    %v2930 = vlaneseq
    %v2931 = vshrl.u32 %v2930, 7
    %v2932 = vsub.s32 0, %v2931
    %v2933 = vrot.slane %v2921, %v2932
    %v2934 = vadd.f32 %v2926, %v2933
    %v2935 = vadd.f32 %v2927, %v2933
    %v2936 = vadd.f32 %v2928, %v2933
    %v2937 = vadd.f32 %v2929, %v2933
    %v2938 = vld [vmem:[#allocation5 + $0x12] sm:$0x1]
    %v2939 = vld [vmem:[#allocation5 + $0x13] sm:$0x1]
    %v2940 = vsel %vm209, %v2788, 0.0
    %2941 = vadd.xlane.f32.xlu0 %v2940
    %v2942 = vpop.xlane.xlu0 %2941
    %v2943 = vsel %vm209, %v2789, 0.0
    %2944 = vadd.xlane.f32.xlu0 %v2943
    %v2945 = vpop.xlane.xlu0 %2944
    %v2946 = vmul.f32 %v2942, %v570
    %v2947 = vmul.f32 %v2945, %v570
    %v2948 = vsub.f32 %v2788, %v2946
    %v2949 = vsub.f32 %v2789, %v2947
    %v2950 = vmul.f32 %v2948, %v2948
    %v2951 = vmul.f32 %v2949, %v2949
    %v2952 = vsel %vm209, %v2950, 0.0
    %2953 = vadd.xlane.f32.xlu0 %v2952
    %v2954 = vpop.xlane.xlu0 %2953
    %v2955 = vsel %vm209, %v2951, 0.0
    %2956 = vadd.xlane.f32.xlu0 %v2955
    %v2957 = vpop.xlane.xlu0 %2956
    %v2958 = vmul.f32 %v2954, %v570
    %v2959 = vmul.f32 %v2957, %v570
    %v2960 = vadd.f32 %v2958, 1e-05
    %v2961 = vadd.f32 %v2959, 1e-05
    %v2962 = vrsqrt.pop %v2960
    %v2963 = vrsqrt.pop %v2961
    %v2964 = vmul.f32 %v2948, %v2962
    %v2965 = vmul.f32 %v2949, %v2963
    %v2966 = vlaneseq
    %v2967 = vshrl.u32 %v2966, 7
    %v2968 = vsub.s32 0, %v2967
    %v2969 = vrot.slane %v2938, %v2968
    %v2970 = vmul.f32 %v2964, %v2969
    %v2971 = vmul.f32 %v2965, %v2969
    %v2972 = vlaneseq
    %v2973 = vshrl.u32 %v2972, 7
    %v2974 = vsub.s32 0, %v2973
    %v2975 = vrot.slane %v2939, %v2974
    %v2976 = vadd.f32 %v2970, %v2975
    %v2977 = vadd.f32 %v2971, %v2975
    %v2978 = vadd.f32 %v2900, 1.0
    %v2979 = vadd.f32 %v2901, 1.0
    %2982 = vrot.lane.b32.xlu0 %v2978, 64
    %v2983 = vpop.permute.xlu0 %2982
    %2984 = vrot.lane.b32.xlu0 %v2979, 64
    %v2985 = vpop.permute.xlu0 %2984
    %v2988 = vmul.f32 %v2976, %v2983
    %v2989 = vmul.f32 %v2977, %v2985
    %v2990 = vadd.f32 %v2988, %v2889
    %v2991 = vadd.f32 %v2989, %v2890
    %s2992 = scalar_lea.vmem %s6, 256
    %v2993 = vld [vmem:[%s2992] sm:$0xff]
    %v2994 = vld [vmem:[%s2992 + $0x8] sm:$0xff]
    %v2995 = vld [vmem:[%s2992 + $0x10] sm:$0xff]
    %v2996 = vld [vmem:[%s2992 + $0x18] sm:$0xff]
    %v2997 = vld [vmem:[%s2992 + $0x20] sm:$0xff]
    %v2998 = vld [vmem:[%s2992 + $0x28] sm:$0xff]
    %v2999 = vld [vmem:[%s2992 + $0x30] sm:$0xff]
    %v3000 = vld [vmem:[%s2992 + $0x38] sm:$0xff]
    %v3002 = vsel %vm209, %v2990, 0
    %v3005 = vsel %vm209, %v2991, 0
    %3007 = vmatprep.subr.mxu0 0.0
    %3008 = vmatpush1.msra.mxu0 %v2993
    %3009 = vmatprep.subr.mxu0 0.0
    %3010 = vmatpush1.msra.mxu0 %v2994
    %3011 = vmatprep.subr.mxu0 0.0
    %3012 = vmatpush1.msra.mxu0 %v2995
    %3013 = vmatprep.subr.mxu0 0.0
    %3014 = vmatpush1.msra.mxu0 %v2996
    %3015 = vmatprep.subr.mxu0 0.0
    %3016 = vmatpush1.msra.mxu0 %v2997
    %3017 = vmatprep.subr.mxu0 0.0
    %3018 = vmatpush1.msra.mxu0 %v2998
    %3019 = vmatprep.subr.mxu0 0.0
    %3020 = vmatpush1.msra.mxu0 %v2999
    %3021 = vmatprep.subr.mxu0 0.0
    %3022 = vmatpush1.msra.mxu0 %v3000
    %3023 = vmatprep.subr.mxu0 0.0
    %3024 = vmatpush1.msra.mxu0 0.0
    %3025 = vmatprep.subr.mxu0 0.0
    %3026 = vmatpush1.msra.mxu0 0.0
    %3027 = vmatprep.subr.mxu0 0.0
    %3028 = vmatpush1.msra.mxu0 0.0
    %3029 = vmatprep.subr.mxu0 0.0
    %3030 = vmatpush1.msra.mxu0 0.0
    %3031 = vmatprep.subr.mxu0 0.0
    %3032 = vmatpush1.msra.mxu0 0.0
    %3033 = vmatprep.subr.mxu0 0.0
    %3034 = vmatpush1.msra.mxu0 0.0
    %3035 = vmatprep.subr.mxu0 0.0
    %3036 = vmatpush1.msra.mxu0 0.0
    %3037 = vmatprep.subr.mxu0 0.0
    %3038 = vmatpush1.msra.mxu0 0.0
    %3039 = vmatprep.subr.mxu0 0.0
    %3040 = vmatpush1.msra.mxu0 0.0
    %3041 = vmatprep.subr.mxu0 0.0
    %3042 = vmatpush1.msra.mxu0 0.0
    %3043 = vmatprep.subr.mxu0 0.0
    %3044 = vmatpush1.msra.mxu0 0.0
    %3045 = vmatprep.subr.mxu0 0.0
    %3046 = vmatpush1.msra.mxu0 0.0
    %3047 = vmatprep.subr.mxu0 0.0
    %3048 = vmatpush1.msra.mxu0 0.0
    %3049 = vmatprep.subr.mxu0 0.0
    %3050 = vmatpush1.msra.mxu0 0.0
    %3051 = vmatprep.subr.mxu0 0.0
    %3052 = vmatpush1.msra.mxu0 0.0
    %3053 = vmatprep.subr.mxu0 0.0
    %3054 = vmatpush1.msra.mxu0 0.0
    %3055 = vmatprep.subr.mxu0 0.0
    %3056 = vmatpush1.msra.mxu0 0.0
    %3057 = vmatprep.subr.mxu0 0.0
    %3058 = vmatpush1.msra.mxu0 0.0
    %3059 = vmatprep.subr.mxu0 0.0
    %3060 = vmatpush1.msra.mxu0 0.0
    %3061 = vmatprep.subr.mxu0 0.0
    %3062 = vmatpush1.msra.mxu0 0.0
    %3063 = vmatprep.subr.mxu0 0.0
    %3064 = vmatpush1.msra.mxu0 0.0
    %3065 = vmatprep.subr.mxu0 0.0
    %3066 = vmatpush1.msra.mxu0 0.0
    %3067 = vmatprep.subr.mxu0 0.0
    %3068 = vmatpush1.msra.mxu0 0.0
    %3069 = vmatprep.subr.mxu0 0.0
    %3070 = vmatpush1.msra.mxu0 0.0
    %3071 = vmatprep.mubr.f32.mxu0 0.0
    %3072 = vmatmul.mubr.f32.gmra.mrb[0].mxu0 %v3002
    %v3073 = vpop.f32.mrb[0].mxu0
    %v3074 = vadd.f32 0.0, %v3073
    %v3075 = vpop.f32.mrb[0].mxu0
    %3076 = vmatprep.mubr.f32.mxu0 0.0
    %3077 = vmatmul.mubr.f32.gmra.mrb[0].mxu0 %v3005
    %v3078 = vpop.f32.mrb[0].mxu0
    %v3079 = vadd.f32 0.0, %v3078
    %v3080 = vpop.f32.mrb[0].mxu0
    %3081 = vdwg.mxu0
    %s3082 = scalar_lea.vmem %s7, 64
    %v3083 = vld [vmem:[%s3082] sm:$0xff]
    %v3084 = vld [vmem:[%s3082 + $0x8] sm:$0xff]
    %v3085 = vld [vmem:[%s3082 + $0x10] sm:$0xff]
    %v3086 = vld [vmem:[%s3082 + $0x18] sm:$0xff]
    %v3087 = vld [vmem:[%s3082 + $0x20] sm:$0xff]
    %v3088 = vld [vmem:[%s3082 + $0x28] sm:$0xff]
    %v3089 = vld [vmem:[%s3082 + $0x30] sm:$0xff]
    %v3090 = vld [vmem:[%s3082 + $0x38] sm:$0xff]
    %v3092 = vsel %vm209, %v2934, 0
    %v3095 = vsel %vm209, %v2935, 0
    %v3098 = vsel %vm209, %v2936, 0
    %v3101 = vsel %vm209, %v2937, 0
    %3103 = vmatprep.subr.mxu0 0.0
    %3104 = vmatpush1.msra.mxu0 %v3083
    %3105 = vmatprep.subr.mxu0 0.0
    %3106 = vmatpush1.msra.mxu0 %v3084
    %3107 = vmatprep.subr.mxu0 0.0
    %3108 = vmatpush1.msra.mxu0 %v3085
    %3109 = vmatprep.subr.mxu0 0.0
    %3110 = vmatpush1.msra.mxu0 %v3086
    %3111 = vmatprep.subr.mxu0 0.0
    %3112 = vmatpush1.msra.mxu0 %v3087
    %3113 = vmatprep.subr.mxu0 0.0
    %3114 = vmatpush1.msra.mxu0 %v3088
    %3115 = vmatprep.subr.mxu0 0.0
    %3116 = vmatpush1.msra.mxu0 %v3089
    %3117 = vmatprep.subr.mxu0 0.0
    %3118 = vmatpush1.msra.mxu0 %v3090
    %3119 = vmatprep.subr.mxu0 0.0
    %3120 = vmatpush1.msra.mxu0 0.0
    %3121 = vmatprep.subr.mxu0 0.0
    %3122 = vmatpush1.msra.mxu0 0.0
    %3123 = vmatprep.subr.mxu0 0.0
    %3124 = vmatpush1.msra.mxu0 0.0
    %3125 = vmatprep.subr.mxu0 0.0
    %3126 = vmatpush1.msra.mxu0 0.0
    %3127 = vmatprep.subr.mxu0 0.0
    %3128 = vmatpush1.msra.mxu0 0.0
    %3129 = vmatprep.subr.mxu0 0.0
    %3130 = vmatpush1.msra.mxu0 0.0
    %3131 = vmatprep.subr.mxu0 0.0
    %3132 = vmatpush1.msra.mxu0 0.0
    %3133 = vmatprep.subr.mxu0 0.0
    %3134 = vmatpush1.msra.mxu0 0.0
    %3135 = vmatprep.subr.mxu0 0.0
    %3136 = vmatpush1.msra.mxu0 0.0
    %3137 = vmatprep.subr.mxu0 0.0
    %3138 = vmatpush1.msra.mxu0 0.0
    %3139 = vmatprep.subr.mxu0 0.0
    %3140 = vmatpush1.msra.mxu0 0.0
    %3141 = vmatprep.subr.mxu0 0.0
    %3142 = vmatpush1.msra.mxu0 0.0
    %3143 = vmatprep.subr.mxu0 0.0
    %3144 = vmatpush1.msra.mxu0 0.0
    %3145 = vmatprep.subr.mxu0 0.0
    %3146 = vmatpush1.msra.mxu0 0.0
    %3147 = vmatprep.subr.mxu0 0.0
    %3148 = vmatpush1.msra.mxu0 0.0
    %3149 = vmatprep.subr.mxu0 0.0
    %3150 = vmatpush1.msra.mxu0 0.0
    %3151 = vmatprep.subr.mxu0 0.0
    %3152 = vmatpush1.msra.mxu0 0.0
    %3153 = vmatprep.subr.mxu0 0.0
    %3154 = vmatpush1.msra.mxu0 0.0
    %3155 = vmatprep.subr.mxu0 0.0
    %3156 = vmatpush1.msra.mxu0 0.0
    %3157 = vmatprep.subr.mxu0 0.0
    %3158 = vmatpush1.msra.mxu0 0.0
    %3159 = vmatprep.subr.mxu0 0.0
    %3160 = vmatpush1.msra.mxu0 0.0
    %3161 = vmatprep.subr.mxu0 0.0
    %3162 = vmatpush1.msra.mxu0 0.0
    %3163 = vmatprep.subr.mxu0 0.0
    %3164 = vmatpush1.msra.mxu0 0.0
    %3165 = vmatprep.subr.mxu0 0.0
    %3166 = vmatpush1.msra.mxu0 0.0
    %3167 = vmatprep.mubr.f32.mxu0 0.0
    %3168 = vmatmul.mubr.f32.gmra.mrb[0].mxu0 %v3092
    %v3169 = vpop.f32.mrb[0].mxu0
    %v3170 = vadd.f32 0.0, %v3169
    %v3171 = vpop.f32.mrb[0].mxu0
    %3172 = vmatprep.mubr.f32.mxu0 0.0
    %3173 = vmatmul.mubr.f32.gmra.mrb[0].mxu0 %v3095
    %v3174 = vpop.f32.mrb[0].mxu0
    %v3175 = vadd.f32 0.0, %v3174
    %v3176 = vpop.f32.mrb[0].mxu0
    %3177 = vmatprep.mubr.f32.mxu0 0.0
    %3178 = vmatmul.mubr.f32.gmra.mrb[0].mxu0 %v3002
    %v3179 = vpop.f32.mrb[0].mxu0
    %v3180 = vadd.f32 0.0, %v3179
    %v3181 = vpop.f32.mrb[0].mxu0
    %3182 = vmatprep.mubr.f32.mxu0 0.0
    %3183 = vmatmul.mubr.f32.gmra.mrb[0].mxu0 %v3098
    %v3184 = vpop.f32.mrb[0].mxu0
    %v3185 = vadd.f32 0.0, %v3184
    %v3186 = vpop.f32.mrb[0].mxu0
    %3187 = vmatprep.mubr.f32.mxu0 0.0
    %3188 = vmatmul.mubr.f32.gmra.mrb[0].mxu0 %v3101
    %v3189 = vpop.f32.mrb[0].mxu0
    %v3190 = vadd.f32 0.0, %v3189
    %v3191 = vpop.f32.mrb[0].mxu0
    %3192 = vmatprep.mubr.f32.mxu0 0.0
    %3193 = vmatmul.mubr.f32.gmra.mrb[0].mxu0 %v3005
    %v3194 = vpop.f32.mrb[0].mxu0
    %v3195 = vadd.f32 0.0, %v3194
    %v3196 = vpop.f32.mrb[0].mxu0
    %3197 = vdwg.mxu0
    %v3199 = vsel %vm871, %v3074, 0
    %v3202 = vsel %vm871, %v3170, 0
    %v3205 = vsel %vm871, %v3175, 0
    %v3208 = vsel %vm871, %v3180, 0
    %3210 = vmatprep.subr.mxu0 0.0
    %3211 = vmatpush1.xpose.msra.mxu0 %v3202
    %3212 = vmatprep.subr.mxu0 0.0
    %3213 = vmatpush1.xpose.msra.mxu0 %v3205
    %3214 = vmatprep.subr.mxu0 0.0
    %3215 = vmatpush1.xpose.msra.mxu0 %v3208
    %3216 = vmatprep.subr.mxu0 0.0
    %3217 = vmatpush1.xpose.msra.mxu0 0.0
    %3218 = vmatprep.subr.mxu0 0.0
    %3219 = vmatpush1.xpose.msra.mxu0 0.0
    %3220 = vmatprep.subr.mxu0 0.0
    %3221 = vmatpush1.xpose.msra.mxu0 0.0
    %3222 = vmatprep.subr.mxu0 0.0
    %3223 = vmatpush1.xpose.msra.mxu0 0.0
    %3224 = vmatprep.subr.mxu0 0.0
    %3225 = vmatpush1.xpose.msra.mxu0 0.0
    %3226 = vmatprep.subr.mxu0 0.0
    %3227 = vmatpush1.xpose.msra.mxu0 0.0
    %3228 = vmatprep.subr.mxu0 0.0
    %3229 = vmatpush1.xpose.msra.mxu0 0.0
    %3230 = vmatprep.subr.mxu0 0.0
    %3231 = vmatpush1.xpose.msra.mxu0 0.0
    %3232 = vmatprep.subr.mxu0 0.0
    %3233 = vmatpush1.xpose.msra.mxu0 0.0
    %3234 = vmatprep.subr.mxu0 0.0
    %3235 = vmatpush1.xpose.msra.mxu0 0.0
    %3236 = vmatprep.subr.mxu0 0.0
    %3237 = vmatpush1.xpose.msra.mxu0 0.0
    %3238 = vmatprep.subr.mxu0 0.0
    %3239 = vmatpush1.xpose.msra.mxu0 0.0
    %3240 = vmatprep.subr.mxu0 0.0
    %3241 = vmatpush1.xpose.msra.mxu0 0.0
    %3242 = vmatprep.subr.mxu0 0.0
    %3243 = vmatpush1.xpose.msra.mxu0 0.0
    %3244 = vmatprep.subr.mxu0 0.0
    %3245 = vmatpush1.xpose.msra.mxu0 0.0
    %3246 = vmatprep.subr.mxu0 0.0
    %3247 = vmatpush1.xpose.msra.mxu0 0.0
    %3248 = vmatprep.subr.mxu0 0.0
    %3249 = vmatpush1.xpose.msra.mxu0 0.0
    %3250 = vmatprep.subr.mxu0 0.0
    %3251 = vmatpush1.xpose.msra.mxu0 0.0
    %3252 = vmatprep.subr.mxu0 0.0
    %3253 = vmatpush1.xpose.msra.mxu0 0.0
    %3254 = vmatprep.subr.mxu0 0.0
    %3255 = vmatpush1.xpose.msra.mxu0 0.0
    %3256 = vmatprep.subr.mxu0 0.0
    %3257 = vmatpush1.xpose.msra.mxu0 0.0
    %3258 = vmatprep.subr.mxu0 0.0
    %3259 = vmatpush1.xpose.msra.mxu0 0.0
    %3260 = vmatprep.subr.mxu0 0.0
    %3261 = vmatpush1.xpose.msra.mxu0 0.0
    %3262 = vmatprep.subr.mxu0 0.0
    %3263 = vmatpush1.xpose.msra.mxu0 0.0
    %3264 = vmatprep.subr.mxu0 0.0
    %3265 = vmatpush1.xpose.msra.mxu0 0.0
    %3266 = vmatprep.subr.mxu0 0.0
    %3267 = vmatpush1.xpose.msra.mxu0 0.0
    %3268 = vmatprep.subr.mxu0 0.0
    %3269 = vmatpush1.xpose.msra.mxu0 0.0
    %3270 = vmatprep.subr.mxu0 0.0
    %3271 = vmatpush1.xpose.msra.mxu0 0.0
    %3272 = vmatprep.subr.mxu0 0.0
    %3273 = vmatpush1.xpose.msra.mxu0 0.0
    %3274 = vmatprep.mubr.f32.mxu0 0.0
    %3275 = vmatmul.mubr.f32.gmra.mrb[0].mxu0 %v3199
    %v3276 = vpop.f32.mrb[0].mxu0
    %v3277 = vadd.f32 0.0, %v3276
    %v3278 = vpop.f32.mrb[0].mxu0
    %3279 = vdwg.mxu0
    %v3281 = vsel %vm871, %v3079, 0
    %v3284 = vsel %vm871, %v3185, 0
    %v3287 = vsel %vm871, %v3190, 0
    %v3290 = vsel %vm871, %v3195, 0
    %3292 = vmatprep.subr.mxu0 0.0
    %3293 = vmatpush1.xpose.msra.mxu0 %v3284
    %3294 = vmatprep.subr.mxu0 0.0
    %3295 = vmatpush1.xpose.msra.mxu0 %v3287
    %3296 = vmatprep.subr.mxu0 0.0
    %3297 = vmatpush1.xpose.msra.mxu0 %v3290
    %3298 = vmatprep.subr.mxu0 0.0
    %3299 = vmatpush1.xpose.msra.mxu0 0.0
    %3300 = vmatprep.subr.mxu0 0.0
    %3301 = vmatpush1.xpose.msra.mxu0 0.0
    %3302 = vmatprep.subr.mxu0 0.0
    %3303 = vmatpush1.xpose.msra.mxu0 0.0
    %3304 = vmatprep.subr.mxu0 0.0
    %3305 = vmatpush1.xpose.msra.mxu0 0.0
    %3306 = vmatprep.subr.mxu0 0.0
    %3307 = vmatpush1.xpose.msra.mxu0 0.0
    %3308 = vmatprep.subr.mxu0 0.0
    %3309 = vmatpush1.xpose.msra.mxu0 0.0
    %3310 = vmatprep.subr.mxu0 0.0
    %3311 = vmatpush1.xpose.msra.mxu0 0.0
    %3312 = vmatprep.subr.mxu0 0.0
    %3313 = vmatpush1.xpose.msra.mxu0 0.0
    %3314 = vmatprep.subr.mxu0 0.0
    %3315 = vmatpush1.xpose.msra.mxu0 0.0
    %3316 = vmatprep.subr.mxu0 0.0
    %3317 = vmatpush1.xpose.msra.mxu0 0.0
    %3318 = vmatprep.subr.mxu0 0.0
    %3319 = vmatpush1.xpose.msra.mxu0 0.0
    %3320 = vmatprep.subr.mxu0 0.0
    %3321 = vmatpush1.xpose.msra.mxu0 0.0
    %3322 = vmatprep.subr.mxu0 0.0
    %3323 = vmatpush1.xpose.msra.mxu0 0.0
    %3324 = vmatprep.subr.mxu0 0.0
    %3325 = vmatpush1.xpose.msra.mxu0 0.0
    %3326 = vmatprep.subr.mxu0 0.0
    %3327 = vmatpush1.xpose.msra.mxu0 0.0
    %3328 = vmatprep.subr.mxu0 0.0
    %3329 = vmatpush1.xpose.msra.mxu0 0.0
    %3330 = vmatprep.subr.mxu0 0.0
    %3331 = vmatpush1.xpose.msra.mxu0 0.0
    %3332 = vmatprep.subr.mxu0 0.0
    %3333 = vmatpush1.xpose.msra.mxu0 0.0
    %3334 = vmatprep.subr.mxu0 0.0
    %3335 = vmatpush1.xpose.msra.mxu0 0.0
    %3336 = vmatprep.subr.mxu0 0.0
    %3337 = vmatpush1.xpose.msra.mxu0 0.0
    %3338 = vmatprep.subr.mxu0 0.0
    %3339 = vmatpush1.xpose.msra.mxu0 0.0
    %3340 = vmatprep.subr.mxu0 0.0
    %3341 = vmatpush1.xpose.msra.mxu0 0.0
    %3342 = vmatprep.subr.mxu0 0.0
    %3343 = vmatpush1.xpose.msra.mxu0 0.0
    %3344 = vmatprep.subr.mxu0 0.0
    %3345 = vmatpush1.xpose.msra.mxu0 0.0
    %3346 = vmatprep.subr.mxu0 0.0
    %3347 = vmatpush1.xpose.msra.mxu0 0.0
    %3348 = vmatprep.subr.mxu0 0.0
    %3349 = vmatpush1.xpose.msra.mxu0 0.0
    %3350 = vmatprep.subr.mxu0 0.0
    %3351 = vmatpush1.xpose.msra.mxu0 0.0
    %3352 = vmatprep.subr.mxu0 0.0
    %3353 = vmatpush1.xpose.msra.mxu0 0.0
    %3354 = vmatprep.subr.mxu0 0.0
    %3355 = vmatpush1.xpose.msra.mxu0 0.0
    %3356 = vmatprep.mubr.f32.mxu0 0.0
    %3357 = vmatmul.mubr.f32.gmra.mrb[0].mxu0 %v3281
    %v3358 = vpop.f32.mrb[0].mxu0
    %v3359 = vadd.f32 0.0, %v3358
    %v3360 = vpop.f32.mrb[0].mxu0
    %3361 = vdwg.mxu0
    %v3362 = vsel %vm1036, %v3277, -inf
    %3363 = vmax.xlane.f32.xlu0 %v3362
    %v3364 = vpop.xlane.xlu0 %3363
    %v3365 = vsel %vm1036, %v3359, -inf
    %3366 = vmax.xlane.f32.xlu0 %v3365
    %v3367 = vpop.xlane.xlu0 %3366
    %v3368 = vsub.f32 %v3277, %v3364
    %v3369 = vsub.f32 %v3359, %v3367
    %v3370 = vmul.f32 %v3368, 1.442695
    %v3371 = vpow.pop %v3370
    %v3372 = vmul.f32 %v3369, 1.442695
    %v3373 = vpow.pop %v3372
    %v3374 = vsel %vm1036, %v3371, 0.0
    %3375 = vadd.xlane.f32.xlu0 %v3374
    %v3376 = vpop.xlane.xlu0 %3375
    %v3377 = vsel %vm1036, %v3373, 0.0
    %3378 = vadd.xlane.f32.xlu0 %v3377
    %v3379 = vpop.xlane.xlu0 %3378
    %v3380 = vrcp.pop %v3376
    %v3381 = vmul.f32 %v3371, %v3380
    %v3382 = vrcp.pop %v3379
    %v3383 = vmul.f32 %v3373, %v3382
    %3384 = vrot.lane.b32.xlu0 %v3170, 64
    %v3385 = vpop.permute.xlu0 %3384
    %3386 = vrot.lane.b32.xlu0 %v3175, 64
    %v3387 = vpop.permute.xlu0 %3386
    %3388 = vrot.lane.b32.xlu0 %v3180, 64
    %v3389 = vpop.permute.xlu0 %3388
    %v3394 = vsel %vm1036, %v3381, 0
    %3396 = vmatprep.subr.mxu0 0.0
    %3397 = vmatpush1.msra.mxu0 %v3385
    %3398 = vmatprep.subr.mxu0 0.0
    %3399 = vmatpush1.msra.mxu0 %v3387
    %3400 = vmatprep.subr.mxu0 0.0
    %3401 = vmatpush1.msra.mxu0 %v3389
    %3402 = vmatprep.subr.mxu0 0.0
    %3403 = vmatpush1.msra.mxu0 0.0
    %3404 = vmatprep.subr.mxu0 0.0
    %3405 = vmatpush1.msra.mxu0 0.0
    %3406 = vmatprep.subr.mxu0 0.0
    %3407 = vmatpush1.msra.mxu0 0.0
    %3408 = vmatprep.subr.mxu0 0.0
    %3409 = vmatpush1.msra.mxu0 0.0
    %3410 = vmatprep.subr.mxu0 0.0
    %3411 = vmatpush1.msra.mxu0 0.0
    %3412 = vmatprep.subr.mxu0 0.0
    %3413 = vmatpush1.msra.mxu0 0.0
    %3414 = vmatprep.subr.mxu0 0.0
    %3415 = vmatpush1.msra.mxu0 0.0
    %3416 = vmatprep.subr.mxu0 0.0
    %3417 = vmatpush1.msra.mxu0 0.0
    %3418 = vmatprep.subr.mxu0 0.0
    %3419 = vmatpush1.msra.mxu0 0.0
    %3420 = vmatprep.subr.mxu0 0.0
    %3421 = vmatpush1.msra.mxu0 0.0
    %3422 = vmatprep.subr.mxu0 0.0
    %3423 = vmatpush1.msra.mxu0 0.0
    %3424 = vmatprep.subr.mxu0 0.0
    %3425 = vmatpush1.msra.mxu0 0.0
    %3426 = vmatprep.subr.mxu0 0.0
    %3427 = vmatpush1.msra.mxu0 0.0
    %3428 = vmatprep.subr.mxu0 0.0
    %3429 = vmatpush1.msra.mxu0 0.0
    %3430 = vmatprep.subr.mxu0 0.0
    %3431 = vmatpush1.msra.mxu0 0.0
    %3432 = vmatprep.subr.mxu0 0.0
    %3433 = vmatpush1.msra.mxu0 0.0
    %3434 = vmatprep.subr.mxu0 0.0
    %3435 = vmatpush1.msra.mxu0 0.0
    %3436 = vmatprep.subr.mxu0 0.0
    %3437 = vmatpush1.msra.mxu0 0.0
    %3438 = vmatprep.subr.mxu0 0.0
    %3439 = vmatpush1.msra.mxu0 0.0
    %3440 = vmatprep.subr.mxu0 0.0
    %3441 = vmatpush1.msra.mxu0 0.0
    %3442 = vmatprep.subr.mxu0 0.0
    %3443 = vmatpush1.msra.mxu0 0.0
    %3444 = vmatprep.subr.mxu0 0.0
    %3445 = vmatpush1.msra.mxu0 0.0
    %3446 = vmatprep.subr.mxu0 0.0
    %3447 = vmatpush1.msra.mxu0 0.0
    %3448 = vmatprep.subr.mxu0 0.0
    %3449 = vmatpush1.msra.mxu0 0.0
    %3450 = vmatprep.subr.mxu0 0.0
    %3451 = vmatpush1.msra.mxu0 0.0
    %3452 = vmatprep.subr.mxu0 0.0
    %3453 = vmatpush1.msra.mxu0 0.0
    %3454 = vmatprep.subr.mxu0 0.0
    %3455 = vmatpush1.msra.mxu0 0.0
    %3456 = vmatprep.subr.mxu0 0.0
    %3457 = vmatpush1.msra.mxu0 0.0
    %3458 = vmatprep.subr.mxu0 0.0
    %3459 = vmatpush1.msra.mxu0 0.0
    %3460 = vmatprep.mubr.f32.mxu0 0.0
    %3461 = vmatmul.mubr.f32.gmra.mrb[0].mxu0 %v3394
    %v3462 = vpop.f32.mrb[0].mxu0
    %v3463 = vadd.f32 0.0, %v3462
    %v3464 = vpop.f32.mrb[0].mxu0
    %3465 = vdwg.mxu0
    %3466 = vrot.lane.b32.xlu0 %v3185, 64
    %v3467 = vpop.permute.xlu0 %3466
    %3468 = vrot.lane.b32.xlu0 %v3190, 64
    %v3469 = vpop.permute.xlu0 %3468
    %3470 = vrot.lane.b32.xlu0 %v3195, 64
    %v3471 = vpop.permute.xlu0 %3470
    %v3476 = vsel %vm1036, %v3383, 0
    %3478 = vmatprep.subr.mxu0 0.0
    %3479 = vmatpush1.msra.mxu0 %v3467
    %3480 = vmatprep.subr.mxu0 0.0
    %3481 = vmatpush1.msra.mxu0 %v3469
    %3482 = vmatprep.subr.mxu0 0.0
    %3483 = vmatpush1.msra.mxu0 %v3471
    %3484 = vmatprep.subr.mxu0 0.0
    %3485 = vmatpush1.msra.mxu0 0.0
    %3486 = vmatprep.subr.mxu0 0.0
    %3487 = vmatpush1.msra.mxu0 0.0
    %3488 = vmatprep.subr.mxu0 0.0
    %3489 = vmatpush1.msra.mxu0 0.0
    %3490 = vmatprep.subr.mxu0 0.0
    %3491 = vmatpush1.msra.mxu0 0.0
    %3492 = vmatprep.subr.mxu0 0.0
    %3493 = vmatpush1.msra.mxu0 0.0
    %3494 = vmatprep.subr.mxu0 0.0
    %3495 = vmatpush1.msra.mxu0 0.0
    %3496 = vmatprep.subr.mxu0 0.0
    %3497 = vmatpush1.msra.mxu0 0.0
    %3498 = vmatprep.subr.mxu0 0.0
    %3499 = vmatpush1.msra.mxu0 0.0
    %3500 = vmatprep.subr.mxu0 0.0
    %3501 = vmatpush1.msra.mxu0 0.0
    %3502 = vmatprep.subr.mxu0 0.0
    %3503 = vmatpush1.msra.mxu0 0.0
    %3504 = vmatprep.subr.mxu0 0.0
    %3505 = vmatpush1.msra.mxu0 0.0
    %3506 = vmatprep.subr.mxu0 0.0
    %3507 = vmatpush1.msra.mxu0 0.0
    %3508 = vmatprep.subr.mxu0 0.0
    %3509 = vmatpush1.msra.mxu0 0.0
    %3510 = vmatprep.subr.mxu0 0.0
    %3511 = vmatpush1.msra.mxu0 0.0
    %3512 = vmatprep.subr.mxu0 0.0
    %3513 = vmatpush1.msra.mxu0 0.0
    %3514 = vmatprep.subr.mxu0 0.0
    %3515 = vmatpush1.msra.mxu0 0.0
    %3516 = vmatprep.subr.mxu0 0.0
    %3517 = vmatpush1.msra.mxu0 0.0
    %3518 = vmatprep.subr.mxu0 0.0
    %3519 = vmatpush1.msra.mxu0 0.0
    %3520 = vmatprep.subr.mxu0 0.0
    %3521 = vmatpush1.msra.mxu0 0.0
    %3522 = vmatprep.subr.mxu0 0.0
    %3523 = vmatpush1.msra.mxu0 0.0
    %3524 = vmatprep.subr.mxu0 0.0
    %3525 = vmatpush1.msra.mxu0 0.0
    %3526 = vmatprep.subr.mxu0 0.0
    %3527 = vmatpush1.msra.mxu0 0.0
    %3528 = vmatprep.subr.mxu0 0.0
    %3529 = vmatpush1.msra.mxu0 0.0
    %3530 = vmatprep.subr.mxu0 0.0
    %3531 = vmatpush1.msra.mxu0 0.0
    %3532 = vmatprep.subr.mxu0 0.0
    %3533 = vmatpush1.msra.mxu0 0.0
    %3534 = vmatprep.subr.mxu0 0.0
    %3535 = vmatpush1.msra.mxu0 0.0
    %3536 = vmatprep.subr.mxu0 0.0
    %3537 = vmatpush1.msra.mxu0 0.0
    %3538 = vmatprep.subr.mxu0 0.0
    %3539 = vmatpush1.msra.mxu0 0.0
    %3540 = vmatprep.subr.mxu0 0.0
    %3541 = vmatpush1.msra.mxu0 0.0
    %3542 = vmatprep.mubr.f32.mxu0 0.0
    %3543 = vmatmul.mubr.f32.gmra.mrb[0].mxu0 %v3476
    %v3544 = vpop.f32.mrb[0].mxu0
    %v3545 = vadd.f32 0.0, %v3544
    %v3546 = vpop.f32.mrb[0].mxu0
    %3547 = vdwg.mxu0
    %3548 = vrot.lane.b32.xlu0 %v3074, 112
    %v3549 = vpop.permute.xlu0 %3548
    %3550 = vrot.lane.b32.xlu0 %v3170, 112
    %v3551 = vpop.permute.xlu0 %3550
    %3552 = vrot.lane.b32.xlu0 %v3175, 112
    %v3553 = vpop.permute.xlu0 %3552
    %3554 = vrot.lane.b32.xlu0 %v3180, 112
    %v3555 = vpop.permute.xlu0 %3554
    %v3556 = vsel %vm871, %v3549, 0
    %v3558 = vsel %vm871, %v3551, 0
    %v3560 = vsel %vm871, %v3553, 0
    %v3562 = vsel %vm871, %v3555, 0
    %3564 = vmatprep.subr.mxu0 0.0
    %3565 = vmatpush1.xpose.msra.mxu0 %v3558
    %3566 = vmatprep.subr.mxu0 0.0
    %3567 = vmatpush1.xpose.msra.mxu0 %v3560
    %3568 = vmatprep.subr.mxu0 0.0
    %3569 = vmatpush1.xpose.msra.mxu0 %v3562
    %3570 = vmatprep.subr.mxu0 0.0
    %3571 = vmatpush1.xpose.msra.mxu0 0.0
    %3572 = vmatprep.subr.mxu0 0.0
    %3573 = vmatpush1.xpose.msra.mxu0 0.0
    %3574 = vmatprep.subr.mxu0 0.0
    %3575 = vmatpush1.xpose.msra.mxu0 0.0
    %3576 = vmatprep.subr.mxu0 0.0
    %3577 = vmatpush1.xpose.msra.mxu0 0.0
    %3578 = vmatprep.subr.mxu0 0.0
    %3579 = vmatpush1.xpose.msra.mxu0 0.0
    %3580 = vmatprep.subr.mxu0 0.0
    %3581 = vmatpush1.xpose.msra.mxu0 0.0
    %3582 = vmatprep.subr.mxu0 0.0
    %3583 = vmatpush1.xpose.msra.mxu0 0.0
    %3584 = vmatprep.subr.mxu0 0.0
    %3585 = vmatpush1.xpose.msra.mxu0 0.0
    %3586 = vmatprep.subr.mxu0 0.0
    %3587 = vmatpush1.xpose.msra.mxu0 0.0
    %3588 = vmatprep.subr.mxu0 0.0
    %3589 = vmatpush1.xpose.msra.mxu0 0.0
    %3590 = vmatprep.subr.mxu0 0.0
    %3591 = vmatpush1.xpose.msra.mxu0 0.0
    %3592 = vmatprep.subr.mxu0 0.0
    %3593 = vmatpush1.xpose.msra.mxu0 0.0
    %3594 = vmatprep.subr.mxu0 0.0
    %3595 = vmatpush1.xpose.msra.mxu0 0.0
    %3596 = vmatprep.subr.mxu0 0.0
    %3597 = vmatpush1.xpose.msra.mxu0 0.0
    %3598 = vmatprep.subr.mxu0 0.0
    %3599 = vmatpush1.xpose.msra.mxu0 0.0
    %3600 = vmatprep.subr.mxu0 0.0
    %3601 = vmatpush1.xpose.msra.mxu0 0.0
    %3602 = vmatprep.subr.mxu0 0.0
    %3603 = vmatpush1.xpose.msra.mxu0 0.0
    %3604 = vmatprep.subr.mxu0 0.0
    %3605 = vmatpush1.xpose.msra.mxu0 0.0
    %3606 = vmatprep.subr.mxu0 0.0
    %3607 = vmatpush1.xpose.msra.mxu0 0.0
    %3608 = vmatprep.subr.mxu0 0.0
    %3609 = vmatpush1.xpose.msra.mxu0 0.0
    %3610 = vmatprep.subr.mxu0 0.0
    %3611 = vmatpush1.xpose.msra.mxu0 0.0
    %3612 = vmatprep.subr.mxu0 0.0
    %3613 = vmatpush1.xpose.msra.mxu0 0.0
    %3614 = vmatprep.subr.mxu0 0.0
    %3615 = vmatpush1.xpose.msra.mxu0 0.0
    %3616 = vmatprep.subr.mxu0 0.0
    %3617 = vmatpush1.xpose.msra.mxu0 0.0
    %3618 = vmatprep.subr.mxu0 0.0
    %3619 = vmatpush1.xpose.msra.mxu0 0.0
    %3620 = vmatprep.subr.mxu0 0.0
    %3621 = vmatpush1.xpose.msra.mxu0 0.0
    %3622 = vmatprep.subr.mxu0 0.0
    %3623 = vmatpush1.xpose.msra.mxu0 0.0
    %3624 = vmatprep.subr.mxu0 0.0
    %3625 = vmatpush1.xpose.msra.mxu0 0.0
    %3626 = vmatprep.subr.mxu0 0.0
    %3627 = vmatpush1.xpose.msra.mxu0 0.0
    %3628 = vmatprep.mubr.f32.mxu0 0.0
    %3629 = vmatmul.mubr.f32.gmra.mrb[0].mxu0 %v3556
    %v3630 = vpop.f32.mrb[0].mxu0
    %v3631 = vadd.f32 0.0, %v3630
    %v3632 = vpop.f32.mrb[0].mxu0
    %3633 = vdwg.mxu0
    %3634 = vrot.lane.b32.xlu0 %v3079, 112
    %v3635 = vpop.permute.xlu0 %3634
    %3636 = vrot.lane.b32.xlu0 %v3185, 112
    %v3637 = vpop.permute.xlu0 %3636
    %3638 = vrot.lane.b32.xlu0 %v3190, 112
    %v3639 = vpop.permute.xlu0 %3638
    %3640 = vrot.lane.b32.xlu0 %v3195, 112
    %v3641 = vpop.permute.xlu0 %3640
    %v3642 = vsel %vm871, %v3635, 0
    %v3644 = vsel %vm871, %v3637, 0
    %v3646 = vsel %vm871, %v3639, 0
    %v3648 = vsel %vm871, %v3641, 0
    %3650 = vmatprep.subr.mxu0 0.0
    %3651 = vmatpush1.xpose.msra.mxu0 %v3644
    %3652 = vmatprep.subr.mxu0 0.0
    %3653 = vmatpush1.xpose.msra.mxu0 %v3646
    %3654 = vmatprep.subr.mxu0 0.0
    %3655 = vmatpush1.xpose.msra.mxu0 %v3648
    %3656 = vmatprep.subr.mxu0 0.0
    %3657 = vmatpush1.xpose.msra.mxu0 0.0
    %3658 = vmatprep.subr.mxu0 0.0
    %3659 = vmatpush1.xpose.msra.mxu0 0.0
    %3660 = vmatprep.subr.mxu0 0.0
    %3661 = vmatpush1.xpose.msra.mxu0 0.0
    %3662 = vmatprep.subr.mxu0 0.0
    %3663 = vmatpush1.xpose.msra.mxu0 0.0
    %3664 = vmatprep.subr.mxu0 0.0
    %3665 = vmatpush1.xpose.msra.mxu0 0.0
    %3666 = vmatprep.subr.mxu0 0.0
    %3667 = vmatpush1.xpose.msra.mxu0 0.0
    %3668 = vmatprep.subr.mxu0 0.0
    %3669 = vmatpush1.xpose.msra.mxu0 0.0
    %3670 = vmatprep.subr.mxu0 0.0
    %3671 = vmatpush1.xpose.msra.mxu0 0.0
    %3672 = vmatprep.subr.mxu0 0.0
    %3673 = vmatpush1.xpose.msra.mxu0 0.0
    %3674 = vmatprep.subr.mxu0 0.0
    %3675 = vmatpush1.xpose.msra.mxu0 0.0
    %3676 = vmatprep.subr.mxu0 0.0
    %3677 = vmatpush1.xpose.msra.mxu0 0.0
    %3678 = vmatprep.subr.mxu0 0.0
    %3679 = vmatpush1.xpose.msra.mxu0 0.0
    %3680 = vmatprep.subr.mxu0 0.0
    %3681 = vmatpush1.xpose.msra.mxu0 0.0
    %3682 = vmatprep.subr.mxu0 0.0
    %3683 = vmatpush1.xpose.msra.mxu0 0.0
    %3684 = vmatprep.subr.mxu0 0.0
    %3685 = vmatpush1.xpose.msra.mxu0 0.0
    %3686 = vmatprep.subr.mxu0 0.0
    %3687 = vmatpush1.xpose.msra.mxu0 0.0
    %3688 = vmatprep.subr.mxu0 0.0
    %3689 = vmatpush1.xpose.msra.mxu0 0.0
    %3690 = vmatprep.subr.mxu0 0.0
    %3691 = vmatpush1.xpose.msra.mxu0 0.0
    %3692 = vmatprep.subr.mxu0 0.0
    %3693 = vmatpush1.xpose.msra.mxu0 0.0
    %3694 = vmatprep.subr.mxu0 0.0
    %3695 = vmatpush1.xpose.msra.mxu0 0.0
    %3696 = vmatprep.subr.mxu0 0.0
    %3697 = vmatpush1.xpose.msra.mxu0 0.0
    %3698 = vmatprep.subr.mxu0 0.0
    %3699 = vmatpush1.xpose.msra.mxu0 0.0
    %3700 = vmatprep.subr.mxu0 0.0
    %3701 = vmatpush1.xpose.msra.mxu0 0.0
    %3702 = vmatprep.subr.mxu0 0.0
    %3703 = vmatpush1.xpose.msra.mxu0 0.0
    %3704 = vmatprep.subr.mxu0 0.0
    %3705 = vmatpush1.xpose.msra.mxu0 0.0
    %3706 = vmatprep.subr.mxu0 0.0
    %3707 = vmatpush1.xpose.msra.mxu0 0.0
    %3708 = vmatprep.subr.mxu0 0.0
    %3709 = vmatpush1.xpose.msra.mxu0 0.0
    %3710 = vmatprep.subr.mxu0 0.0
    %3711 = vmatpush1.xpose.msra.mxu0 0.0
    %3712 = vmatprep.subr.mxu0 0.0
    %3713 = vmatpush1.xpose.msra.mxu0 0.0
    %3714 = vmatprep.mubr.f32.mxu0 0.0
    %3715 = vmatmul.mubr.f32.gmra.mrb[0].mxu0 %v3642
    %v3716 = vpop.f32.mrb[0].mxu0
    %v3717 = vadd.f32 0.0, %v3716
    %v3718 = vpop.f32.mrb[0].mxu0
    %3719 = vdwg.mxu0
    %v3720 = vsel %vm1036, %v3631, -inf
    %3721 = vmax.xlane.f32.xlu0 %v3720
    %v3722 = vpop.xlane.xlu0 %3721
    %v3723 = vsel %vm1036, %v3717, -inf
    %3724 = vmax.xlane.f32.xlu0 %v3723
    %v3725 = vpop.xlane.xlu0 %3724
    %v3726 = vsub.f32 %v3631, %v3722
    %v3727 = vsub.f32 %v3717, %v3725
    %v3728 = vmul.f32 %v3726, 1.442695
    %v3729 = vpow.pop %v3728
    %v3730 = vmul.f32 %v3727, 1.442695
    %v3731 = vpow.pop %v3730
    %v3732 = vsel %vm1036, %v3729, 0.0
    %3733 = vadd.xlane.f32.xlu0 %v3732
    %v3734 = vpop.xlane.xlu0 %3733
    %v3735 = vsel %vm1036, %v3731, 0.0
    %3736 = vadd.xlane.f32.xlu0 %v3735
    %v3737 = vpop.xlane.xlu0 %3736
    %v3738 = vrcp.pop %v3734
    %v3739 = vmul.f32 %v3729, %v3738
    %v3740 = vrcp.pop %v3737
    %v3741 = vmul.f32 %v3731, %v3740
    %3742 = vrot.lane.b32.xlu0 %v3170, 48
    %v3743 = vpop.permute.xlu0 %3742
    %3744 = vrot.lane.b32.xlu0 %v3175, 48
    %v3745 = vpop.permute.xlu0 %3744
    %3746 = vrot.lane.b32.xlu0 %v3180, 48
    %v3747 = vpop.permute.xlu0 %3746
    %v3752 = vsel %vm1036, %v3739, 0
    %3754 = vmatprep.subr.mxu0 0.0
    %3755 = vmatpush1.msra.mxu0 %v3743
    %3756 = vmatprep.subr.mxu0 0.0
    %3757 = vmatpush1.msra.mxu0 %v3745
    %3758 = vmatprep.subr.mxu0 0.0
    %3759 = vmatpush1.msra.mxu0 %v3747
    %3760 = vmatprep.subr.mxu0 0.0
    %3761 = vmatpush1.msra.mxu0 0.0
    %3762 = vmatprep.subr.mxu0 0.0
    %3763 = vmatpush1.msra.mxu0 0.0
    %3764 = vmatprep.subr.mxu0 0.0
    %3765 = vmatpush1.msra.mxu0 0.0
    %3766 = vmatprep.subr.mxu0 0.0
    %3767 = vmatpush1.msra.mxu0 0.0
    %3768 = vmatprep.subr.mxu0 0.0
    %3769 = vmatpush1.msra.mxu0 0.0
    %3770 = vmatprep.subr.mxu0 0.0
    %3771 = vmatpush1.msra.mxu0 0.0
    %3772 = vmatprep.subr.mxu0 0.0
    %3773 = vmatpush1.msra.mxu0 0.0
    %3774 = vmatprep.subr.mxu0 0.0
    %3775 = vmatpush1.msra.mxu0 0.0
    %3776 = vmatprep.subr.mxu0 0.0
    %3777 = vmatpush1.msra.mxu0 0.0
    %3778 = vmatprep.subr.mxu0 0.0
    %3779 = vmatpush1.msra.mxu0 0.0
    %3780 = vmatprep.subr.mxu0 0.0
    %3781 = vmatpush1.msra.mxu0 0.0
    %3782 = vmatprep.subr.mxu0 0.0
    %3783 = vmatpush1.msra.mxu0 0.0
    %3784 = vmatprep.subr.mxu0 0.0
    %3785 = vmatpush1.msra.mxu0 0.0
    %3786 = vmatprep.subr.mxu0 0.0
    %3787 = vmatpush1.msra.mxu0 0.0
    %3788 = vmatprep.subr.mxu0 0.0
    %3789 = vmatpush1.msra.mxu0 0.0
    %3790 = vmatprep.subr.mxu0 0.0
    %3791 = vmatpush1.msra.mxu0 0.0
    %3792 = vmatprep.subr.mxu0 0.0
    %3793 = vmatpush1.msra.mxu0 0.0
    %3794 = vmatprep.subr.mxu0 0.0
    %3795 = vmatpush1.msra.mxu0 0.0
    %3796 = vmatprep.subr.mxu0 0.0
    %3797 = vmatpush1.msra.mxu0 0.0
    %3798 = vmatprep.subr.mxu0 0.0
    %3799 = vmatpush1.msra.mxu0 0.0
    %3800 = vmatprep.subr.mxu0 0.0
    %3801 = vmatpush1.msra.mxu0 0.0
    %3802 = vmatprep.subr.mxu0 0.0
    %3803 = vmatpush1.msra.mxu0 0.0
    %3804 = vmatprep.subr.mxu0 0.0
    %3805 = vmatpush1.msra.mxu0 0.0
    %3806 = vmatprep.subr.mxu0 0.0
    %3807 = vmatpush1.msra.mxu0 0.0
    %3808 = vmatprep.subr.mxu0 0.0
    %3809 = vmatpush1.msra.mxu0 0.0
    %3810 = vmatprep.subr.mxu0 0.0
    %3811 = vmatpush1.msra.mxu0 0.0
    %3812 = vmatprep.subr.mxu0 0.0
    %3813 = vmatpush1.msra.mxu0 0.0
    %3814 = vmatprep.subr.mxu0 0.0
    %3815 = vmatpush1.msra.mxu0 0.0
    %3816 = vmatprep.subr.mxu0 0.0
    %3817 = vmatpush1.msra.mxu0 0.0
    %3818 = vmatprep.mubr.f32.mxu0 0.0
    %3819 = vmatmul.mubr.f32.gmra.mrb[0].mxu0 %v3752
    %v3820 = vpop.f32.mrb[0].mxu0
    %v3821 = vadd.f32 0.0, %v3820
    %v3822 = vpop.f32.mrb[0].mxu0
    %3823 = vdwg.mxu0
    %3824 = vrot.lane.b32.xlu0 %v3185, 48
    %v3825 = vpop.permute.xlu0 %3824
    %3826 = vrot.lane.b32.xlu0 %v3190, 48
    %v3827 = vpop.permute.xlu0 %3826
    %3828 = vrot.lane.b32.xlu0 %v3195, 48
    %v3829 = vpop.permute.xlu0 %3828
    %v3834 = vsel %vm1036, %v3741, 0
    %3836 = vmatprep.subr.mxu0 0.0
    %3837 = vmatpush1.msra.mxu0 %v3825
    %3838 = vmatprep.subr.mxu0 0.0
    %3839 = vmatpush1.msra.mxu0 %v3827
    %3840 = vmatprep.subr.mxu0 0.0
    %3841 = vmatpush1.msra.mxu0 %v3829
    %3842 = vmatprep.subr.mxu0 0.0
    %3843 = vmatpush1.msra.mxu0 0.0
    %3844 = vmatprep.subr.mxu0 0.0
    %3845 = vmatpush1.msra.mxu0 0.0
    %3846 = vmatprep.subr.mxu0 0.0
    %3847 = vmatpush1.msra.mxu0 0.0
    %3848 = vmatprep.subr.mxu0 0.0
    %3849 = vmatpush1.msra.mxu0 0.0
    %3850 = vmatprep.subr.mxu0 0.0
    %3851 = vmatpush1.msra.mxu0 0.0
    %3852 = vmatprep.subr.mxu0 0.0
    %3853 = vmatpush1.msra.mxu0 0.0
    %3854 = vmatprep.subr.mxu0 0.0
    %3855 = vmatpush1.msra.mxu0 0.0
    %3856 = vmatprep.subr.mxu0 0.0
    %3857 = vmatpush1.msra.mxu0 0.0
    %3858 = vmatprep.subr.mxu0 0.0
    %3859 = vmatpush1.msra.mxu0 0.0
    %3860 = vmatprep.subr.mxu0 0.0
    %3861 = vmatpush1.msra.mxu0 0.0
    %3862 = vmatprep.subr.mxu0 0.0
    %3863 = vmatpush1.msra.mxu0 0.0
    %3864 = vmatprep.subr.mxu0 0.0
    %3865 = vmatpush1.msra.mxu0 0.0
    %3866 = vmatprep.subr.mxu0 0.0
    %3867 = vmatpush1.msra.mxu0 0.0
    %3868 = vmatprep.subr.mxu0 0.0
    %3869 = vmatpush1.msra.mxu0 0.0
    %3870 = vmatprep.subr.mxu0 0.0
    %3871 = vmatpush1.msra.mxu0 0.0
    %3872 = vmatprep.subr.mxu0 0.0
    %3873 = vmatpush1.msra.mxu0 0.0
    %3874 = vmatprep.subr.mxu0 0.0
    %3875 = vmatpush1.msra.mxu0 0.0
    %3876 = vmatprep.subr.mxu0 0.0
    %3877 = vmatpush1.msra.mxu0 0.0
    %3878 = vmatprep.subr.mxu0 0.0
    %3879 = vmatpush1.msra.mxu0 0.0
    %3880 = vmatprep.subr.mxu0 0.0
    %3881 = vmatpush1.msra.mxu0 0.0
    %3882 = vmatprep.subr.mxu0 0.0
    %3883 = vmatpush1.msra.mxu0 0.0
    %3884 = vmatprep.subr.mxu0 0.0
    %3885 = vmatpush1.msra.mxu0 0.0
    %3886 = vmatprep.subr.mxu0 0.0
    %3887 = vmatpush1.msra.mxu0 0.0
    %3888 = vmatprep.subr.mxu0 0.0
    %3889 = vmatpush1.msra.mxu0 0.0
    %3890 = vmatprep.subr.mxu0 0.0
    %3891 = vmatpush1.msra.mxu0 0.0
    %3892 = vmatprep.subr.mxu0 0.0
    %3893 = vmatpush1.msra.mxu0 0.0
    %3894 = vmatprep.subr.mxu0 0.0
    %3895 = vmatpush1.msra.mxu0 0.0
    %3896 = vmatprep.subr.mxu0 0.0
    %3897 = vmatpush1.msra.mxu0 0.0
    %3898 = vmatprep.subr.mxu0 0.0
    %3899 = vmatpush1.msra.mxu0 0.0
    %3900 = vmatprep.mubr.f32.mxu0 0.0
    %3901 = vmatmul.mubr.f32.gmra.mrb[0].mxu0 %v3834
    %v3902 = vpop.f32.mrb[0].mxu0
    %v3903 = vadd.f32 0.0, %v3902
    %v3904 = vpop.f32.mrb[0].mxu0
    %3905 = vdwg.mxu0
    %3906 = vrot.lane.b32.xlu0 %v3074, 96
    %v3907 = vpop.permute.xlu0 %3906
    %3908 = vrot.lane.b32.xlu0 %v3170, 96
    %v3909 = vpop.permute.xlu0 %3908
    %3910 = vrot.lane.b32.xlu0 %v3175, 96
    %v3911 = vpop.permute.xlu0 %3910
    %3912 = vrot.lane.b32.xlu0 %v3180, 96
    %v3913 = vpop.permute.xlu0 %3912
    %v3914 = vsel %vm871, %v3907, 0
    %v3916 = vsel %vm871, %v3909, 0
    %v3918 = vsel %vm871, %v3911, 0
    %v3920 = vsel %vm871, %v3913, 0
    %3922 = vmatprep.subr.mxu0 0.0
    %3923 = vmatpush1.xpose.msra.mxu0 %v3916
    %3924 = vmatprep.subr.mxu0 0.0
    %3925 = vmatpush1.xpose.msra.mxu0 %v3918
    %3926 = vmatprep.subr.mxu0 0.0
    %3927 = vmatpush1.xpose.msra.mxu0 %v3920
    %3928 = vmatprep.subr.mxu0 0.0
    %3929 = vmatpush1.xpose.msra.mxu0 0.0
    %3930 = vmatprep.subr.mxu0 0.0
    %3931 = vmatpush1.xpose.msra.mxu0 0.0
    %3932 = vmatprep.subr.mxu0 0.0
    %3933 = vmatpush1.xpose.msra.mxu0 0.0
    %3934 = vmatprep.subr.mxu0 0.0
    %3935 = vmatpush1.xpose.msra.mxu0 0.0
    %3936 = vmatprep.subr.mxu0 0.0
    %3937 = vmatpush1.xpose.msra.mxu0 0.0
    %3938 = vmatprep.subr.mxu0 0.0
    %3939 = vmatpush1.xpose.msra.mxu0 0.0
    %3940 = vmatprep.subr.mxu0 0.0
    %3941 = vmatpush1.xpose.msra.mxu0 0.0
    %3942 = vmatprep.subr.mxu0 0.0
    %3943 = vmatpush1.xpose.msra.mxu0 0.0
    %3944 = vmatprep.subr.mxu0 0.0
    %3945 = vmatpush1.xpose.msra.mxu0 0.0
    %3946 = vmatprep.subr.mxu0 0.0
    %3947 = vmatpush1.xpose.msra.mxu0 0.0
    %3948 = vmatprep.subr.mxu0 0.0
    %3949 = vmatpush1.xpose.msra.mxu0 0.0
    %3950 = vmatprep.subr.mxu0 0.0
    %3951 = vmatpush1.xpose.msra.mxu0 0.0
    %3952 = vmatprep.subr.mxu0 0.0
    %3953 = vmatpush1.xpose.msra.mxu0 0.0
    %3954 = vmatprep.subr.mxu0 0.0
    %3955 = vmatpush1.xpose.msra.mxu0 0.0
    %3956 = vmatprep.subr.mxu0 0.0
    %3957 = vmatpush1.xpose.msra.mxu0 0.0
    %3958 = vmatprep.subr.mxu0 0.0
    %3959 = vmatpush1.xpose.msra.mxu0 0.0
    %3960 = vmatprep.subr.mxu0 0.0
    %3961 = vmatpush1.xpose.msra.mxu0 0.0
    %3962 = vmatprep.subr.mxu0 0.0
    %3963 = vmatpush1.xpose.msra.mxu0 0.0
    %3964 = vmatprep.subr.mxu0 0.0
    %3965 = vmatpush1.xpose.msra.mxu0 0.0
    %3966 = vmatprep.subr.mxu0 0.0
    %3967 = vmatpush1.xpose.msra.mxu0 0.0
    %3968 = vmatprep.subr.mxu0 0.0
    %3969 = vmatpush1.xpose.msra.mxu0 0.0
    %3970 = vmatprep.subr.mxu0 0.0
    %3971 = vmatpush1.xpose.msra.mxu0 0.0
    %3972 = vmatprep.subr.mxu0 0.0
    %3973 = vmatpush1.xpose.msra.mxu0 0.0
    %3974 = vmatprep.subr.mxu0 0.0
    %3975 = vmatpush1.xpose.msra.mxu0 0.0
    %3976 = vmatprep.subr.mxu0 0.0
    %3977 = vmatpush1.xpose.msra.mxu0 0.0
    %3978 = vmatprep.subr.mxu0 0.0
    %3979 = vmatpush1.xpose.msra.mxu0 0.0
    %3980 = vmatprep.subr.mxu0 0.0
    %3981 = vmatpush1.xpose.msra.mxu0 0.0
    %3982 = vmatprep.subr.mxu0 0.0
    %3983 = vmatpush1.xpose.msra.mxu0 0.0
    %3984 = vmatprep.subr.mxu0 0.0
    %3985 = vmatpush1.xpose.msra.mxu0 0.0
    %3986 = vmatprep.mubr.f32.mxu0 0.0
    %3987 = vmatmul.mubr.f32.gmra.mrb[0].mxu0 %v3914
    %v3988 = vpop.f32.mrb[0].mxu0
    %v3989 = vadd.f32 0.0, %v3988
    %v3990 = vpop.f32.mrb[0].mxu0
    %3991 = vdwg.mxu0
    %3992 = vrot.lane.b32.xlu0 %v3079, 96
    %v3993 = vpop.permute.xlu0 %3992
    %3994 = vrot.lane.b32.xlu0 %v3185, 96
    %v3995 = vpop.permute.xlu0 %3994
    %3996 = vrot.lane.b32.xlu0 %v3190, 96
    %v3997 = vpop.permute.xlu0 %3996
    %3998 = vrot.lane.b32.xlu0 %v3195, 96
    %v3999 = vpop.permute.xlu0 %3998
    %v4000 = vsel %vm871, %v3993, 0
    %v4002 = vsel %vm871, %v3995, 0
    %v4004 = vsel %vm871, %v3997, 0
    %v4006 = vsel %vm871, %v3999, 0
    %4008 = vmatprep.subr.mxu0 0.0
    %4009 = vmatpush1.xpose.msra.mxu0 %v4002
    %4010 = vmatprep.subr.mxu0 0.0
    %4011 = vmatpush1.xpose.msra.mxu0 %v4004
    %4012 = vmatprep.subr.mxu0 0.0
    %4013 = vmatpush1.xpose.msra.mxu0 %v4006
    %4014 = vmatprep.subr.mxu0 0.0
    %4015 = vmatpush1.xpose.msra.mxu0 0.0
    %4016 = vmatprep.subr.mxu0 0.0
    %4017 = vmatpush1.xpose.msra.mxu0 0.0
    %4018 = vmatprep.subr.mxu0 0.0
    %4019 = vmatpush1.xpose.msra.mxu0 0.0
    %4020 = vmatprep.subr.mxu0 0.0
    %4021 = vmatpush1.xpose.msra.mxu0 0.0
    %4022 = vmatprep.subr.mxu0 0.0
    %4023 = vmatpush1.xpose.msra.mxu0 0.0
    %4024 = vmatprep.subr.mxu0 0.0
    %4025 = vmatpush1.xpose.msra.mxu0 0.0
    %4026 = vmatprep.subr.mxu0 0.0
    %4027 = vmatpush1.xpose.msra.mxu0 0.0
    %4028 = vmatprep.subr.mxu0 0.0
    %4029 = vmatpush1.xpose.msra.mxu0 0.0
    %4030 = vmatprep.subr.mxu0 0.0
    %4031 = vmatpush1.xpose.msra.mxu0 0.0
    %4032 = vmatprep.subr.mxu0 0.0
    %4033 = vmatpush1.xpose.msra.mxu0 0.0
    %4034 = vmatprep.subr.mxu0 0.0
    %4035 = vmatpush1.xpose.msra.mxu0 0.0
    %4036 = vmatprep.subr.mxu0 0.0
    %4037 = vmatpush1.xpose.msra.mxu0 0.0
    %4038 = vmatprep.subr.mxu0 0.0
    %4039 = vmatpush1.xpose.msra.mxu0 0.0
    %4040 = vmatprep.subr.mxu0 0.0
    %4041 = vmatpush1.xpose.msra.mxu0 0.0
    %4042 = vmatprep.subr.mxu0 0.0
    %4043 = vmatpush1.xpose.msra.mxu0 0.0
    %4044 = vmatprep.subr.mxu0 0.0
    %4045 = vmatpush1.xpose.msra.mxu0 0.0
    %4046 = vmatprep.subr.mxu0 0.0
    %4047 = vmatpush1.xpose.msra.mxu0 0.0
    %4048 = vmatprep.subr.mxu0 0.0
    %4049 = vmatpush1.xpose.msra.mxu0 0.0
    %4050 = vmatprep.subr.mxu0 0.0
    %4051 = vmatpush1.xpose.msra.mxu0 0.0
    %4052 = vmatprep.subr.mxu0 0.0
    %4053 = vmatpush1.xpose.msra.mxu0 0.0
    %4054 = vmatprep.subr.mxu0 0.0
    %4055 = vmatpush1.xpose.msra.mxu0 0.0
    %4056 = vmatprep.subr.mxu0 0.0
    %4057 = vmatpush1.xpose.msra.mxu0 0.0
    %4058 = vmatprep.subr.mxu0 0.0
    %4059 = vmatpush1.xpose.msra.mxu0 0.0
    %4060 = vmatprep.subr.mxu0 0.0
    %4061 = vmatpush1.xpose.msra.mxu0 0.0
    %4062 = vmatprep.subr.mxu0 0.0
    %4063 = vmatpush1.xpose.msra.mxu0 0.0
    %4064 = vmatprep.subr.mxu0 0.0
    %4065 = vmatpush1.xpose.msra.mxu0 0.0
    %4066 = vmatprep.subr.mxu0 0.0
    %4067 = vmatpush1.xpose.msra.mxu0 0.0
    %4068 = vmatprep.subr.mxu0 0.0
    %4069 = vmatpush1.xpose.msra.mxu0 0.0
    %4070 = vmatprep.subr.mxu0 0.0
    %4071 = vmatpush1.xpose.msra.mxu0 0.0
    %4072 = vmatprep.mubr.f32.mxu0 0.0
    %4073 = vmatmul.mubr.f32.gmra.mrb[0].mxu0 %v4000
    %v4074 = vpop.f32.mrb[0].mxu0
    %v4075 = vadd.f32 0.0, %v4074
    %v4076 = vpop.f32.mrb[0].mxu0
    %4077 = vdwg.mxu0
    %v4078 = vsel %vm1036, %v3989, -inf
    %4079 = vmax.xlane.f32.xlu0 %v4078
    %v4080 = vpop.xlane.xlu0 %4079
    %v4081 = vsel %vm1036, %v4075, -inf
    %4082 = vmax.xlane.f32.xlu0 %v4081
    %v4083 = vpop.xlane.xlu0 %4082
    %v4084 = vsub.f32 %v3989, %v4080
    %v4085 = vsub.f32 %v4075, %v4083
    %v4086 = vmul.f32 %v4084, 1.442695
    %v4087 = vpow.pop %v4086
    %v4088 = vmul.f32 %v4085, 1.442695
    %v4089 = vpow.pop %v4088
    %v4090 = vsel %vm1036, %v4087, 0.0
    %4091 = vadd.xlane.f32.xlu0 %v4090
    %v4092 = vpop.xlane.xlu0 %4091
    %v4093 = vsel %vm1036, %v4089, 0.0
    %4094 = vadd.xlane.f32.xlu0 %v4093
    %v4095 = vpop.xlane.xlu0 %4094
    %v4096 = vrcp.pop %v4092
    %v4097 = vmul.f32 %v4087, %v4096
    %v4098 = vrcp.pop %v4095
    %v4099 = vmul.f32 %v4089, %v4098
    %4100 = vrot.lane.b32.xlu0 %v3170, 32
    %v4101 = vpop.permute.xlu0 %4100
    %4102 = vrot.lane.b32.xlu0 %v3175, 32
    %v4103 = vpop.permute.xlu0 %4102
    %4104 = vrot.lane.b32.xlu0 %v3180, 32
    %v4105 = vpop.permute.xlu0 %4104
    %v4110 = vsel %vm1036, %v4097, 0
    %4112 = vmatprep.subr.mxu0 0.0
    %4113 = vmatpush1.msra.mxu0 %v4101
    %4114 = vmatprep.subr.mxu0 0.0
    %4115 = vmatpush1.msra.mxu0 %v4103
    %4116 = vmatprep.subr.mxu0 0.0
    %4117 = vmatpush1.msra.mxu0 %v4105
    %4118 = vmatprep.subr.mxu0 0.0
    %4119 = vmatpush1.msra.mxu0 0.0
    %4120 = vmatprep.subr.mxu0 0.0
    %4121 = vmatpush1.msra.mxu0 0.0
    %4122 = vmatprep.subr.mxu0 0.0
    %4123 = vmatpush1.msra.mxu0 0.0
    %4124 = vmatprep.subr.mxu0 0.0
    %4125 = vmatpush1.msra.mxu0 0.0
    %4126 = vmatprep.subr.mxu0 0.0
    %4127 = vmatpush1.msra.mxu0 0.0
    %4128 = vmatprep.subr.mxu0 0.0
    %4129 = vmatpush1.msra.mxu0 0.0
    %4130 = vmatprep.subr.mxu0 0.0
    %4131 = vmatpush1.msra.mxu0 0.0
    %4132 = vmatprep.subr.mxu0 0.0
    %4133 = vmatpush1.msra.mxu0 0.0
    %4134 = vmatprep.subr.mxu0 0.0
    %4135 = vmatpush1.msra.mxu0 0.0
    %4136 = vmatprep.subr.mxu0 0.0
    %4137 = vmatpush1.msra.mxu0 0.0
    %4138 = vmatprep.subr.mxu0 0.0
    %4139 = vmatpush1.msra.mxu0 0.0
    %4140 = vmatprep.subr.mxu0 0.0
    %4141 = vmatpush1.msra.mxu0 0.0
    %4142 = vmatprep.subr.mxu0 0.0
    %4143 = vmatpush1.msra.mxu0 0.0
    %4144 = vmatprep.subr.mxu0 0.0
    %4145 = vmatpush1.msra.mxu0 0.0
    %4146 = vmatprep.subr.mxu0 0.0
    %4147 = vmatpush1.msra.mxu0 0.0
    %4148 = vmatprep.subr.mxu0 0.0
    %4149 = vmatpush1.msra.mxu0 0.0
    %4150 = vmatprep.subr.mxu0 0.0
    %4151 = vmatpush1.msra.mxu0 0.0
    %4152 = vmatprep.subr.mxu0 0.0
    %4153 = vmatpush1.msra.mxu0 0.0
    %4154 = vmatprep.subr.mxu0 0.0
    %4155 = vmatpush1.msra.mxu0 0.0
    %4156 = vmatprep.subr.mxu0 0.0
    %4157 = vmatpush1.msra.mxu0 0.0
    %4158 = vmatprep.subr.mxu0 0.0
    %4159 = vmatpush1.msra.mxu0 0.0
    %4160 = vmatprep.subr.mxu0 0.0
    %4161 = vmatpush1.msra.mxu0 0.0
    %4162 = vmatprep.subr.mxu0 0.0
    %4163 = vmatpush1.msra.mxu0 0.0
    %4164 = vmatprep.subr.mxu0 0.0
    %4165 = vmatpush1.msra.mxu0 0.0
    %4166 = vmatprep.subr.mxu0 0.0
    %4167 = vmatpush1.msra.mxu0 0.0
    %4168 = vmatprep.subr.mxu0 0.0
    %4169 = vmatpush1.msra.mxu0 0.0
    %4170 = vmatprep.subr.mxu0 0.0
    %4171 = vmatpush1.msra.mxu0 0.0
    %4172 = vmatprep.subr.mxu0 0.0
    %4173 = vmatpush1.msra.mxu0 0.0
    %4174 = vmatprep.subr.mxu0 0.0
    %4175 = vmatpush1.msra.mxu0 0.0
    %4176 = vmatprep.mubr.f32.mxu0 0.0
    %4177 = vmatmul.mubr.f32.gmra.mrb[0].mxu0 %v4110
    %v4178 = vpop.f32.mrb[0].mxu0
    %v4179 = vadd.f32 0.0, %v4178
    %v4180 = vpop.f32.mrb[0].mxu0
    %4181 = vdwg.mxu0
    %4182 = vrot.lane.b32.xlu0 %v3185, 32
    %v4183 = vpop.permute.xlu0 %4182
    %4184 = vrot.lane.b32.xlu0 %v3190, 32
    %v4185 = vpop.permute.xlu0 %4184
    %4186 = vrot.lane.b32.xlu0 %v3195, 32
    %v4187 = vpop.permute.xlu0 %4186
    %v4192 = vsel %vm1036, %v4099, 0
    %4194 = vmatprep.subr.mxu0 0.0
    %4195 = vmatpush1.msra.mxu0 %v4183
    %4196 = vmatprep.subr.mxu0 0.0
    %4197 = vmatpush1.msra.mxu0 %v4185
    %4198 = vmatprep.subr.mxu0 0.0
    %4199 = vmatpush1.msra.mxu0 %v4187
    %4200 = vmatprep.subr.mxu0 0.0
    %4201 = vmatpush1.msra.mxu0 0.0
    %4202 = vmatprep.subr.mxu0 0.0
    %4203 = vmatpush1.msra.mxu0 0.0
    %4204 = vmatprep.subr.mxu0 0.0
    %4205 = vmatpush1.msra.mxu0 0.0
    %4206 = vmatprep.subr.mxu0 0.0
    %4207 = vmatpush1.msra.mxu0 0.0
    %4208 = vmatprep.subr.mxu0 0.0
    %4209 = vmatpush1.msra.mxu0 0.0
    %4210 = vmatprep.subr.mxu0 0.0
    %4211 = vmatpush1.msra.mxu0 0.0
    %4212 = vmatprep.subr.mxu0 0.0
    %4213 = vmatpush1.msra.mxu0 0.0
    %4214 = vmatprep.subr.mxu0 0.0
    %4215 = vmatpush1.msra.mxu0 0.0
    %4216 = vmatprep.subr.mxu0 0.0
    %4217 = vmatpush1.msra.mxu0 0.0
    %4218 = vmatprep.subr.mxu0 0.0
    %4219 = vmatpush1.msra.mxu0 0.0
    %4220 = vmatprep.subr.mxu0 0.0
    %4221 = vmatpush1.msra.mxu0 0.0
    %4222 = vmatprep.subr.mxu0 0.0
    %4223 = vmatpush1.msra.mxu0 0.0
    %4224 = vmatprep.subr.mxu0 0.0
    %4225 = vmatpush1.msra.mxu0 0.0
    %4226 = vmatprep.subr.mxu0 0.0
    %4227 = vmatpush1.msra.mxu0 0.0
    %4228 = vmatprep.subr.mxu0 0.0
    %4229 = vmatpush1.msra.mxu0 0.0
    %4230 = vmatprep.subr.mxu0 0.0
    %4231 = vmatpush1.msra.mxu0 0.0
    %4232 = vmatprep.subr.mxu0 0.0
    %4233 = vmatpush1.msra.mxu0 0.0
    %4234 = vmatprep.subr.mxu0 0.0
    %4235 = vmatpush1.msra.mxu0 0.0
    %4236 = vmatprep.subr.mxu0 0.0
    %4237 = vmatpush1.msra.mxu0 0.0
    %4238 = vmatprep.subr.mxu0 0.0
    %4239 = vmatpush1.msra.mxu0 0.0
    %4240 = vmatprep.subr.mxu0 0.0
    %4241 = vmatpush1.msra.mxu0 0.0
    %4242 = vmatprep.subr.mxu0 0.0
    %4243 = vmatpush1.msra.mxu0 0.0
    %4244 = vmatprep.subr.mxu0 0.0
    %4245 = vmatpush1.msra.mxu0 0.0
    %4246 = vmatprep.subr.mxu0 0.0
    %4247 = vmatpush1.msra.mxu0 0.0
    %4248 = vmatprep.subr.mxu0 0.0
    %4249 = vmatpush1.msra.mxu0 0.0
    %4250 = vmatprep.subr.mxu0 0.0
    %4251 = vmatpush1.msra.mxu0 0.0
    %4252 = vmatprep.subr.mxu0 0.0
    %4253 = vmatpush1.msra.mxu0 0.0
    %4254 = vmatprep.subr.mxu0 0.0
    %4255 = vmatpush1.msra.mxu0 0.0
    %4256 = vmatprep.subr.mxu0 0.0
    %4257 = vmatpush1.msra.mxu0 0.0
    %4258 = vmatprep.mubr.f32.mxu0 0.0
    %4259 = vmatmul.mubr.f32.gmra.mrb[0].mxu0 %v4192
    %v4260 = vpop.f32.mrb[0].mxu0
    %v4261 = vadd.f32 0.0, %v4260
    %v4262 = vpop.f32.mrb[0].mxu0
    %4263 = vdwg.mxu0
    %4264 = vrot.lane.b32.xlu0 %v3074, 80
    %v4265 = vpop.permute.xlu0 %4264
    %4266 = vrot.lane.b32.xlu0 %v3170, 80
    %v4267 = vpop.permute.xlu0 %4266
    %4268 = vrot.lane.b32.xlu0 %v3175, 80
    %v4269 = vpop.permute.xlu0 %4268
    %4270 = vrot.lane.b32.xlu0 %v3180, 80
    %v4271 = vpop.permute.xlu0 %4270
    %v4272 = vsel %vm871, %v4265, 0
    %v4274 = vsel %vm871, %v4267, 0
    %v4276 = vsel %vm871, %v4269, 0
    %v4278 = vsel %vm871, %v4271, 0
    %4280 = vmatprep.subr.mxu0 0.0
    %4281 = vmatpush1.xpose.msra.mxu0 %v4274
    %4282 = vmatprep.subr.mxu0 0.0
    %4283 = vmatpush1.xpose.msra.mxu0 %v4276
    %4284 = vmatprep.subr.mxu0 0.0
    %4285 = vmatpush1.xpose.msra.mxu0 %v4278
    %4286 = vmatprep.subr.mxu0 0.0
    %4287 = vmatpush1.xpose.msra.mxu0 0.0
    %4288 = vmatprep.subr.mxu0 0.0
    %4289 = vmatpush1.xpose.msra.mxu0 0.0
    %4290 = vmatprep.subr.mxu0 0.0
    %4291 = vmatpush1.xpose.msra.mxu0 0.0
    %4292 = vmatprep.subr.mxu0 0.0
    %4293 = vmatpush1.xpose.msra.mxu0 0.0
    %4294 = vmatprep.subr.mxu0 0.0
    %4295 = vmatpush1.xpose.msra.mxu0 0.0
    %4296 = vmatprep.subr.mxu0 0.0
    %4297 = vmatpush1.xpose.msra.mxu0 0.0
    %4298 = vmatprep.subr.mxu0 0.0
    %4299 = vmatpush1.xpose.msra.mxu0 0.0
    %4300 = vmatprep.subr.mxu0 0.0
    %4301 = vmatpush1.xpose.msra.mxu0 0.0
    %4302 = vmatprep.subr.mxu0 0.0
    %4303 = vmatpush1.xpose.msra.mxu0 0.0
    %4304 = vmatprep.subr.mxu0 0.0
    %4305 = vmatpush1.xpose.msra.mxu0 0.0
    %4306 = vmatprep.subr.mxu0 0.0
    %4307 = vmatpush1.xpose.msra.mxu0 0.0
    %4308 = vmatprep.subr.mxu0 0.0
    %4309 = vmatpush1.xpose.msra.mxu0 0.0
    %4310 = vmatprep.subr.mxu0 0.0
    %4311 = vmatpush1.xpose.msra.mxu0 0.0
    %4312 = vmatprep.subr.mxu0 0.0
    %4313 = vmatpush1.xpose.msra.mxu0 0.0
    %4314 = vmatprep.subr.mxu0 0.0
    %4315 = vmatpush1.xpose.msra.mxu0 0.0
    %4316 = vmatprep.subr.mxu0 0.0
    %4317 = vmatpush1.xpose.msra.mxu0 0.0
    %4318 = vmatprep.subr.mxu0 0.0
    %4319 = vmatpush1.xpose.msra.mxu0 0.0
    %4320 = vmatprep.subr.mxu0 0.0
    %4321 = vmatpush1.xpose.msra.mxu0 0.0
    %4322 = vmatprep.subr.mxu0 0.0
    %4323 = vmatpush1.xpose.msra.mxu0 0.0
    %4324 = vmatprep.subr.mxu0 0.0
    %4325 = vmatpush1.xpose.msra.mxu0 0.0
    %4326 = vmatprep.subr.mxu0 0.0
    %4327 = vmatpush1.xpose.msra.mxu0 0.0
    %4328 = vmatprep.subr.mxu0 0.0
    %4329 = vmatpush1.xpose.msra.mxu0 0.0
    %4330 = vmatprep.subr.mxu0 0.0
    %4331 = vmatpush1.xpose.msra.mxu0 0.0
    %4332 = vmatprep.subr.mxu0 0.0
    %4333 = vmatpush1.xpose.msra.mxu0 0.0
    %4334 = vmatprep.subr.mxu0 0.0
    %4335 = vmatpush1.xpose.msra.mxu0 0.0
    %4336 = vmatprep.subr.mxu0 0.0
    %4337 = vmatpush1.xpose.msra.mxu0 0.0
    %4338 = vmatprep.subr.mxu0 0.0
    %4339 = vmatpush1.xpose.msra.mxu0 0.0
    %4340 = vmatprep.subr.mxu0 0.0
    %4341 = vmatpush1.xpose.msra.mxu0 0.0
    %4342 = vmatprep.subr.mxu0 0.0
    %4343 = vmatpush1.xpose.msra.mxu0 0.0
    %4344 = vmatprep.mubr.f32.mxu0 0.0
    %4345 = vmatmul.mubr.f32.gmra.mrb[0].mxu0 %v4272
    %v4346 = vpop.f32.mrb[0].mxu0
    %v4347 = vadd.f32 0.0, %v4346
    %v4348 = vpop.f32.mrb[0].mxu0
    %4349 = vdwg.mxu0
    %4350 = vrot.lane.b32.xlu0 %v3079, 80
    %v4351 = vpop.permute.xlu0 %4350
    %4352 = vrot.lane.b32.xlu0 %v3185, 80
    %v4353 = vpop.permute.xlu0 %4352
    %4354 = vrot.lane.b32.xlu0 %v3190, 80
    %v4355 = vpop.permute.xlu0 %4354
    %4356 = vrot.lane.b32.xlu0 %v3195, 80
    %v4357 = vpop.permute.xlu0 %4356
    %v4358 = vsel %vm871, %v4351, 0
    %v4360 = vsel %vm871, %v4353, 0
    %v4362 = vsel %vm871, %v4355, 0
    %v4364 = vsel %vm871, %v4357, 0
    %4366 = vmatprep.subr.mxu0 0.0
    %4367 = vmatpush1.xpose.msra.mxu0 %v4360
    %4368 = vmatprep.subr.mxu0 0.0
    %4369 = vmatpush1.xpose.msra.mxu0 %v4362
    %4370 = vmatprep.subr.mxu0 0.0
    %4371 = vmatpush1.xpose.msra.mxu0 %v4364
    %4372 = vmatprep.subr.mxu0 0.0
    %4373 = vmatpush1.xpose.msra.mxu0 0.0
    %4374 = vmatprep.subr.mxu0 0.0
    %4375 = vmatpush1.xpose.msra.mxu0 0.0
    %4376 = vmatprep.subr.mxu0 0.0
    %4377 = vmatpush1.xpose.msra.mxu0 0.0
    %4378 = vmatprep.subr.mxu0 0.0
    %4379 = vmatpush1.xpose.msra.mxu0 0.0
    %4380 = vmatprep.subr.mxu0 0.0
    %4381 = vmatpush1.xpose.msra.mxu0 0.0
    %4382 = vmatprep.subr.mxu0 0.0
    %4383 = vmatpush1.xpose.msra.mxu0 0.0
    %4384 = vmatprep.subr.mxu0 0.0
    %4385 = vmatpush1.xpose.msra.mxu0 0.0
    %4386 = vmatprep.subr.mxu0 0.0
    %4387 = vmatpush1.xpose.msra.mxu0 0.0
    %4388 = vmatprep.subr.mxu0 0.0
    %4389 = vmatpush1.xpose.msra.mxu0 0.0
    %4390 = vmatprep.subr.mxu0 0.0
    %4391 = vmatpush1.xpose.msra.mxu0 0.0
    %4392 = vmatprep.subr.mxu0 0.0
    %4393 = vmatpush1.xpose.msra.mxu0 0.0
    %4394 = vmatprep.subr.mxu0 0.0
    %4395 = vmatpush1.xpose.msra.mxu0 0.0
    %4396 = vmatprep.subr.mxu0 0.0
    %4397 = vmatpush1.xpose.msra.mxu0 0.0
    %4398 = vmatprep.subr.mxu0 0.0
    %4399 = vmatpush1.xpose.msra.mxu0 0.0
    %4400 = vmatprep.subr.mxu0 0.0
    %4401 = vmatpush1.xpose.msra.mxu0 0.0
    %4402 = vmatprep.subr.mxu0 0.0
    %4403 = vmatpush1.xpose.msra.mxu0 0.0
    %4404 = vmatprep.subr.mxu0 0.0
    %4405 = vmatpush1.xpose.msra.mxu0 0.0
    %4406 = vmatprep.subr.mxu0 0.0
    %4407 = vmatpush1.xpose.msra.mxu0 0.0
    %4408 = vmatprep.subr.mxu0 0.0
    %4409 = vmatpush1.xpose.msra.mxu0 0.0
    %4410 = vmatprep.subr.mxu0 0.0
    %4411 = vmatpush1.xpose.msra.mxu0 0.0
    %4412 = vmatprep.subr.mxu0 0.0
    %4413 = vmatpush1.xpose.msra.mxu0 0.0
    %4414 = vmatprep.subr.mxu0 0.0
    %4415 = vmatpush1.xpose.msra.mxu0 0.0
    %4416 = vmatprep.subr.mxu0 0.0
    %4417 = vmatpush1.xpose.msra.mxu0 0.0
    %4418 = vmatprep.subr.mxu0 0.0
    %4419 = vmatpush1.xpose.msra.mxu0 0.0
    %4420 = vmatprep.subr.mxu0 0.0
    %4421 = vmatpush1.xpose.msra.mxu0 0.0
    %4422 = vmatprep.subr.mxu0 0.0
    %4423 = vmatpush1.xpose.msra.mxu0 0.0
    %4424 = vmatprep.subr.mxu0 0.0
    %4425 = vmatpush1.xpose.msra.mxu0 0.0
    %4426 = vmatprep.subr.mxu0 0.0
    %4427 = vmatpush1.xpose.msra.mxu0 0.0
    %4428 = vmatprep.subr.mxu0 0.0
    %4429 = vmatpush1.xpose.msra.mxu0 0.0
    %4430 = vmatprep.mubr.f32.mxu0 0.0
    %4431 = vmatmul.mubr.f32.gmra.mrb[0].mxu0 %v4358
    %v4432 = vpop.f32.mrb[0].mxu0
    %v4433 = vadd.f32 0.0, %v4432
    %v4434 = vpop.f32.mrb[0].mxu0
    %4435 = vdwg.mxu0
    %v4436 = vsel %vm1036, %v4347, -inf
    %4437 = vmax.xlane.f32.xlu0 %v4436
    %v4438 = vpop.xlane.xlu0 %4437
    %v4439 = vsel %vm1036, %v4433, -inf
    %4440 = vmax.xlane.f32.xlu0 %v4439
    %v4441 = vpop.xlane.xlu0 %4440
    %v4442 = vsub.f32 %v4347, %v4438
    %v4443 = vsub.f32 %v4433, %v4441
    %v4444 = vmul.f32 %v4442, 1.442695
    %v4445 = vpow.pop %v4444
    %v4446 = vmul.f32 %v4443, 1.442695
    %v4447 = vpow.pop %v4446
    %v4448 = vsel %vm1036, %v4445, 0.0
    %4449 = vadd.xlane.f32.xlu0 %v4448
    %v4450 = vpop.xlane.xlu0 %4449
    %v4451 = vsel %vm1036, %v4447, 0.0
    %4452 = vadd.xlane.f32.xlu0 %v4451
    %v4453 = vpop.xlane.xlu0 %4452
    %v4454 = vrcp.pop %v4450
    %v4455 = vmul.f32 %v4445, %v4454
    %v4456 = vrcp.pop %v4453
    %v4457 = vmul.f32 %v4447, %v4456
    %4458 = vrot.lane.b32.xlu0 %v3170, 16
    %v4459 = vpop.permute.xlu0 %4458
    %4460 = vrot.lane.b32.xlu0 %v3175, 16
    %v4461 = vpop.permute.xlu0 %4460
    %4462 = vrot.lane.b32.xlu0 %v3180, 16
    %v4463 = vpop.permute.xlu0 %4462
    %v4468 = vsel %vm1036, %v4455, 0
    %4470 = vmatprep.subr.mxu0 0.0
    %4471 = vmatpush1.msra.mxu0 %v4459
    %4472 = vmatprep.subr.mxu0 0.0
    %4473 = vmatpush1.msra.mxu0 %v4461
    %4474 = vmatprep.subr.mxu0 0.0
    %4475 = vmatpush1.msra.mxu0 %v4463
    %4476 = vmatprep.subr.mxu0 0.0
    %4477 = vmatpush1.msra.mxu0 0.0
    %4478 = vmatprep.subr.mxu0 0.0
    %4479 = vmatpush1.msra.mxu0 0.0
    %4480 = vmatprep.subr.mxu0 0.0
    %4481 = vmatpush1.msra.mxu0 0.0
    %4482 = vmatprep.subr.mxu0 0.0
    %4483 = vmatpush1.msra.mxu0 0.0
    %4484 = vmatprep.subr.mxu0 0.0
    %4485 = vmatpush1.msra.mxu0 0.0
    %4486 = vmatprep.subr.mxu0 0.0
    %4487 = vmatpush1.msra.mxu0 0.0
    %4488 = vmatprep.subr.mxu0 0.0
    %4489 = vmatpush1.msra.mxu0 0.0
    %4490 = vmatprep.subr.mxu0 0.0
    %4491 = vmatpush1.msra.mxu0 0.0
    %4492 = vmatprep.subr.mxu0 0.0
    %4493 = vmatpush1.msra.mxu0 0.0
    %4494 = vmatprep.subr.mxu0 0.0
    %4495 = vmatpush1.msra.mxu0 0.0
    %4496 = vmatprep.subr.mxu0 0.0
    %4497 = vmatpush1.msra.mxu0 0.0
    %4498 = vmatprep.subr.mxu0 0.0
    %4499 = vmatpush1.msra.mxu0 0.0
    %4500 = vmatprep.subr.mxu0 0.0
    %4501 = vmatpush1.msra.mxu0 0.0
    %4502 = vmatprep.subr.mxu0 0.0
    %4503 = vmatpush1.msra.mxu0 0.0
    %4504 = vmatprep.subr.mxu0 0.0
    %4505 = vmatpush1.msra.mxu0 0.0
    %4506 = vmatprep.subr.mxu0 0.0
    %4507 = vmatpush1.msra.mxu0 0.0
    %4508 = vmatprep.subr.mxu0 0.0
    %4509 = vmatpush1.msra.mxu0 0.0
    %4510 = vmatprep.subr.mxu0 0.0
    %4511 = vmatpush1.msra.mxu0 0.0
    %4512 = vmatprep.subr.mxu0 0.0
    %4513 = vmatpush1.msra.mxu0 0.0
    %4514 = vmatprep.subr.mxu0 0.0
    %4515 = vmatpush1.msra.mxu0 0.0
    %4516 = vmatprep.subr.mxu0 0.0
    %4517 = vmatpush1.msra.mxu0 0.0
    %4518 = vmatprep.subr.mxu0 0.0
    %4519 = vmatpush1.msra.mxu0 0.0
    %4520 = vmatprep.subr.mxu0 0.0
    %4521 = vmatpush1.msra.mxu0 0.0
    %4522 = vmatprep.subr.mxu0 0.0
    %4523 = vmatpush1.msra.mxu0 0.0
    %4524 = vmatprep.subr.mxu0 0.0
    %4525 = vmatpush1.msra.mxu0 0.0
    %4526 = vmatprep.subr.mxu0 0.0
    %4527 = vmatpush1.msra.mxu0 0.0
    %4528 = vmatprep.subr.mxu0 0.0
    %4529 = vmatpush1.msra.mxu0 0.0
    %4530 = vmatprep.subr.mxu0 0.0
    %4531 = vmatpush1.msra.mxu0 0.0
    %4532 = vmatprep.subr.mxu0 0.0
    %4533 = vmatpush1.msra.mxu0 0.0
    %4534 = vmatprep.mubr.f32.mxu0 0.0
    %4535 = vmatmul.mubr.f32.gmra.mrb[0].mxu0 %v4468
    %v4536 = vpop.f32.mrb[0].mxu0
    %v4537 = vadd.f32 0.0, %v4536
    %v4538 = vpop.f32.mrb[0].mxu0
    %4539 = vdwg.mxu0
    %4540 = vrot.lane.b32.xlu0 %v3185, 16
    %v4541 = vpop.permute.xlu0 %4540
    %4542 = vrot.lane.b32.xlu0 %v3190, 16
    %v4543 = vpop.permute.xlu0 %4542
    %4544 = vrot.lane.b32.xlu0 %v3195, 16
    %v4545 = vpop.permute.xlu0 %4544
    %v4550 = vsel %vm1036, %v4457, 0
    %4552 = vmatprep.subr.mxu0 0.0
    %4553 = vmatpush1.msra.mxu0 %v4541
    %4554 = vmatprep.subr.mxu0 0.0
    %4555 = vmatpush1.msra.mxu0 %v4543
    %4556 = vmatprep.subr.mxu0 0.0
    %4557 = vmatpush1.msra.mxu0 %v4545
    %4558 = vmatprep.subr.mxu0 0.0
    %4559 = vmatpush1.msra.mxu0 0.0
    %4560 = vmatprep.subr.mxu0 0.0
    %4561 = vmatpush1.msra.mxu0 0.0
    %4562 = vmatprep.subr.mxu0 0.0
    %4563 = vmatpush1.msra.mxu0 0.0
    %4564 = vmatprep.subr.mxu0 0.0
    %4565 = vmatpush1.msra.mxu0 0.0
    %4566 = vmatprep.subr.mxu0 0.0
    %4567 = vmatpush1.msra.mxu0 0.0
    %4568 = vmatprep.subr.mxu0 0.0
    %4569 = vmatpush1.msra.mxu0 0.0
    %4570 = vmatprep.subr.mxu0 0.0
    %4571 = vmatpush1.msra.mxu0 0.0
    %4572 = vmatprep.subr.mxu0 0.0
    %4573 = vmatpush1.msra.mxu0 0.0
    %4574 = vmatprep.subr.mxu0 0.0
    %4575 = vmatpush1.msra.mxu0 0.0
    %4576 = vmatprep.subr.mxu0 0.0
    %4577 = vmatpush1.msra.mxu0 0.0
    %4578 = vmatprep.subr.mxu0 0.0
    %4579 = vmatpush1.msra.mxu0 0.0
    %4580 = vmatprep.subr.mxu0 0.0
    %4581 = vmatpush1.msra.mxu0 0.0
    %4582 = vmatprep.subr.mxu0 0.0
    %4583 = vmatpush1.msra.mxu0 0.0
    %4584 = vmatprep.subr.mxu0 0.0
    %4585 = vmatpush1.msra.mxu0 0.0
    %4586 = vmatprep.subr.mxu0 0.0
    %4587 = vmatpush1.msra.mxu0 0.0
    %4588 = vmatprep.subr.mxu0 0.0
    %4589 = vmatpush1.msra.mxu0 0.0
    %4590 = vmatprep.subr.mxu0 0.0
    %4591 = vmatpush1.msra.mxu0 0.0
    %4592 = vmatprep.subr.mxu0 0.0
    %4593 = vmatpush1.msra.mxu0 0.0
    %4594 = vmatprep.subr.mxu0 0.0
    %4595 = vmatpush1.msra.mxu0 0.0
    %4596 = vmatprep.subr.mxu0 0.0
    %4597 = vmatpush1.msra.mxu0 0.0
    %4598 = vmatprep.subr.mxu0 0.0
    %4599 = vmatpush1.msra.mxu0 0.0
    %4600 = vmatprep.subr.mxu0 0.0
    %4601 = vmatpush1.msra.mxu0 0.0
    %4602 = vmatprep.subr.mxu0 0.0
    %4603 = vmatpush1.msra.mxu0 0.0
    %4604 = vmatprep.subr.mxu0 0.0
    %4605 = vmatpush1.msra.mxu0 0.0
    %4606 = vmatprep.subr.mxu0 0.0
    %4607 = vmatpush1.msra.mxu0 0.0
    %4608 = vmatprep.subr.mxu0 0.0
    %4609 = vmatpush1.msra.mxu0 0.0
    %4610 = vmatprep.subr.mxu0 0.0
    %4611 = vmatpush1.msra.mxu0 0.0
    %4612 = vmatprep.subr.mxu0 0.0
    %4613 = vmatpush1.msra.mxu0 0.0
    %4614 = vmatprep.subr.mxu0 0.0
    %4615 = vmatpush1.msra.mxu0 0.0
    %4616 = vmatprep.mubr.f32.mxu0 0.0
    %4617 = vmatmul.mubr.f32.gmra.mrb[0].mxu0 %v4550
    %v4618 = vpop.f32.mrb[0].mxu0
    %v4619 = vadd.f32 0.0, %v4618
    %v4620 = vpop.f32.mrb[0].mxu0
    %4621 = vdwg.mxu0
    %4624 = vrot.lane.b32.xlu0 %v3821, 16
    %v4625 = vpop.permute.xlu0 %4624
    %4626 = vrot.lane.b32.xlu0 %v3903, 16
    %v4627 = vpop.permute.xlu0 %4626
    %4632 = vrot.lane.b32.xlu0 %v4179, 32
    %v4633 = vpop.permute.xlu0 %4632
    %4634 = vrot.lane.b32.xlu0 %v4261, 32
    %v4635 = vpop.permute.xlu0 %4634
    %4640 = vrot.lane.b32.xlu0 %v4537, 48
    %v4641 = vpop.permute.xlu0 %4640
    %4642 = vrot.lane.b32.xlu0 %v4619, 48
    %v4643 = vpop.permute.xlu0 %4642
    %v4646 = vsel %vm871, %v3463, %v4625
    %v4647 = vsel %vm871, %v3545, %v4627
    %v4648 = vsel %vm115, %v4646, %v4633
    %v4649 = vsel %vm115, %v4647, %v4635
    %v4650 = vsel %vm2325, %v4648, %v4641
    %v4651 = vsel %vm2325, %v4649, %v4643
    %s4652 = scalar_lea.vmem %s6, 320
    %v4653 = vld [vmem:[%s4652] sm:$0xff]
    %v4654 = vld [vmem:[%s4652 + $0x8] sm:$0xff]
    %v4655 = vld [vmem:[%s4652 + $0x10] sm:$0xff]
    %v4656 = vld [vmem:[%s4652 + $0x18] sm:$0xff]
    %v4657 = vld [vmem:[%s4652 + $0x20] sm:$0xff]
    %v4658 = vld [vmem:[%s4652 + $0x28] sm:$0xff]
    %v4659 = vld [vmem:[%s4652 + $0x30] sm:$0xff]
    %v4660 = vld [vmem:[%s4652 + $0x38] sm:$0xff]
    %v4662 = vsel %vm209, %v4650, 0
    %v4665 = vsel %vm209, %v4651, 0
    %4667 = vmatprep.subr.mxu0 0.0
    %4668 = vmatpush1.msra.mxu0 %v4653
    %4669 = vmatprep.subr.mxu0 0.0
    %4670 = vmatpush1.msra.mxu0 %v4654
    %4671 = vmatprep.subr.mxu0 0.0
    %4672 = vmatpush1.msra.mxu0 %v4655
    %4673 = vmatprep.subr.mxu0 0.0
    %4674 = vmatpush1.msra.mxu0 %v4656
    %4675 = vmatprep.subr.mxu0 0.0
    %4676 = vmatpush1.msra.mxu0 %v4657
    %4677 = vmatprep.subr.mxu0 0.0
    %4678 = vmatpush1.msra.mxu0 %v4658
    %4679 = vmatprep.subr.mxu0 0.0
    %4680 = vmatpush1.msra.mxu0 %v4659
    %4681 = vmatprep.subr.mxu0 0.0
    %4682 = vmatpush1.msra.mxu0 %v4660
    %4683 = vmatprep.subr.mxu0 0.0
    %4684 = vmatpush1.msra.mxu0 0.0
    %4685 = vmatprep.subr.mxu0 0.0
    %4686 = vmatpush1.msra.mxu0 0.0
    %4687 = vmatprep.subr.mxu0 0.0
    %4688 = vmatpush1.msra.mxu0 0.0
    %4689 = vmatprep.subr.mxu0 0.0
    %4690 = vmatpush1.msra.mxu0 0.0
    %4691 = vmatprep.subr.mxu0 0.0
    %4692 = vmatpush1.msra.mxu0 0.0
    %4693 = vmatprep.subr.mxu0 0.0
    %4694 = vmatpush1.msra.mxu0 0.0
    %4695 = vmatprep.subr.mxu0 0.0
    %4696 = vmatpush1.msra.mxu0 0.0
    %4697 = vmatprep.subr.mxu0 0.0
    %4698 = vmatpush1.msra.mxu0 0.0
    %4699 = vmatprep.subr.mxu0 0.0
    %4700 = vmatpush1.msra.mxu0 0.0
    %4701 = vmatprep.subr.mxu0 0.0
    %4702 = vmatpush1.msra.mxu0 0.0
    %4703 = vmatprep.subr.mxu0 0.0
    %4704 = vmatpush1.msra.mxu0 0.0
    %4705 = vmatprep.subr.mxu0 0.0
    %4706 = vmatpush1.msra.mxu0 0.0
    %4707 = vmatprep.subr.mxu0 0.0
    %4708 = vmatpush1.msra.mxu0 0.0
    %4709 = vmatprep.subr.mxu0 0.0
    %4710 = vmatpush1.msra.mxu0 0.0
    %4711 = vmatprep.subr.mxu0 0.0
    %4712 = vmatpush1.msra.mxu0 0.0
    %4713 = vmatprep.subr.mxu0 0.0
    %4714 = vmatpush1.msra.mxu0 0.0
    %4715 = vmatprep.subr.mxu0 0.0
    %4716 = vmatpush1.msra.mxu0 0.0
    %4717 = vmatprep.subr.mxu0 0.0
    %4718 = vmatpush1.msra.mxu0 0.0
    %4719 = vmatprep.subr.mxu0 0.0
    %4720 = vmatpush1.msra.mxu0 0.0
    %4721 = vmatprep.subr.mxu0 0.0
    %4722 = vmatpush1.msra.mxu0 0.0
    %4723 = vmatprep.subr.mxu0 0.0
    %4724 = vmatpush1.msra.mxu0 0.0
    %4725 = vmatprep.subr.mxu0 0.0
    %4726 = vmatpush1.msra.mxu0 0.0
    %4727 = vmatprep.subr.mxu0 0.0
    %4728 = vmatpush1.msra.mxu0 0.0
    %4729 = vmatprep.subr.mxu0 0.0
    %4730 = vmatpush1.msra.mxu0 0.0
    %4731 = vmatprep.mubr.f32.mxu0 0.0
    %4732 = vmatmul.mubr.f32.gmra.mrb[0].mxu0 %v4662
    %v4733 = vpop.f32.mrb[0].mxu0
    %v4734 = vadd.f32 0.0, %v4733
    %v4735 = vpop.f32.mrb[0].mxu0
    %4736 = vmatprep.mubr.f32.mxu0 0.0
    %4737 = vmatmul.mubr.f32.gmra.mrb[0].mxu0 %v4665
    %v4738 = vpop.f32.mrb[0].mxu0
    %v4739 = vadd.f32 0.0, %v4738
    %v4740 = vpop.f32.mrb[0].mxu0
    %4741 = vdwg.mxu0
    %v4742 = vadd.f32 %v2788, %v4734
    %v4743 = vadd.f32 %v2789, %v4739
    %v4744 = vld [vmem:[#allocation5 + $0x14] sm:$0x1]
    %v4745 = vld [vmem:[#allocation5 + $0x15] sm:$0x1]
    %v4746 = vsel %vm209, %v4742, 0.0
    %4747 = vadd.xlane.f32.xlu0 %v4746
    %v4748 = vpop.xlane.xlu0 %4747
    %v4749 = vsel %vm209, %v4743, 0.0
    %4750 = vadd.xlane.f32.xlu0 %v4749
    %v4751 = vpop.xlane.xlu0 %4750
    %v4752 = vmul.f32 %v4748, %v570
    %v4753 = vmul.f32 %v4751, %v570
    %v4754 = vsub.f32 %v4742, %v4752
    %v4755 = vsub.f32 %v4743, %v4753
    %v4756 = vmul.f32 %v4754, %v4754
    %v4757 = vmul.f32 %v4755, %v4755
    %v4758 = vsel %vm209, %v4756, 0.0
    %4759 = vadd.xlane.f32.xlu0 %v4758
    %v4760 = vpop.xlane.xlu0 %4759
    %v4761 = vsel %vm209, %v4757, 0.0
    %4762 = vadd.xlane.f32.xlu0 %v4761
    %v4763 = vpop.xlane.xlu0 %4762
    %v4764 = vmul.f32 %v4760, %v570
    %v4765 = vmul.f32 %v4763, %v570
    %v4766 = vadd.f32 %v4764, 1e-05
    %v4767 = vadd.f32 %v4765, 1e-05
    %v4768 = vrsqrt.pop %v4766
    %v4769 = vrsqrt.pop %v4767
    %v4770 = vmul.f32 %v4754, %v4768
    %v4771 = vmul.f32 %v4755, %v4769
    %v4772 = vlaneseq
    %v4773 = vshrl.u32 %v4772, 7
    %v4774 = vsub.s32 0, %v4773
    %v4775 = vrot.slane %v4744, %v4774
    %v4776 = vmul.f32 %v4770, %v4775
    %v4777 = vmul.f32 %v4771, %v4775
    %v4778 = vlaneseq
    %v4779 = vshrl.u32 %v4778, 7
    %v4780 = vsub.s32 0, %v4779
    %v4781 = vrot.slane %v4745, %v4780
    %v4782 = vadd.f32 %v4776, %v4781
    %v4783 = vadd.f32 %v4777, %v4781
    %v4784 = vadd.f32 %v2918, 1.0
    %v4785 = vadd.f32 %v2919, 1.0
    %4788 = vrot.lane.b32.xlu0 %v4784, 64
    %v4789 = vpop.permute.xlu0 %4788
    %4790 = vrot.lane.b32.xlu0 %v4785, 64
    %v4791 = vpop.permute.xlu0 %4790
    %v4794 = vmul.f32 %v4782, %v4789
    %v4795 = vmul.f32 %v4783, %v4791
    %v4796 = vadd.f32 %v4794, %v2907
    %v4797 = vadd.f32 %v4795, %v2908
    %s4798 = scalar_lea.vmem [#allocation10], 128
    %v4799 = vld [vmem:[%s4798] sm:$0xff]
    %v4800 = vld [vmem:[%s4798 + $0x8] sm:$0xff]
    %v4801 = vld [vmem:[%s4798 + $0x10] sm:$0xff]
    %v4802 = vld [vmem:[%s4798 + $0x18] sm:$0xff]
    %v4803 = vld [vmem:[%s4798 + $0x20] sm:$0xff]
    %v4804 = vld [vmem:[%s4798 + $0x28] sm:$0xff]
    %v4805 = vld [vmem:[%s4798 + $0x30] sm:$0xff]
    %v4806 = vld [vmem:[%s4798 + $0x38] sm:$0xff]
    %v4807 = vld [vmem:[%s4798 + $0x40] sm:$0xff]
    %v4808 = vld [vmem:[%s4798 + $0x48] sm:$0xff]
    %v4809 = vld [vmem:[%s4798 + $0x50] sm:$0xff]
    %v4810 = vld [vmem:[%s4798 + $0x58] sm:$0xff]
    %v4811 = vld [vmem:[%s4798 + $0x60] sm:$0xff]
    %v4812 = vld [vmem:[%s4798 + $0x68] sm:$0xff]
    %v4813 = vld [vmem:[%s4798 + $0x70] sm:$0xff]
    %v4814 = vld [vmem:[%s4798 + $0x78] sm:$0xff]
    %v4816 = vsel %vm209, %v4796, 0
    %v4819 = vsel %vm209, %v4797, 0
    %4821 = vmatprep.subr.mxu0 %v4800
    %4822 = vmatpush1.msra.mxu0 %v4799
    %4823 = vmatprep.subr.mxu0 %v4802
    %4824 = vmatpush1.msra.mxu0 %v4801
    %4825 = vmatprep.subr.mxu0 %v4804
    %4826 = vmatpush1.msra.mxu0 %v4803
    %4827 = vmatprep.subr.mxu0 %v4806
    %4828 = vmatpush1.msra.mxu0 %v4805
    %4829 = vmatprep.subr.mxu0 %v4808
    %4830 = vmatpush1.msra.mxu0 %v4807
    %4831 = vmatprep.subr.mxu0 %v4810
    %4832 = vmatpush1.msra.mxu0 %v4809
    %4833 = vmatprep.subr.mxu0 %v4812
    %4834 = vmatpush1.msra.mxu0 %v4811
    %4835 = vmatprep.subr.mxu0 %v4814
    %4836 = vmatpush1.msra.mxu0 %v4813
    %4837 = vmatprep.subr.mxu0 0.0
    %4838 = vmatpush1.msra.mxu0 0.0
    %4839 = vmatprep.subr.mxu0 0.0
    %4840 = vmatpush1.msra.mxu0 0.0
    %4841 = vmatprep.subr.mxu0 0.0
    %4842 = vmatpush1.msra.mxu0 0.0
    %4843 = vmatprep.subr.mxu0 0.0
    %4844 = vmatpush1.msra.mxu0 0.0
    %4845 = vmatprep.subr.mxu0 0.0
    %4846 = vmatpush1.msra.mxu0 0.0
    %4847 = vmatprep.subr.mxu0 0.0
    %4848 = vmatpush1.msra.mxu0 0.0
    %4849 = vmatprep.subr.mxu0 0.0
    %4850 = vmatpush1.msra.mxu0 0.0
    %4851 = vmatprep.subr.mxu0 0.0
    %4852 = vmatpush1.msra.mxu0 0.0
    %4853 = vmatprep.subr.mxu0 0.0
    %4854 = vmatpush1.msra.mxu0 0.0
    %4855 = vmatprep.subr.mxu0 0.0
    %4856 = vmatpush1.msra.mxu0 0.0
    %4857 = vmatprep.subr.mxu0 0.0
    %4858 = vmatpush1.msra.mxu0 0.0
    %4859 = vmatprep.subr.mxu0 0.0
    %4860 = vmatpush1.msra.mxu0 0.0
    %4861 = vmatprep.subr.mxu0 0.0
    %4862 = vmatpush1.msra.mxu0 0.0
    %4863 = vmatprep.subr.mxu0 0.0
    %4864 = vmatpush1.msra.mxu0 0.0
    %4865 = vmatprep.subr.mxu0 0.0
    %4866 = vmatpush1.msra.mxu0 0.0
    %4867 = vmatprep.subr.mxu0 0.0
    %4868 = vmatpush1.msra.mxu0 0.0
    %4869 = vmatprep.subr.mxu0 0.0
    %4870 = vmatpush1.msra.mxu0 0.0
    %4871 = vmatprep.subr.mxu0 0.0
    %4872 = vmatpush1.msra.mxu0 0.0
    %4873 = vmatprep.subr.mxu0 0.0
    %4874 = vmatpush1.msra.mxu0 0.0
    %4875 = vmatprep.subr.mxu0 0.0
    %4876 = vmatpush1.msra.mxu0 0.0
    %4877 = vmatprep.subr.mxu0 0.0
    %4878 = vmatpush1.msra.mxu0 0.0
    %4879 = vmatprep.subr.mxu0 0.0
    %4880 = vmatpush1.msra.mxu0 0.0
    %4881 = vmatprep.subr.mxu0 0.0
    %4882 = vmatpush1.msra.mxu0 0.0
    %4883 = vmatprep.subr.mxu0 0.0
    %4884 = vmatpush1.msra.mxu0 0.0
    %4885 = vmatprep.mubr.f32.mxu0 0.0
    %4886 = vmatmul.mubr.f32.gmra.mrb[0].mxu0 %v4816
    %v4887 = vpop.f32.mrb[0].mxu0
    %v4888 = vadd.f32 0.0, %v4887
    %v4889 = vpop.f32.mrb[0].mxu0
    %v4890 = vadd.f32 0.0, %v4889
    %4891 = vmatprep.mubr.f32.mxu0 0.0
    %4892 = vmatmul.mubr.f32.gmra.mrb[0].mxu0 %v4819
    %v4893 = vpop.f32.mrb[0].mxu0
    %v4894 = vadd.f32 0.0, %v4893
    %v4895 = vpop.f32.mrb[0].mxu0
    %v4896 = vadd.f32 0.0, %v4895
    %4897 = vdwg.mxu0
    %v4898 = vmul.f32 %v4888, 0.5
    %v4899 = vmul.f32 %v4890, 0.5
    %v4900 = vmul.f32 %v4894, 0.5
    %v4901 = vmul.f32 %v4896, 0.5
    %v4902 = vmul.f32 %v4888, 0.70710677
    %v4903 = vmul.f32 %v4890, 0.70710677
    %v4904 = vmul.f32 %v4894, 0.70710677
    %v4905 = vmul.f32 %v4896, 0.70710677
    %vm4906 = vcmp.ge.f32.partialorder %v4902, 0.0
    %vm4907 = vcmp.ge.f32.partialorder %v4903, 0.0
    %vm4908 = vcmp.ge.f32.partialorder %v4904, 0.0
    %vm4909 = vcmp.ge.f32.partialorder %v4905, 0.0
    %v4910 = vsel %vm4906, 1.0, -1.0
    %v4911 = vsel %vm4907, 1.0, -1.0
    %v4912 = vsel %vm4908, 1.0, -1.0
    %v4913 = vsel %vm4909, 1.0, -1.0
    %v4914 = vand.u32 2147483647, %v4902
    %v4915 = vand.u32 2147483647, %v4903
    %v4916 = vand.u32 2147483647, %v4904
    %v4917 = vand.u32 2147483647, %v4905
    %v4918 = vmul.f32 %v4914, 0.3275911
    %v4919 = vmul.f32 %v4915, 0.3275911
    %v4920 = vmul.f32 %v4916, 0.3275911
    %v4921 = vmul.f32 %v4917, 0.3275911
    %v4922 = vadd.f32 %v4918, 1.0
    %v4923 = vadd.f32 %v4919, 1.0
    %v4924 = vadd.f32 %v4920, 1.0
    %v4925 = vadd.f32 %v4921, 1.0
    %v4926 = vrcp.pop %v4922
    %v4927 = vmul.f32 1.0, %v4926
    %v4928 = vrcp.pop %v4923
    %v4929 = vmul.f32 1.0, %v4928
    %v4930 = vrcp.pop %v4924
    %v4931 = vmul.f32 1.0, %v4930
    %v4932 = vrcp.pop %v4925
    %v4933 = vmul.f32 1.0, %v4932
    %v4934 = vmul.f32 %v4927, 1.0614054
    %v4935 = vmul.f32 %v4929, 1.0614054
    %v4936 = vmul.f32 %v4931, 1.0614054
    %v4937 = vmul.f32 %v4933, 1.0614054
    %v4938 = vsub.f32 %v4934, 1.4531521
    %v4939 = vsub.f32 %v4935, 1.4531521
    %v4940 = vsub.f32 %v4936, 1.4531521
    %v4941 = vsub.f32 %v4937, 1.4531521
    %v4942 = vmul.f32 %v4938, %v4927
    %v4943 = vmul.f32 %v4939, %v4929
    %v4944 = vmul.f32 %v4940, %v4931
    %v4945 = vmul.f32 %v4941, %v4933
    %v4946 = vadd.f32 %v4942, 1.4214138
    %v4947 = vadd.f32 %v4943, 1.4214138
    %v4948 = vadd.f32 %v4944, 1.4214138
    %v4949 = vadd.f32 %v4945, 1.4214138
    %v4950 = vmul.f32 %v4946, %v4927
    %v4951 = vmul.f32 %v4947, %v4929
    %v4952 = vmul.f32 %v4948, %v4931
    %v4953 = vmul.f32 %v4949, %v4933
    %v4954 = vsub.f32 %v4950, 0.28449672
    %v4955 = vsub.f32 %v4951, 0.28449672
    %v4956 = vsub.f32 %v4952, 0.28449672
    %v4957 = vsub.f32 %v4953, 0.28449672
    %v4958 = vmul.f32 %v4954, %v4927
    %v4959 = vmul.f32 %v4955, %v4929
    %v4960 = vmul.f32 %v4956, %v4931
    %v4961 = vmul.f32 %v4957, %v4933
    %v4962 = vadd.f32 %v4958, 0.2548296
    %v4963 = vadd.f32 %v4959, 0.2548296
    %v4964 = vadd.f32 %v4960, 0.2548296
    %v4965 = vadd.f32 %v4961, 0.2548296
    %v4966 = vmul.f32 %v4962, %v4927
    %v4967 = vmul.f32 %v4963, %v4929
    %v4968 = vmul.f32 %v4964, %v4931
    %v4969 = vmul.f32 %v4965, %v4933
    %v4970 = vsub.f32 0.0, %v4914
    %v4971 = vsub.f32 0.0, %v4915
    %v4972 = vsub.f32 0.0, %v4916
    %v4973 = vsub.f32 0.0, %v4917
    %v4974 = vmul.f32 %v4970, %v4914
    %v4975 = vmul.f32 %v4971, %v4915
    %v4976 = vmul.f32 %v4972, %v4916
    %v4977 = vmul.f32 %v4973, %v4917
    %v4978 = vmul.f32 %v4974, 1.442695
    %v4979 = vpow.pop %v4978
    %v4980 = vmul.f32 %v4975, 1.442695
    %v4981 = vpow.pop %v4980
    %v4982 = vmul.f32 %v4976, 1.442695
    %v4983 = vpow.pop %v4982
    %v4984 = vmul.f32 %v4977, 1.442695
    %v4985 = vpow.pop %v4984
    %v4986 = vmul.f32 %v4966, %v4979
    %v4987 = vmul.f32 %v4967, %v4981
    %v4988 = vmul.f32 %v4968, %v4983
    %v4989 = vmul.f32 %v4969, %v4985
    %v4990 = vsub.f32 1.0, %v4986
    %v4991 = vsub.f32 1.0, %v4987
    %v4992 = vsub.f32 1.0, %v4988
    %v4993 = vsub.f32 1.0, %v4989
    %v4994 = vmul.f32 %v4910, %v4990
    %v4995 = vmul.f32 %v4911, %v4991
    %v4996 = vmul.f32 %v4912, %v4992
    %v4997 = vmul.f32 %v4913, %v4993
    %v4998 = vadd.f32 %v4994, 1.0
    %v4999 = vadd.f32 %v4995, 1.0
    %v5000 = vadd.f32 %v4996, 1.0
    %v5001 = vadd.f32 %v4997, 1.0
    %v5002 = vmul.f32 %v4898, %v4998
    %v5003 = vmul.f32 %v4899, %v4999
    %v5004 = vmul.f32 %v4900, %v5000
    %v5005 = vmul.f32 %v4901, %v5001
    %s5006 = scalar_lea.vmem %s10, 256
    %v5007 = vld [vmem:[%s5006] sm:$0xff]
    %v5008 = vld [vmem:[%s5006 + $0x8] sm:$0xff]
    %v5009 = vld [vmem:[%s5006 + $0x10] sm:$0xff]
    %v5010 = vld [vmem:[%s5006 + $0x18] sm:$0xff]
    %v5011 = vld [vmem:[%s5006 + $0x20] sm:$0xff]
    %v5012 = vld [vmem:[%s5006 + $0x28] sm:$0xff]
    %v5013 = vld [vmem:[%s5006 + $0x30] sm:$0xff]
    %v5014 = vld [vmem:[%s5006 + $0x38] sm:$0xff]
    %v5015 = vld [vmem:[%s5006 + $0x40] sm:$0xff]
    %v5016 = vld [vmem:[%s5006 + $0x48] sm:$0xff]
    %v5017 = vld [vmem:[%s5006 + $0x50] sm:$0xff]
    %v5018 = vld [vmem:[%s5006 + $0x58] sm:$0xff]
    %v5019 = vld [vmem:[%s5006 + $0x60] sm:$0xff]
    %v5020 = vld [vmem:[%s5006 + $0x68] sm:$0xff]
    %v5021 = vld [vmem:[%s5006 + $0x70] sm:$0xff]
    %v5022 = vld [vmem:[%s5006 + $0x78] sm:$0xff]
    %v5023 = vld [vmem:[%s5006 + $0x80] sm:$0xff]
    %v5024 = vld [vmem:[%s5006 + $0x88] sm:$0xff]
    %v5025 = vld [vmem:[%s5006 + $0x90] sm:$0xff]
    %v5026 = vld [vmem:[%s5006 + $0x98] sm:$0xff]
    %v5027 = vld [vmem:[%s5006 + $0xa0] sm:$0xff]
    %v5028 = vld [vmem:[%s5006 + $0xa8] sm:$0xff]
    %v5029 = vld [vmem:[%s5006 + $0xb0] sm:$0xff]
    %v5030 = vld [vmem:[%s5006 + $0xb8] sm:$0xff]
    %v5031 = vld [vmem:[%s5006 + $0xc0] sm:$0xff]
    %v5032 = vld [vmem:[%s5006 + $0xc8] sm:$0xff]
    %v5033 = vld [vmem:[%s5006 + $0xd0] sm:$0xff]
    %v5034 = vld [vmem:[%s5006 + $0xd8] sm:$0xff]
    %v5035 = vld [vmem:[%s5006 + $0xe0] sm:$0xff]
    %v5036 = vld [vmem:[%s5006 + $0xe8] sm:$0xff]
    %v5037 = vld [vmem:[%s5006 + $0xf0] sm:$0xff]
    %v5038 = vld [vmem:[%s5006 + $0xf8] sm:$0xff]
    %5039 = vmatprep.subr.mxu0 0.0
    %5040 = vmatpush1.msra.mxu0 %v5007
    %5041 = vmatprep.subr.mxu0 0.0
    %5042 = vmatpush1.msra.mxu0 %v5008
    %5043 = vmatprep.subr.mxu0 0.0
    %5044 = vmatpush1.msra.mxu0 %v5009
    %5045 = vmatprep.subr.mxu0 0.0
    %5046 = vmatpush1.msra.mxu0 %v5010
    %5047 = vmatprep.subr.mxu0 0.0
    %5048 = vmatpush1.msra.mxu0 %v5011
    %5049 = vmatprep.subr.mxu0 0.0
    %5050 = vmatpush1.msra.mxu0 %v5012
    %5051 = vmatprep.subr.mxu0 0.0
    %5052 = vmatpush1.msra.mxu0 %v5013
    %5053 = vmatprep.subr.mxu0 0.0
    %5054 = vmatpush1.msra.mxu0 %v5014
    %5055 = vmatprep.subr.mxu0 0.0
    %5056 = vmatpush1.msra.mxu0 %v5015
    %5057 = vmatprep.subr.mxu0 0.0
    %5058 = vmatpush1.msra.mxu0 %v5016
    %5059 = vmatprep.subr.mxu0 0.0
    %5060 = vmatpush1.msra.mxu0 %v5017
    %5061 = vmatprep.subr.mxu0 0.0
    %5062 = vmatpush1.msra.mxu0 %v5018
    %5063 = vmatprep.subr.mxu0 0.0
    %5064 = vmatpush1.msra.mxu0 %v5019
    %5065 = vmatprep.subr.mxu0 0.0
    %5066 = vmatpush1.msra.mxu0 %v5020
    %5067 = vmatprep.subr.mxu0 0.0
    %5068 = vmatpush1.msra.mxu0 %v5021
    %5069 = vmatprep.subr.mxu0 0.0
    %5070 = vmatpush1.msra.mxu0 %v5022
    %5071 = vmatprep.subr.mxu0 0.0
    %5072 = vmatpush1.msra.mxu0 %v5023
    %5073 = vmatprep.subr.mxu0 0.0
    %5074 = vmatpush1.msra.mxu0 %v5024
    %5075 = vmatprep.subr.mxu0 0.0
    %5076 = vmatpush1.msra.mxu0 %v5025
    %5077 = vmatprep.subr.mxu0 0.0
    %5078 = vmatpush1.msra.mxu0 %v5026
    %5079 = vmatprep.subr.mxu0 0.0
    %5080 = vmatpush1.msra.mxu0 %v5027
    %5081 = vmatprep.subr.mxu0 0.0
    %5082 = vmatpush1.msra.mxu0 %v5028
    %5083 = vmatprep.subr.mxu0 0.0
    %5084 = vmatpush1.msra.mxu0 %v5029
    %5085 = vmatprep.subr.mxu0 0.0
    %5086 = vmatpush1.msra.mxu0 %v5030
    %5087 = vmatprep.subr.mxu0 0.0
    %5088 = vmatpush1.msra.mxu0 %v5031
    %5089 = vmatprep.subr.mxu0 0.0
    %5090 = vmatpush1.msra.mxu0 %v5032
    %5091 = vmatprep.subr.mxu0 0.0
    %5092 = vmatpush1.msra.mxu0 %v5033
    %5093 = vmatprep.subr.mxu0 0.0
    %5094 = vmatpush1.msra.mxu0 %v5034
    %5095 = vmatprep.subr.mxu0 0.0
    %5096 = vmatpush1.msra.mxu0 %v5035
    %5097 = vmatprep.subr.mxu0 0.0
    %5098 = vmatpush1.msra.mxu0 %v5036
    %5099 = vmatprep.subr.mxu0 0.0
    %5100 = vmatpush1.msra.mxu0 %v5037
    %5101 = vmatprep.subr.mxu0 0.0
    %5102 = vmatpush1.msra.mxu0 %v5038
    %5103 = vmatprep.mubr.f32.mxu0 %v5003
    %5104 = vmatmul.mubr.f32.gmra.mrb[0].mxu0 %v5002
    %v5105 = vpop.f32.mrb[0].mxu0
    %v5106 = vadd.f32 0.0, %v5105
    %v5107 = vpop.f32.mrb[0].mxu0
    %5108 = vmatprep.mubr.f32.mxu0 %v5005
    %5109 = vmatmul.mubr.f32.gmra.mrb[0].mxu0 %v5004
    %v5110 = vpop.f32.mrb[0].mxu0
    %v5111 = vadd.f32 0.0, %v5110
    %v5112 = vpop.f32.mrb[0].mxu0
    %5113 = vdwg.mxu0
    %v5114 = vadd.f32 %v4742, %v5106
    %v5115 = vadd.f32 %v4743, %v5111
    %s5116 = scalar_lea.vmem %s6, 64
    %v5117 = vld [vmem:[%s5116] sm:$0xff]
    %v5118 = vld [vmem:[%s5116 + $0x8] sm:$0xff]
    %v5119 = vld [vmem:[%s5116 + $0x10] sm:$0xff]
    %v5120 = vld [vmem:[%s5116 + $0x18] sm:$0xff]
    %v5121 = vld [vmem:[%s5116 + $0x20] sm:$0xff]
    %v5122 = vld [vmem:[%s5116 + $0x28] sm:$0xff]
    %v5123 = vld [vmem:[%s5116 + $0x30] sm:$0xff]
    %v5124 = vld [vmem:[%s5116 + $0x38] sm:$0xff]
    %v5125 = vld [vmem:[#allocation5 + $0x3] sm:$0x1]
    %v5126 = vlaneseq
    %v5127 = vshrl.u32 %v5126, 7
    %v5128 = vsub.s32 0, %v5127
    %v5129 = vrot.slane %v5125, %v5128
    %v5131 = vsel %vm209, %v5114, 0
    %v5134 = vsel %vm209, %v5115, 0
    %5136 = vmatprep.subr.mxu0 0.0
    %5137 = vmatpush1.msra.mxu0 %v5117
    %5138 = vmatprep.subr.mxu0 0.0
    %5139 = vmatpush1.msra.mxu0 %v5118
    %5140 = vmatprep.subr.mxu0 0.0
    %5141 = vmatpush1.msra.mxu0 %v5119
    %5142 = vmatprep.subr.mxu0 0.0
    %5143 = vmatpush1.msra.mxu0 %v5120
    %5144 = vmatprep.subr.mxu0 0.0
    %5145 = vmatpush1.msra.mxu0 %v5121
    %5146 = vmatprep.subr.mxu0 0.0
    %5147 = vmatpush1.msra.mxu0 %v5122
    %5148 = vmatprep.subr.mxu0 0.0
    %5149 = vmatpush1.msra.mxu0 %v5123
    %5150 = vmatprep.subr.mxu0 0.0
    %5151 = vmatpush1.msra.mxu0 %v5124
    %5152 = vmatprep.subr.mxu0 0.0
    %5153 = vmatpush1.msra.mxu0 0.0
    %5154 = vmatprep.subr.mxu0 0.0
    %5155 = vmatpush1.msra.mxu0 0.0
    %5156 = vmatprep.subr.mxu0 0.0
    %5157 = vmatpush1.msra.mxu0 0.0
    %5158 = vmatprep.subr.mxu0 0.0
    %5159 = vmatpush1.msra.mxu0 0.0
    %5160 = vmatprep.subr.mxu0 0.0
    %5161 = vmatpush1.msra.mxu0 0.0
    %5162 = vmatprep.subr.mxu0 0.0
    %5163 = vmatpush1.msra.mxu0 0.0
    %5164 = vmatprep.subr.mxu0 0.0
    %5165 = vmatpush1.msra.mxu0 0.0
    %5166 = vmatprep.subr.mxu0 0.0
    %5167 = vmatpush1.msra.mxu0 0.0
    %5168 = vmatprep.subr.mxu0 0.0
    %5169 = vmatpush1.msra.mxu0 0.0
    %5170 = vmatprep.subr.mxu0 0.0
    %5171 = vmatpush1.msra.mxu0 0.0
    %5172 = vmatprep.subr.mxu0 0.0
    %5173 = vmatpush1.msra.mxu0 0.0
    %5174 = vmatprep.subr.mxu0 0.0
    %5175 = vmatpush1.msra.mxu0 0.0
    %5176 = vmatprep.subr.mxu0 0.0
    %5177 = vmatpush1.msra.mxu0 0.0
    %5178 = vmatprep.subr.mxu0 0.0
    %5179 = vmatpush1.msra.mxu0 0.0
    %5180 = vmatprep.subr.mxu0 0.0
    %5181 = vmatpush1.msra.mxu0 0.0
    %5182 = vmatprep.subr.mxu0 0.0
    %5183 = vmatpush1.msra.mxu0 0.0
    %5184 = vmatprep.subr.mxu0 0.0
    %5185 = vmatpush1.msra.mxu0 0.0
    %5186 = vmatprep.subr.mxu0 0.0
    %5187 = vmatpush1.msra.mxu0 0.0
    %5188 = vmatprep.subr.mxu0 0.0
    %5189 = vmatpush1.msra.mxu0 0.0
    %5190 = vmatprep.subr.mxu0 0.0
    %5191 = vmatpush1.msra.mxu0 0.0
    %5192 = vmatprep.subr.mxu0 0.0
    %5193 = vmatpush1.msra.mxu0 0.0
    %5194 = vmatprep.subr.mxu0 0.0
    %5195 = vmatpush1.msra.mxu0 0.0
    %5196 = vmatprep.subr.mxu0 0.0
    %5197 = vmatpush1.msra.mxu0 0.0
    %5198 = vmatprep.subr.mxu0 0.0
    %5199 = vmatpush1.msra.mxu0 0.0
    %5200 = vmatprep.mubr.f32.mxu0 0.0
    %5201 = vmatmul.mubr.f32.gmra.mrb[0].mxu0 %v5131
    %v5202 = vpop.f32.mrb[0].mxu0
    %v5203 = vadd.f32 %v5129, %v5202
    %v5204 = vpop.f32.mrb[0].mxu0
    %5205 = vmatprep.mubr.f32.mxu0 0.0
    %5206 = vmatmul.mubr.f32.gmra.mrb[0].mxu0 %v5134
    %v5207 = vpop.f32.mrb[0].mxu0
    %v5208 = vadd.f32 %v5129, %v5207
    %v5209 = vpop.f32.mrb[0].mxu0
    %5210 = vdwg.mxu0
    %v5211 = vld [vmem:[#allocation5 + $0x4] sm:$0x1]
    %v5212 = vld [vmem:[#allocation5 + $0x5] sm:$0x1]
    %v5213 = vsel %vm209, %v5203, 0.0
    %5214 = vadd.xlane.f32.xlu0 %v5213
    %v5215 = vpop.xlane.xlu0 %5214
    %v5216 = vsel %vm209, %v5208, 0.0
    %5217 = vadd.xlane.f32.xlu0 %v5216
    %v5218 = vpop.xlane.xlu0 %5217
    %v5219 = vmul.f32 %v5215, %v570
    %v5220 = vmul.f32 %v5218, %v570
    %v5221 = vsub.f32 %v5203, %v5219
    %v5222 = vsub.f32 %v5208, %v5220
    %v5223 = vmul.f32 %v5221, %v5221
    %v5224 = vmul.f32 %v5222, %v5222
    %v5225 = vsel %vm209, %v5223, 0.0
    %5226 = vadd.xlane.f32.xlu0 %v5225
    %v5227 = vpop.xlane.xlu0 %5226
    %v5228 = vsel %vm209, %v5224, 0.0
    %5229 = vadd.xlane.f32.xlu0 %v5228
    %v5230 = vpop.xlane.xlu0 %5229
    %v5231 = vmul.f32 %v5227, %v570
    %v5232 = vmul.f32 %v5230, %v570
    %v5233 = vadd.f32 %v5231, 1e-05
    %v5234 = vadd.f32 %v5232, 1e-05
    %v5235 = vrsqrt.pop %v5233
    %v5236 = vrsqrt.pop %v5234
    %v5237 = vmul.f32 %v5221, %v5235
    %v5238 = vmul.f32 %v5222, %v5236
    %v5239 = vlaneseq
    %v5240 = vshrl.u32 %v5239, 7
    %v5241 = vsub.s32 0, %v5240
    %v5242 = vrot.slane %v5211, %v5241
    %v5243 = vmul.f32 %v5237, %v5242
    %v5244 = vmul.f32 %v5238, %v5242
    %v5245 = vlaneseq
    %v5246 = vshrl.u32 %v5245, 7
    %v5247 = vsub.s32 0, %v5246
    %v5248 = vrot.slane %v5212, %v5247
    %v5249 = vadd.f32 %v5243, %v5248
    %v5250 = vadd.f32 %v5244, %v5248
    %5251 = vst.msk [vmem:[#allocation11] sm:$0xff] %vm209, %v5249
    %5252 = vst.msk [vmem:[#allocation11 + $0x8] sm:$0xff] %vm209, %v5250
    // Predicated region
    $region66: #{time_resampler_forward.1} parent=1 // pred_check
      _
    $region67: #{time_resampler_forward.1} parent=1 // pred_check_branch
      %5254 = sbr.rel (0) target = $region69
    $region68: #{time_resampler_forward.1} parent=1 // pred_region
      %s5256 = ssub.s32 256, 256
      %5257 = vsyncadd [#allocation4], %s5256
      %s5258 = sshll.u32 [#allocation11], 4
      %s5259 = int_to_ptr.vmem [resolvable:$true] %s5258
      %5264 = dma.vmem_to_hbm [thread:$0]  %s5259, 256, %s11, [#allocation4], 128, 128, 8
    $region69: #{time_resampler_forward.1} parent=1 // pred_fallthru
      _
    // Predicated region
    $region70: #{time_resampler_forward.1} parent=1 // pred_check
      _
    $region71: #{time_resampler_forward.1} parent=1 // pred_check_branch
      %5266 = sbr.rel (0) target = $region73
    $region72: #{time_resampler_forward.1} parent=1 // pred_region
      %5267 = dma.done [#allocation4], 256
    $region73: #{time_resampler_forward.1} parent=1 // pred_fallthru
      _
    %5268 = vsyncpa [#allocation3], 1
    %5269 = vsyncpa [#allocation6], 1
    %5270 = vsyncpa [#allocation9], 1
    %5271 = vsyncpa [#allocation4], 1

</llo_original>
